<compile_context>
chip_gen: v5e
topology: v5e:2x2
jax: 0.10.0
libtpu: 0.0.40
codegen_flags: <defaults>
</compile_context>

<pallas_src>
import functools

import numpy as np

import jax
import jax.numpy as jnp
from jax import lax
from jax.experimental import pallas as pl
from jax.experimental.pallas import tpu as pltpu


def _conv3x3_lane_dense(slab, a_ref, acc0, H, W, C):
    """3x3 SAME conv of a (H, W*C) slab using per-lane weight planes.

    a_ref has shape (3*(4C-1), H, W*C); row ky*(4C-1)+si holds the (H-broadcast)
    per-lane weight for source row offset (ky-1) and lane shift s = si - (2C-1).
    acc0 is the accumulator initializer (bias / bias+residual folded in).
    """
    WC = W * C
    NS = 4 * C - 1          # number of distinct lane shifts
    PAD = 2 * C - 1         # max |lane shift|

    # Zero-padded slab built as an in-register value (no scratch, no stores).
    zlane = jnp.zeros((H, PAD), jnp.float32)
    zrow = jnp.zeros((1, WC + 2 * PAD), jnp.float32)
    p = jnp.concatenate([zlane, slab, zlane], axis=1)     # (H, WC + 2*PAD)
    p = jnp.concatenate([zrow, p, zrow], axis=0)          # (H+2, WC + 2*PAD)

    acc = acc0
    for ky in range(3):                  # static unroll: 3 row offsets
        pk = p[ky:ky + H, :]             # sublane shift hoisted (3 per conv, not 45)
        for si in range(NS):             # static unroll: 4C-1 lane shifts
            # pk[h, si + l] == X[h + ky - 1, l + (si - PAD)], zero when OOB.
            tap = pk[:, si:si + WC]                       # lane shift only
            acc = acc + tap * a_ref[ky * NS + si]         # full-tile (H, WC) weight
    return acc


def residual_block_kernel(x_ref, a1_ref, b1_ref, a2_ref, b2_ref, out_ref,
                          *, B, H, W, C):
    # x_ref  : (B, H, W*C)            B images of this grid step (lane-dense slabs)
    # a*_ref : (3*(4C-1), H, W*C)     per-lane conv weight planes (H-broadcast)
    # b*_ref : (H, W*C)               lane-tiled, H-broadcast biases
    # out_ref: (B, H, W*C)
    for b in range(B):                                    # static unroll over images
        x = x_ref[b].astype(jnp.float32)                  # (H, W*C)
        # conv1: accumulator starts at bias -> ReLU
        h = jnp.maximum(_conv3x3_lane_dense(x, a1_ref, b1_ref[...], H, W, C), 0.0)
        # conv2: accumulator starts at residual + bias
        y = _conv3x3_lane_dense(h, a2_ref, x + b2_ref[...], H, W, C)
        out_ref[b] = jnp.maximum(y, 0.0).astype(out_ref.dtype)


def _build_lane_weight_planes(w_hwio, C, W, H):
    """Repack HWIO (3,3,C,C) weights into (3*(4C-1), H, W*C) per-lane planes.

    Plane row (ky, si) / lane l holds W[ky, kx, ci, co] with co = l % C,
    s = si - (2C-1), kx = (co+s)//C + 1, ci = (co+s) mod C (0 when kx is outside
    the 3x3 stencil).  Pre-broadcast along H so each in-kernel tap weight is a
    plain full-tile vector load (no sublane broadcast in the hot loop).
    """
    NS = 4 * C - 1
    PAD = 2 * C - 1
    ky = np.repeat(np.arange(3), NS)                      # (3*NS,)
    s = np.tile(np.arange(NS) - PAD, 3)                   # (3*NS,)
    co = np.arange(C)                                     # (C,)
    tot = co[None, :] + s[:, None]                        # (3*NS, C)
    kx = tot // C + 1                                     # horizontal tap index
    ci = tot - (kx - 1) * C                               # == tot mod C, in [0, C-1]
    valid = (kx >= 0) & (kx <= 2)
    kx_c = np.clip(kx, 0, 2)
    ky_b = np.broadcast_to(ky[:, None], kx.shape)
    co_b = np.broadcast_to(co[None, :], kx.shape)

    w = w_hwio.astype(jnp.float32)
    a = w[ky_b, kx_c, ci, co_b]                           # (3*NS, C) single gather
    a = jnp.where(jnp.asarray(valid), a, 0.0)
    a = jnp.tile(a, (1, W))                               # (3*NS, W*C): lane l -> l%C
    return jnp.broadcast_to(a[:, None, :], (3 * NS, H, W * C))


@functools.partial(jax.jit, static_argnames=("num_parallel_blocks",))
def residual_block(x_nhwc, w1, b1, w2, b2, *, num_parallel_blocks=2):
    """x_nhwc: (N,H,W,C); w*: (3,3,C,C) HWIO; b*: (C,). Returns (N,H,W,C).

    num_parallel_blocks: number of (parallel) grid steps the batch is split into.
    Keep 2 on v7x (2 TensorCores per chip); 1 minimizes per-step overhead on the
    single-TC v5e/v6e.
    """
    N, H, W, C = x_nhwc.shape
    # ResidualBlock semantics: 3x3 kernel, stride 1, pad 1, Cin == Cout.
    assert w1.shape == (3, 3, C, C) and w2.shape == (3, 3, C, C)
    assert b1.shape == (C,) and b2.shape == (C,)
    WC = W * C
    NS = 4 * C - 1

    # Grid / per-step batching: G grid steps, B images per step.
    G = max(1, min(N, num_parallel_blocks))
    B = pl.cdiv(N, G)
    N_pad = G * B
    x_slab = x_nhwc.reshape(N, H, WC)                     # lane-dense layout
    if N_pad != N:
        x_slab = jnp.concatenate(
            [x_slab, jnp.zeros((N_pad - N, H, WC), x_slab.dtype)], axis=0)

    a1 = _build_lane_weight_planes(w1, C, W, H)           # (3*NS, H, WC)
    a2 = _build_lane_weight_planes(w2, C, W, H)
    b1t = jnp.broadcast_to(jnp.tile(b1.astype(jnp.float32), W)[None, :], (H, WC))
    b2t = jnp.broadcast_to(jnp.tile(b2.astype(jnp.float32), W)[None, :], (H, WC))

    kernel = functools.partial(residual_block_kernel, B=B, H=H, W=W, C=C)
    out = pl.pallas_call(
        kernel,
        out_shape=jax.ShapeDtypeStruct((N_pad, H, WC), x_nhwc.dtype),
        grid=(G,),
        in_specs=[
            pl.BlockSpec((B, H, WC), lambda g: (g, 0, 0)),
            pl.BlockSpec((3 * NS, H, WC), lambda g: (0, 0, 0)),
            pl.BlockSpec((H, WC), lambda g: (0, 0)),
            pl.BlockSpec((3 * NS, H, WC), lambda g: (0, 0, 0)),
            pl.BlockSpec((H, WC), lambda g: (0, 0)),
        ],
        out_specs=pl.BlockSpec((B, H, WC), lambda g: (g, 0, 0)),
        compiler_params=pltpu.CompilerParams(
            dimension_semantics=("parallel",)),
    )(x_slab, a1, b1t, a2, b2t)
    return out[:N].reshape(N, H, W, C)


def reference_nhwc(x_nhwc, w1, b1, w2, b2):
    """Pure-JAX reference (same math as the PyTorch module, NHWC layout)."""
    dn = ("NHWC", "HWIO", "NHWC")
    h = lax.conv_general_dilated(x_nhwc, w1, (1, 1), "SAME",
                                 dimension_numbers=dn) + b1
    h = jnp.maximum(h, 0.0)
    o = lax.conv_general_dilated(h, w2, (1, 1), "SAME",
                                 dimension_numbers=dn) + b2
    return jnp.maximum(o + x_nhwc, 0.0)


if __name__ == "__main__":
    N, C, H, W = 2, 4, 16, 16          # ResidualBlock requires Cin == Cout

    key = jax.random.PRNGKey(0)
    kx, k1, k2, kb1, kb2 = jax.random.split(key, 5)

    # deterministic synthetic parameters (the module's init_weights is a no-op)
    x_nchw = jax.random.normal(kx, (N, C, H, W), dtype=jnp.float32)
    fan_in = C * 3 * 3
    scale = 1.0 / float(fan_in) ** 0.5
    w1 = jax.random.uniform(k1, (3, 3, C, C), jnp.float32, -scale, scale)   # HWIO
    w2 = jax.random.uniform(k2, (3, 3, C, C), jnp.float32, -scale, scale)   # HWIO
    b1 = jax.random.uniform(kb1, (C,), jnp.float32, -scale, scale)
    b2 = jax.random.uniform(kb2, (C,), jnp.float32, -scale, scale)

    # NCHW (PyTorch convention) -> NHWC for the TPU kernel
    x_nhwc = jnp.transpose(x_nchw, (0, 2, 3, 1))

    out_nhwc = jax.block_until_ready(residual_block(x_nhwc, w1, b1, w2, b2))

    ref = reference_nhwc(x_nhwc, w1, b1, w2, b2)
    err = float(jnp.max(jnp.abs(out_nhwc - ref)))
    assert jnp.allclose(out_nhwc, ref, atol=1e-4, rtol=1e-4), f"max abs err = {err}"

    # back to NCHW if the caller wants PyTorch layout
    out_nchw = jnp.transpose(out_nhwc, (0, 3, 1, 2))
    assert out_nchw.shape == (N, C, H, W)

    print("KERNEL_OK")
</pallas_src>

<mosaic_0001>
module attributes {stable_mosaic.version = 11 : i64} {
  func.func @residual_block_kernel(%arg0: i32, %arg1: memref<1x16x64xf32, #tpu.memory_space<vmem>>, %arg2: memref<45x16x64xf32, #tpu.memory_space<vmem>>, %arg3: memref<16x64xf32, #tpu.memory_space<vmem>>, %arg4: memref<45x16x64xf32, #tpu.memory_space<vmem>>, %arg5: memref<16x64xf32, #tpu.memory_space<vmem>>, %arg6: memref<1x16x64xf32, #tpu.memory_space<vmem>>) attributes {dimension_semantics = [#tpu.dimension_semantics<parallel>], iteration_bounds = array<i64: 2>, scalar_prefetch = 0 : i64, scratch_operands = 0 : i64, tpu.core_type = #tpu.core_type<tc>, window_params = [{transform_indices = @transform_0, window_bounds = array<i64: 1, 16, 64>}, {pipeline_mode = #tpu.pipeline_mode<synchronous>, transform_indices = @transform_1, window_bounds = array<i64: 45, 16, 64>}, {pipeline_mode = #tpu.pipeline_mode<synchronous>, transform_indices = @transform_2, window_bounds = array<i64: 16, 64>}, {pipeline_mode = #tpu.pipeline_mode<synchronous>, transform_indices = @transform_3, window_bounds = array<i64: 45, 16, 64>}, {pipeline_mode = #tpu.pipeline_mode<synchronous>, transform_indices = @transform_4, window_bounds = array<i64: 16, 64>}, {transform_indices = @transform_5, window_bounds = array<i64: 1, 16, 64>}]} {
    %c0 = arith.constant 0 : index
    %c0_0 = arith.constant 0 : index
    %c0_1 = arith.constant 0 : index
    %0 = vector.load %arg1[%c0, %c0_0, %c0_1] : memref<1x16x64xf32, #tpu.memory_space<vmem>>, vector<1x16x64xf32>
    %1 = vector.shape_cast %0 : vector<1x16x64xf32> to vector<16x64xf32>
    %c0_2 = arith.constant 0 : index
    %c0_3 = arith.constant 0 : index
    %2 = vector.load %arg3[%c0_2, %c0_3] : memref<16x64xf32, #tpu.memory_space<vmem>>, vector<16x64xf32>
    %cst = arith.constant 0.000000e+00 : f32
    %3 = vector.broadcast %cst : f32 to vector<16x7xf32>
    %cst_4 = arith.constant 0.000000e+00 : f32
    %4 = vector.broadcast %cst_4 : f32 to vector<1x78xf32>
    %5 = tpu.concatenate %3, %1, %3 in 1 : vector<16x7xf32>, vector<16x64xf32>, vector<16x7xf32> -> vector<16x78xf32>
    %6 = tpu.concatenate %4, %5, %4 in 0 : vector<1x78xf32>, vector<16x78xf32>, vector<1x78xf32> -> vector<18x78xf32>
    %7 = vector.extract_strided_slice %6 {offsets = [0, 0], sizes = [16, 78], strides = [1, 1]} : vector<18x78xf32> to vector<16x78xf32>
    %8 = vector.extract_strided_slice %7 {offsets = [0, 0], sizes = [16, 64], strides = [1, 1]} : vector<16x78xf32> to vector<16x64xf32>
    %c0_5 = arith.constant 0 : index
    %c0_6 = arith.constant 0 : index
    %c0_7 = arith.constant 0 : index
    %9 = vector.load %arg2[%c0_5, %c0_6, %c0_7] : memref<45x16x64xf32, #tpu.memory_space<vmem>>, vector<1x16x64xf32>
    %10 = vector.shape_cast %9 : vector<1x16x64xf32> to vector<16x64xf32>
    %11 = arith.mulf %8, %10 : vector<16x64xf32>
    %12 = arith.addf %2, %11 : vector<16x64xf32>
    %13 = vector.extract_strided_slice %7 {offsets = [0, 1], sizes = [16, 64], strides = [1, 1]} : vector<16x78xf32> to vector<16x64xf32>
    %c1 = arith.constant 1 : index
    %c0_8 = arith.constant 0 : index
    %c0_9 = arith.constant 0 : index
    %14 = vector.load %arg2[%c1, %c0_8, %c0_9] : memref<45x16x64xf32, #tpu.memory_space<vmem>>, vector<1x16x64xf32>
    %15 = vector.shape_cast %14 : vector<1x16x64xf32> to vector<16x64xf32>
    %16 = arith.mulf %13, %15 : vector<16x64xf32>
    %17 = arith.addf %12, %16 : vector<16x64xf32>
    %18 = vector.extract_strided_slice %7 {offsets = [0, 2], sizes = [16, 64], strides = [1, 1]} : vector<16x78xf32> to vector<16x64xf32>
    %c2 = arith.constant 2 : index
    %c0_10 = arith.constant 0 : index
    %c0_11 = arith.constant 0 : index
    %19 = vector.load %arg2[%c2, %c0_10, %c0_11] : memref<45x16x64xf32, #tpu.memory_space<vmem>>, vector<1x16x64xf32>
    %20 = vector.shape_cast %19 : vector<1x16x64xf32> to vector<16x64xf32>
    %21 = arith.mulf %18, %20 : vector<16x64xf32>
    %22 = arith.addf %17, %21 : vector<16x64xf32>
    %23 = vector.extract_strided_slice %7 {offsets = [0, 3], sizes = [16, 64], strides = [1, 1]} : vector<16x78xf32> to vector<16x64xf32>
    %c3 = arith.constant 3 : index
    %c0_12 = arith.constant 0 : index
    %c0_13 = arith.constant 0 : index
    %24 = vector.load %arg2[%c3, %c0_12, %c0_13] : memref<45x16x64xf32, #tpu.memory_space<vmem>>, vector<1x16x64xf32>
    %25 = vector.shape_cast %24 : vector<1x16x64xf32> to vector<16x64xf32>
    %26 = arith.mulf %23, %25 : vector<16x64xf32>
    %27 = arith.addf %22, %26 : vector<16x64xf32>
    %28 = vector.extract_strided_slice %7 {offsets = [0, 4], sizes = [16, 64], strides = [1, 1]} : vector<16x78xf32> to vector<16x64xf32>
    %c4 = arith.constant 4 : index
    %c0_14 = arith.constant 0 : index
    %c0_15 = arith.constant 0 : index
    %29 = vector.load %arg2[%c4, %c0_14, %c0_15] : memref<45x16x64xf32, #tpu.memory_space<vmem>>, vector<1x16x64xf32>
    %30 = vector.shape_cast %29 : vector<1x16x64xf32> to vector<16x64xf32>
    %31 = arith.mulf %28, %30 : vector<16x64xf32>
    %32 = arith.addf %27, %31 : vector<16x64xf32>
    %33 = vector.extract_strided_slice %7 {offsets = [0, 5], sizes = [16, 64], strides = [1, 1]} : vector<16x78xf32> to vector<16x64xf32>
    %c5 = arith.constant 5 : index
    %c0_16 = arith.constant 0 : index
    %c0_17 = arith.constant 0 : index
    %34 = vector.load %arg2[%c5, %c0_16, %c0_17] : memref<45x16x64xf32, #tpu.memory_space<vmem>>, vector<1x16x64xf32>
    %35 = vector.shape_cast %34 : vector<1x16x64xf32> to vector<16x64xf32>
    %36 = arith.mulf %33, %35 : vector<16x64xf32>
    %37 = arith.addf %32, %36 : vector<16x64xf32>
    %38 = vector.extract_strided_slice %7 {offsets = [0, 6], sizes = [16, 64], strides = [1, 1]} : vector<16x78xf32> to vector<16x64xf32>
    %c6 = arith.constant 6 : index
    %c0_18 = arith.constant 0 : index
    %c0_19 = arith.constant 0 : index
    %39 = vector.load %arg2[%c6, %c0_18, %c0_19] : memref<45x16x64xf32, #tpu.memory_space<vmem>>, vector<1x16x64xf32>
    %40 = vector.shape_cast %39 : vector<1x16x64xf32> to vector<16x64xf32>
    %41 = arith.mulf %38, %40 : vector<16x64xf32>
    %42 = arith.addf %37, %41 : vector<16x64xf32>
    %43 = vector.extract_strided_slice %7 {offsets = [0, 7], sizes = [16, 64], strides = [1, 1]} : vector<16x78xf32> to vector<16x64xf32>
    %c7 = arith.constant 7 : index
    %c0_20 = arith.constant 0 : index
    %c0_21 = arith.constant 0 : index
    %44 = vector.load %arg2[%c7, %c0_20, %c0_21] : memref<45x16x64xf32, #tpu.memory_space<vmem>>, vector<1x16x64xf32>
    %45 = vector.shape_cast %44 : vector<1x16x64xf32> to vector<16x64xf32>
    %46 = arith.mulf %43, %45 : vector<16x64xf32>
    %47 = arith.addf %42, %46 : vector<16x64xf32>
    %48 = vector.extract_strided_slice %7 {offsets = [0, 8], sizes = [16, 64], strides = [1, 1]} : vector<16x78xf32> to vector<16x64xf32>
    %c8 = arith.constant 8 : index
    %c0_22 = arith.constant 0 : index
    %c0_23 = arith.constant 0 : index
    %49 = vector.load %arg2[%c8, %c0_22, %c0_23] : memref<45x16x64xf32, #tpu.memory_space<vmem>>, vector<1x16x64xf32>
    %50 = vector.shape_cast %49 : vector<1x16x64xf32> to vector<16x64xf32>
    %51 = arith.mulf %48, %50 : vector<16x64xf32>
    %52 = arith.addf %47, %51 : vector<16x64xf32>
    %53 = vector.extract_strided_slice %7 {offsets = [0, 9], sizes = [16, 64], strides = [1, 1]} : vector<16x78xf32> to vector<16x64xf32>
    %c9 = arith.constant 9 : index
    %c0_24 = arith.constant 0 : index
    %c0_25 = arith.constant 0 : index
    %54 = vector.load %arg2[%c9, %c0_24, %c0_25] : memref<45x16x64xf32, #tpu.memory_space<vmem>>, vector<1x16x64xf32>
    %55 = vector.shape_cast %54 : vector<1x16x64xf32> to vector<16x64xf32>
    %56 = arith.mulf %53, %55 : vector<16x64xf32>
    %57 = arith.addf %52, %56 : vector<16x64xf32>
    %58 = vector.extract_strided_slice %7 {offsets = [0, 10], sizes = [16, 64], strides = [1, 1]} : vector<16x78xf32> to vector<16x64xf32>
    %c10 = arith.constant 10 : index
    %c0_26 = arith.constant 0 : index
    %c0_27 = arith.constant 0 : index
    %59 = vector.load %arg2[%c10, %c0_26, %c0_27] : memref<45x16x64xf32, #tpu.memory_space<vmem>>, vector<1x16x64xf32>
    %60 = vector.shape_cast %59 : vector<1x16x64xf32> to vector<16x64xf32>
    %61 = arith.mulf %58, %60 : vector<16x64xf32>
    %62 = arith.addf %57, %61 : vector<16x64xf32>
    %63 = vector.extract_strided_slice %7 {offsets = [0, 11], sizes = [16, 64], strides = [1, 1]} : vector<16x78xf32> to vector<16x64xf32>
    %c11 = arith.constant 11 : index
    %c0_28 = arith.constant 0 : index
    %c0_29 = arith.constant 0 : index
    %64 = vector.load %arg2[%c11, %c0_28, %c0_29] : memref<45x16x64xf32, #tpu.memory_space<vmem>>, vector<1x16x64xf32>
    %65 = vector.shape_cast %64 : vector<1x16x64xf32> to vector<16x64xf32>
    %66 = arith.mulf %63, %65 : vector<16x64xf32>
    %67 = arith.addf %62, %66 : vector<16x64xf32>
    %68 = vector.extract_strided_slice %7 {offsets = [0, 12], sizes = [16, 64], strides = [1, 1]} : vector<16x78xf32> to vector<16x64xf32>
    %c12 = arith.constant 12 : index
    %c0_30 = arith.constant 0 : index
    %c0_31 = arith.constant 0 : index
    %69 = vector.load %arg2[%c12, %c0_30, %c0_31] : memref<45x16x64xf32, #tpu.memory_space<vmem>>, vector<1x16x64xf32>
    %70 = vector.shape_cast %69 : vector<1x16x64xf32> to vector<16x64xf32>
    %71 = arith.mulf %68, %70 : vector<16x64xf32>
    %72 = arith.addf %67, %71 : vector<16x64xf32>
    %73 = vector.extract_strided_slice %7 {offsets = [0, 13], sizes = [16, 64], strides = [1, 1]} : vector<16x78xf32> to vector<16x64xf32>
    %c13 = arith.constant 13 : index
    %c0_32 = arith.constant 0 : index
    %c0_33 = arith.constant 0 : index
    %74 = vector.load %arg2[%c13, %c0_32, %c0_33] : memref<45x16x64xf32, #tpu.memory_space<vmem>>, vector<1x16x64xf32>
    %75 = vector.shape_cast %74 : vector<1x16x64xf32> to vector<16x64xf32>
    %76 = arith.mulf %73, %75 : vector<16x64xf32>
    %77 = arith.addf %72, %76 : vector<16x64xf32>
    %78 = vector.extract_strided_slice %7 {offsets = [0, 14], sizes = [16, 64], strides = [1, 1]} : vector<16x78xf32> to vector<16x64xf32>
    %c14 = arith.constant 14 : index
    %c0_34 = arith.constant 0 : index
    %c0_35 = arith.constant 0 : index
    %79 = vector.load %arg2[%c14, %c0_34, %c0_35] : memref<45x16x64xf32, #tpu.memory_space<vmem>>, vector<1x16x64xf32>
    %80 = vector.shape_cast %79 : vector<1x16x64xf32> to vector<16x64xf32>
    %81 = arith.mulf %78, %80 : vector<16x64xf32>
    %82 = arith.addf %77, %81 : vector<16x64xf32>
    %83 = vector.extract_strided_slice %6 {offsets = [1, 0], sizes = [16, 78], strides = [1, 1]} : vector<18x78xf32> to vector<16x78xf32>
    %84 = vector.extract_strided_slice %83 {offsets = [0, 0], sizes = [16, 64], strides = [1, 1]} : vector<16x78xf32> to vector<16x64xf32>
    %c15 = arith.constant 15 : index
    %c0_36 = arith.constant 0 : index
    %c0_37 = arith.constant 0 : index
    %85 = vector.load %arg2[%c15, %c0_36, %c0_37] : memref<45x16x64xf32, #tpu.memory_space<vmem>>, vector<1x16x64xf32>
    %86 = vector.shape_cast %85 : vector<1x16x64xf32> to vector<16x64xf32>
    %87 = arith.mulf %84, %86 : vector<16x64xf32>
    %88 = arith.addf %82, %87 : vector<16x64xf32>
    %89 = vector.extract_strided_slice %83 {offsets = [0, 1], sizes = [16, 64], strides = [1, 1]} : vector<16x78xf32> to vector<16x64xf32>
    %c16 = arith.constant 16 : index
    %c0_38 = arith.constant 0 : index
    %c0_39 = arith.constant 0 : index
    %90 = vector.load %arg2[%c16, %c0_38, %c0_39] : memref<45x16x64xf32, #tpu.memory_space<vmem>>, vector<1x16x64xf32>
    %91 = vector.shape_cast %90 : vector<1x16x64xf32> to vector<16x64xf32>
    %92 = arith.mulf %89, %91 : vector<16x64xf32>
    %93 = arith.addf %88, %92 : vector<16x64xf32>
    %94 = vector.extract_strided_slice %83 {offsets = [0, 2], sizes = [16, 64], strides = [1, 1]} : vector<16x78xf32> to vector<16x64xf32>
    %c17 = arith.constant 17 : index
    %c0_40 = arith.constant 0 : index
    %c0_41 = arith.constant 0 : index
    %95 = vector.load %arg2[%c17, %c0_40, %c0_41] : memref<45x16x64xf32, #tpu.memory_space<vmem>>, vector<1x16x64xf32>
    %96 = vector.shape_cast %95 : vector<1x16x64xf32> to vector<16x64xf32>
    %97 = arith.mulf %94, %96 : vector<16x64xf32>
    %98 = arith.addf %93, %97 : vector<16x64xf32>
    %99 = vector.extract_strided_slice %83 {offsets = [0, 3], sizes = [16, 64], strides = [1, 1]} : vector<16x78xf32> to vector<16x64xf32>
    %c18 = arith.constant 18 : index
    %c0_42 = arith.constant 0 : index
    %c0_43 = arith.constant 0 : index
    %100 = vector.load %arg2[%c18, %c0_42, %c0_43] : memref<45x16x64xf32, #tpu.memory_space<vmem>>, vector<1x16x64xf32>
    %101 = vector.shape_cast %100 : vector<1x16x64xf32> to vector<16x64xf32>
    %102 = arith.mulf %99, %101 : vector<16x64xf32>
    %103 = arith.addf %98, %102 : vector<16x64xf32>
    %104 = vector.extract_strided_slice %83 {offsets = [0, 4], sizes = [16, 64], strides = [1, 1]} : vector<16x78xf32> to vector<16x64xf32>
    %c19 = arith.constant 19 : index
    %c0_44 = arith.constant 0 : index
    %c0_45 = arith.constant 0 : index
    %105 = vector.load %arg2[%c19, %c0_44, %c0_45] : memref<45x16x64xf32, #tpu.memory_space<vmem>>, vector<1x16x64xf32>
    %106 = vector.shape_cast %105 : vector<1x16x64xf32> to vector<16x64xf32>
    %107 = arith.mulf %104, %106 : vector<16x64xf32>
    %108 = arith.addf %103, %107 : vector<16x64xf32>
    %109 = vector.extract_strided_slice %83 {offsets = [0, 5], sizes = [16, 64], strides = [1, 1]} : vector<16x78xf32> to vector<16x64xf32>
    %c20 = arith.constant 20 : index
    %c0_46 = arith.constant 0 : index
    %c0_47 = arith.constant 0 : index
    %110 = vector.load %arg2[%c20, %c0_46, %c0_47] : memref<45x16x64xf32, #tpu.memory_space<vmem>>, vector<1x16x64xf32>
    %111 = vector.shape_cast %110 : vector<1x16x64xf32> to vector<16x64xf32>
    %112 = arith.mulf %109, %111 : vector<16x64xf32>
    %113 = arith.addf %108, %112 : vector<16x64xf32>
    %114 = vector.extract_strided_slice %83 {offsets = [0, 6], sizes = [16, 64], strides = [1, 1]} : vector<16x78xf32> to vector<16x64xf32>
    %c21 = arith.constant 21 : index
    %c0_48 = arith.constant 0 : index
    %c0_49 = arith.constant 0 : index
    %115 = vector.load %arg2[%c21, %c0_48, %c0_49] : memref<45x16x64xf32, #tpu.memory_space<vmem>>, vector<1x16x64xf32>
    %116 = vector.shape_cast %115 : vector<1x16x64xf32> to vector<16x64xf32>
    %117 = arith.mulf %114, %116 : vector<16x64xf32>
    %118 = arith.addf %113, %117 : vector<16x64xf32>
    %119 = vector.extract_strided_slice %83 {offsets = [0, 7], sizes = [16, 64], strides = [1, 1]} : vector<16x78xf32> to vector<16x64xf32>
    %c22 = arith.constant 22 : index
    %c0_50 = arith.constant 0 : index
    %c0_51 = arith.constant 0 : index
    %120 = vector.load %arg2[%c22, %c0_50, %c0_51] : memref<45x16x64xf32, #tpu.memory_space<vmem>>, vector<1x16x64xf32>
    %121 = vector.shape_cast %120 : vector<1x16x64xf32> to vector<16x64xf32>
    %122 = arith.mulf %119, %121 : vector<16x64xf32>
    %123 = arith.addf %118, %122 : vector<16x64xf32>
    %124 = vector.extract_strided_slice %83 {offsets = [0, 8], sizes = [16, 64], strides = [1, 1]} : vector<16x78xf32> to vector<16x64xf32>
    %c23 = arith.constant 23 : index
    %c0_52 = arith.constant 0 : index
    %c0_53 = arith.constant 0 : index
    %125 = vector.load %arg2[%c23, %c0_52, %c0_53] : memref<45x16x64xf32, #tpu.memory_space<vmem>>, vector<1x16x64xf32>
    %126 = vector.shape_cast %125 : vector<1x16x64xf32> to vector<16x64xf32>
    %127 = arith.mulf %124, %126 : vector<16x64xf32>
    %128 = arith.addf %123, %127 : vector<16x64xf32>
    %129 = vector.extract_strided_slice %83 {offsets = [0, 9], sizes = [16, 64], strides = [1, 1]} : vector<16x78xf32> to vector<16x64xf32>
    %c24 = arith.constant 24 : index
    %c0_54 = arith.constant 0 : index
    %c0_55 = arith.constant 0 : index
    %130 = vector.load %arg2[%c24, %c0_54, %c0_55] : memref<45x16x64xf32, #tpu.memory_space<vmem>>, vector<1x16x64xf32>
    %131 = vector.shape_cast %130 : vector<1x16x64xf32> to vector<16x64xf32>
    %132 = arith.mulf %129, %131 : vector<16x64xf32>
    %133 = arith.addf %128, %132 : vector<16x64xf32>
    %134 = vector.extract_strided_slice %83 {offsets = [0, 10], sizes = [16, 64], strides = [1, 1]} : vector<16x78xf32> to vector<16x64xf32>
    %c25 = arith.constant 25 : index
    %c0_56 = arith.constant 0 : index
    %c0_57 = arith.constant 0 : index
    %135 = vector.load %arg2[%c25, %c0_56, %c0_57] : memref<45x16x64xf32, #tpu.memory_space<vmem>>, vector<1x16x64xf32>
    %136 = vector.shape_cast %135 : vector<1x16x64xf32> to vector<16x64xf32>
    %137 = arith.mulf %134, %136 : vector<16x64xf32>
    %138 = arith.addf %133, %137 : vector<16x64xf32>
    %139 = vector.extract_strided_slice %83 {offsets = [0, 11], sizes = [16, 64], strides = [1, 1]} : vector<16x78xf32> to vector<16x64xf32>
    %c26 = arith.constant 26 : index
    %c0_58 = arith.constant 0 : index
    %c0_59 = arith.constant 0 : index
    %140 = vector.load %arg2[%c26, %c0_58, %c0_59] : memref<45x16x64xf32, #tpu.memory_space<vmem>>, vector<1x16x64xf32>
    %141 = vector.shape_cast %140 : vector<1x16x64xf32> to vector<16x64xf32>
    %142 = arith.mulf %139, %141 : vector<16x64xf32>
    %143 = arith.addf %138, %142 : vector<16x64xf32>
    %144 = vector.extract_strided_slice %83 {offsets = [0, 12], sizes = [16, 64], strides = [1, 1]} : vector<16x78xf32> to vector<16x64xf32>
    %c27 = arith.constant 27 : index
    %c0_60 = arith.constant 0 : index
    %c0_61 = arith.constant 0 : index
    %145 = vector.load %arg2[%c27, %c0_60, %c0_61] : memref<45x16x64xf32, #tpu.memory_space<vmem>>, vector<1x16x64xf32>
    %146 = vector.shape_cast %145 : vector<1x16x64xf32> to vector<16x64xf32>
    %147 = arith.mulf %144, %146 : vector<16x64xf32>
    %148 = arith.addf %143, %147 : vector<16x64xf32>
    %149 = vector.extract_strided_slice %83 {offsets = [0, 13], sizes = [16, 64], strides = [1, 1]} : vector<16x78xf32> to vector<16x64xf32>
    %c28 = arith.constant 28 : index
    %c0_62 = arith.constant 0 : index
    %c0_63 = arith.constant 0 : index
    %150 = vector.load %arg2[%c28, %c0_62, %c0_63] : memref<45x16x64xf32, #tpu.memory_space<vmem>>, vector<1x16x64xf32>
    %151 = vector.shape_cast %150 : vector<1x16x64xf32> to vector<16x64xf32>
    %152 = arith.mulf %149, %151 : vector<16x64xf32>
    %153 = arith.addf %148, %152 : vector<16x64xf32>
    %154 = vector.extract_strided_slice %83 {offsets = [0, 14], sizes = [16, 64], strides = [1, 1]} : vector<16x78xf32> to vector<16x64xf32>
    %c29 = arith.constant 29 : index
    %c0_64 = arith.constant 0 : index
    %c0_65 = arith.constant 0 : index
    %155 = vector.load %arg2[%c29, %c0_64, %c0_65] : memref<45x16x64xf32, #tpu.memory_space<vmem>>, vector<1x16x64xf32>
    %156 = vector.shape_cast %155 : vector<1x16x64xf32> to vector<16x64xf32>
    %157 = arith.mulf %154, %156 : vector<16x64xf32>
    %158 = arith.addf %153, %157 : vector<16x64xf32>
    %159 = vector.extract_strided_slice %6 {offsets = [2, 0], sizes = [16, 78], strides = [1, 1]} : vector<18x78xf32> to vector<16x78xf32>
    %160 = vector.extract_strided_slice %159 {offsets = [0, 0], sizes = [16, 64], strides = [1, 1]} : vector<16x78xf32> to vector<16x64xf32>
    %c30 = arith.constant 30 : index
    %c0_66 = arith.constant 0 : index
    %c0_67 = arith.constant 0 : index
    %161 = vector.load %arg2[%c30, %c0_66, %c0_67] : memref<45x16x64xf32, #tpu.memory_space<vmem>>, vector<1x16x64xf32>
    %162 = vector.shape_cast %161 : vector<1x16x64xf32> to vector<16x64xf32>
    %163 = arith.mulf %160, %162 : vector<16x64xf32>
    %164 = arith.addf %158, %163 : vector<16x64xf32>
    %165 = vector.extract_strided_slice %159 {offsets = [0, 1], sizes = [16, 64], strides = [1, 1]} : vector<16x78xf32> to vector<16x64xf32>
    %c31 = arith.constant 31 : index
    %c0_68 = arith.constant 0 : index
    %c0_69 = arith.constant 0 : index
    %166 = vector.load %arg2[%c31, %c0_68, %c0_69] : memref<45x16x64xf32, #tpu.memory_space<vmem>>, vector<1x16x64xf32>
    %167 = vector.shape_cast %166 : vector<1x16x64xf32> to vector<16x64xf32>
    %168 = arith.mulf %165, %167 : vector<16x64xf32>
    %169 = arith.addf %164, %168 : vector<16x64xf32>
    %170 = vector.extract_strided_slice %159 {offsets = [0, 2], sizes = [16, 64], strides = [1, 1]} : vector<16x78xf32> to vector<16x64xf32>
    %c32 = arith.constant 32 : index
    %c0_70 = arith.constant 0 : index
    %c0_71 = arith.constant 0 : index
    %171 = vector.load %arg2[%c32, %c0_70, %c0_71] : memref<45x16x64xf32, #tpu.memory_space<vmem>>, vector<1x16x64xf32>
    %172 = vector.shape_cast %171 : vector<1x16x64xf32> to vector<16x64xf32>
    %173 = arith.mulf %170, %172 : vector<16x64xf32>
    %174 = arith.addf %169, %173 : vector<16x64xf32>
    %175 = vector.extract_strided_slice %159 {offsets = [0, 3], sizes = [16, 64], strides = [1, 1]} : vector<16x78xf32> to vector<16x64xf32>
    %c33 = arith.constant 33 : index
    %c0_72 = arith.constant 0 : index
    %c0_73 = arith.constant 0 : index
    %176 = vector.load %arg2[%c33, %c0_72, %c0_73] : memref<45x16x64xf32, #tpu.memory_space<vmem>>, vector<1x16x64xf32>
    %177 = vector.shape_cast %176 : vector<1x16x64xf32> to vector<16x64xf32>
    %178 = arith.mulf %175, %177 : vector<16x64xf32>
    %179 = arith.addf %174, %178 : vector<16x64xf32>
    %180 = vector.extract_strided_slice %159 {offsets = [0, 4], sizes = [16, 64], strides = [1, 1]} : vector<16x78xf32> to vector<16x64xf32>
    %c34 = arith.constant 34 : index
    %c0_74 = arith.constant 0 : index
    %c0_75 = arith.constant 0 : index
    %181 = vector.load %arg2[%c34, %c0_74, %c0_75] : memref<45x16x64xf32, #tpu.memory_space<vmem>>, vector<1x16x64xf32>
    %182 = vector.shape_cast %181 : vector<1x16x64xf32> to vector<16x64xf32>
    %183 = arith.mulf %180, %182 : vector<16x64xf32>
    %184 = arith.addf %179, %183 : vector<16x64xf32>
    %185 = vector.extract_strided_slice %159 {offsets = [0, 5], sizes = [16, 64], strides = [1, 1]} : vector<16x78xf32> to vector<16x64xf32>
    %c35 = arith.constant 35 : index
    %c0_76 = arith.constant 0 : index
    %c0_77 = arith.constant 0 : index
    %186 = vector.load %arg2[%c35, %c0_76, %c0_77] : memref<45x16x64xf32, #tpu.memory_space<vmem>>, vector<1x16x64xf32>
    %187 = vector.shape_cast %186 : vector<1x16x64xf32> to vector<16x64xf32>
    %188 = arith.mulf %185, %187 : vector<16x64xf32>
    %189 = arith.addf %184, %188 : vector<16x64xf32>
    %190 = vector.extract_strided_slice %159 {offsets = [0, 6], sizes = [16, 64], strides = [1, 1]} : vector<16x78xf32> to vector<16x64xf32>
    %c36 = arith.constant 36 : index
    %c0_78 = arith.constant 0 : index
    %c0_79 = arith.constant 0 : index
    %191 = vector.load %arg2[%c36, %c0_78, %c0_79] : memref<45x16x64xf32, #tpu.memory_space<vmem>>, vector<1x16x64xf32>
    %192 = vector.shape_cast %191 : vector<1x16x64xf32> to vector<16x64xf32>
    %193 = arith.mulf %190, %192 : vector<16x64xf32>
    %194 = arith.addf %189, %193 : vector<16x64xf32>
    %195 = vector.extract_strided_slice %159 {offsets = [0, 7], sizes = [16, 64], strides = [1, 1]} : vector<16x78xf32> to vector<16x64xf32>
    %c37 = arith.constant 37 : index
    %c0_80 = arith.constant 0 : index
    %c0_81 = arith.constant 0 : index
    %196 = vector.load %arg2[%c37, %c0_80, %c0_81] : memref<45x16x64xf32, #tpu.memory_space<vmem>>, vector<1x16x64xf32>
    %197 = vector.shape_cast %196 : vector<1x16x64xf32> to vector<16x64xf32>
    %198 = arith.mulf %195, %197 : vector<16x64xf32>
    %199 = arith.addf %194, %198 : vector<16x64xf32>
    %200 = vector.extract_strided_slice %159 {offsets = [0, 8], sizes = [16, 64], strides = [1, 1]} : vector<16x78xf32> to vector<16x64xf32>
    %c38 = arith.constant 38 : index
    %c0_82 = arith.constant 0 : index
    %c0_83 = arith.constant 0 : index
    %201 = vector.load %arg2[%c38, %c0_82, %c0_83] : memref<45x16x64xf32, #tpu.memory_space<vmem>>, vector<1x16x64xf32>
    %202 = vector.shape_cast %201 : vector<1x16x64xf32> to vector<16x64xf32>
    %203 = arith.mulf %200, %202 : vector<16x64xf32>
    %204 = arith.addf %199, %203 : vector<16x64xf32>
    %205 = vector.extract_strided_slice %159 {offsets = [0, 9], sizes = [16, 64], strides = [1, 1]} : vector<16x78xf32> to vector<16x64xf32>
    %c39 = arith.constant 39 : index
    %c0_84 = arith.constant 0 : index
    %c0_85 = arith.constant 0 : index
    %206 = vector.load %arg2[%c39, %c0_84, %c0_85] : memref<45x16x64xf32, #tpu.memory_space<vmem>>, vector<1x16x64xf32>
    %207 = vector.shape_cast %206 : vector<1x16x64xf32> to vector<16x64xf32>
    %208 = arith.mulf %205, %207 : vector<16x64xf32>
    %209 = arith.addf %204, %208 : vector<16x64xf32>
    %210 = vector.extract_strided_slice %159 {offsets = [0, 10], sizes = [16, 64], strides = [1, 1]} : vector<16x78xf32> to vector<16x64xf32>
    %c40 = arith.constant 40 : index
    %c0_86 = arith.constant 0 : index
    %c0_87 = arith.constant 0 : index
    %211 = vector.load %arg2[%c40, %c0_86, %c0_87] : memref<45x16x64xf32, #tpu.memory_space<vmem>>, vector<1x16x64xf32>
    %212 = vector.shape_cast %211 : vector<1x16x64xf32> to vector<16x64xf32>
    %213 = arith.mulf %210, %212 : vector<16x64xf32>
    %214 = arith.addf %209, %213 : vector<16x64xf32>
    %215 = vector.extract_strided_slice %159 {offsets = [0, 11], sizes = [16, 64], strides = [1, 1]} : vector<16x78xf32> to vector<16x64xf32>
    %c41 = arith.constant 41 : index
    %c0_88 = arith.constant 0 : index
    %c0_89 = arith.constant 0 : index
    %216 = vector.load %arg2[%c41, %c0_88, %c0_89] : memref<45x16x64xf32, #tpu.memory_space<vmem>>, vector<1x16x64xf32>
    %217 = vector.shape_cast %216 : vector<1x16x64xf32> to vector<16x64xf32>
    %218 = arith.mulf %215, %217 : vector<16x64xf32>
    %219 = arith.addf %214, %218 : vector<16x64xf32>
    %220 = vector.extract_strided_slice %159 {offsets = [0, 12], sizes = [16, 64], strides = [1, 1]} : vector<16x78xf32> to vector<16x64xf32>
    %c42 = arith.constant 42 : index
    %c0_90 = arith.constant 0 : index
    %c0_91 = arith.constant 0 : index
    %221 = vector.load %arg2[%c42, %c0_90, %c0_91] : memref<45x16x64xf32, #tpu.memory_space<vmem>>, vector<1x16x64xf32>
    %222 = vector.shape_cast %221 : vector<1x16x64xf32> to vector<16x64xf32>
    %223 = arith.mulf %220, %222 : vector<16x64xf32>
    %224 = arith.addf %219, %223 : vector<16x64xf32>
    %225 = vector.extract_strided_slice %159 {offsets = [0, 13], sizes = [16, 64], strides = [1, 1]} : vector<16x78xf32> to vector<16x64xf32>
    %c43 = arith.constant 43 : index
    %c0_92 = arith.constant 0 : index
    %c0_93 = arith.constant 0 : index
    %226 = vector.load %arg2[%c43, %c0_92, %c0_93] : memref<45x16x64xf32, #tpu.memory_space<vmem>>, vector<1x16x64xf32>
    %227 = vector.shape_cast %226 : vector<1x16x64xf32> to vector<16x64xf32>
    %228 = arith.mulf %225, %227 : vector<16x64xf32>
    %229 = arith.addf %224, %228 : vector<16x64xf32>
    %230 = vector.extract_strided_slice %159 {offsets = [0, 14], sizes = [16, 64], strides = [1, 1]} : vector<16x78xf32> to vector<16x64xf32>
    %c44 = arith.constant 44 : index
    %c0_94 = arith.constant 0 : index
    %c0_95 = arith.constant 0 : index
    %231 = vector.load %arg2[%c44, %c0_94, %c0_95] : memref<45x16x64xf32, #tpu.memory_space<vmem>>, vector<1x16x64xf32>
    %232 = vector.shape_cast %231 : vector<1x16x64xf32> to vector<16x64xf32>
    %233 = arith.mulf %230, %232 : vector<16x64xf32>
    %234 = arith.addf %229, %233 : vector<16x64xf32>
    %cst_96 = arith.constant 0.000000e+00 : f32
    %235 = vector.broadcast %cst_96 : f32 to vector<16x64xf32>
    %236 = arith.maximumf %234, %235 : vector<16x64xf32>
    %c0_97 = arith.constant 0 : index
    %c0_98 = arith.constant 0 : index
    %237 = vector.load %arg5[%c0_97, %c0_98] : memref<16x64xf32, #tpu.memory_space<vmem>>, vector<16x64xf32>
    %238 = arith.addf %1, %237 : vector<16x64xf32>
    %cst_99 = arith.constant 0.000000e+00 : f32
    %239 = vector.broadcast %cst_99 : f32 to vector<16x7xf32>
    %cst_100 = arith.constant 0.000000e+00 : f32
    %240 = vector.broadcast %cst_100 : f32 to vector<1x78xf32>
    %241 = tpu.concatenate %239, %236, %239 in 1 : vector<16x7xf32>, vector<16x64xf32>, vector<16x7xf32> -> vector<16x78xf32>
    %242 = tpu.concatenate %240, %241, %240 in 0 : vector<1x78xf32>, vector<16x78xf32>, vector<1x78xf32> -> vector<18x78xf32>
    %243 = vector.extract_strided_slice %242 {offsets = [0, 0], sizes = [16, 78], strides = [1, 1]} : vector<18x78xf32> to vector<16x78xf32>
    %244 = vector.extract_strided_slice %243 {offsets = [0, 0], sizes = [16, 64], strides = [1, 1]} : vector<16x78xf32> to vector<16x64xf32>
    %c0_101 = arith.constant 0 : index
    %c0_102 = arith.constant 0 : index
    %c0_103 = arith.constant 0 : index
    %245 = vector.load %arg4[%c0_101, %c0_102, %c0_103] : memref<45x16x64xf32, #tpu.memory_space<vmem>>, vector<1x16x64xf32>
    %246 = vector.shape_cast %245 : vector<1x16x64xf32> to vector<16x64xf32>
    %247 = arith.mulf %244, %246 : vector<16x64xf32>
    %248 = arith.addf %238, %247 : vector<16x64xf32>
    %249 = vector.extract_strided_slice %243 {offsets = [0, 1], sizes = [16, 64], strides = [1, 1]} : vector<16x78xf32> to vector<16x64xf32>
    %c1_104 = arith.constant 1 : index
    %c0_105 = arith.constant 0 : index
    %c0_106 = arith.constant 0 : index
    %250 = vector.load %arg4[%c1_104, %c0_105, %c0_106] : memref<45x16x64xf32, #tpu.memory_space<vmem>>, vector<1x16x64xf32>
    %251 = vector.shape_cast %250 : vector<1x16x64xf32> to vector<16x64xf32>
    %252 = arith.mulf %249, %251 : vector<16x64xf32>
    %253 = arith.addf %248, %252 : vector<16x64xf32>
    %254 = vector.extract_strided_slice %243 {offsets = [0, 2], sizes = [16, 64], strides = [1, 1]} : vector<16x78xf32> to vector<16x64xf32>
    %c2_107 = arith.constant 2 : index
    %c0_108 = arith.constant 0 : index
    %c0_109 = arith.constant 0 : index
    %255 = vector.load %arg4[%c2_107, %c0_108, %c0_109] : memref<45x16x64xf32, #tpu.memory_space<vmem>>, vector<1x16x64xf32>
    %256 = vector.shape_cast %255 : vector<1x16x64xf32> to vector<16x64xf32>
    %257 = arith.mulf %254, %256 : vector<16x64xf32>
    %258 = arith.addf %253, %257 : vector<16x64xf32>
    %259 = vector.extract_strided_slice %243 {offsets = [0, 3], sizes = [16, 64], strides = [1, 1]} : vector<16x78xf32> to vector<16x64xf32>
    %c3_110 = arith.constant 3 : index
    %c0_111 = arith.constant 0 : index
    %c0_112 = arith.constant 0 : index
    %260 = vector.load %arg4[%c3_110, %c0_111, %c0_112] : memref<45x16x64xf32, #tpu.memory_space<vmem>>, vector<1x16x64xf32>
    %261 = vector.shape_cast %260 : vector<1x16x64xf32> to vector<16x64xf32>
    %262 = arith.mulf %259, %261 : vector<16x64xf32>
    %263 = arith.addf %258, %262 : vector<16x64xf32>
    %264 = vector.extract_strided_slice %243 {offsets = [0, 4], sizes = [16, 64], strides = [1, 1]} : vector<16x78xf32> to vector<16x64xf32>
    %c4_113 = arith.constant 4 : index
    %c0_114 = arith.constant 0 : index
    %c0_115 = arith.constant 0 : index
    %265 = vector.load %arg4[%c4_113, %c0_114, %c0_115] : memref<45x16x64xf32, #tpu.memory_space<vmem>>, vector<1x16x64xf32>
    %266 = vector.shape_cast %265 : vector<1x16x64xf32> to vector<16x64xf32>
    %267 = arith.mulf %264, %266 : vector<16x64xf32>
    %268 = arith.addf %263, %267 : vector<16x64xf32>
    %269 = vector.extract_strided_slice %243 {offsets = [0, 5], sizes = [16, 64], strides = [1, 1]} : vector<16x78xf32> to vector<16x64xf32>
    %c5_116 = arith.constant 5 : index
    %c0_117 = arith.constant 0 : index
    %c0_118 = arith.constant 0 : index
    %270 = vector.load %arg4[%c5_116, %c0_117, %c0_118] : memref<45x16x64xf32, #tpu.memory_space<vmem>>, vector<1x16x64xf32>
    %271 = vector.shape_cast %270 : vector<1x16x64xf32> to vector<16x64xf32>
    %272 = arith.mulf %269, %271 : vector<16x64xf32>
    %273 = arith.addf %268, %272 : vector<16x64xf32>
    %274 = vector.extract_strided_slice %243 {offsets = [0, 6], sizes = [16, 64], strides = [1, 1]} : vector<16x78xf32> to vector<16x64xf32>
    %c6_119 = arith.constant 6 : index
    %c0_120 = arith.constant 0 : index
    %c0_121 = arith.constant 0 : index
    %275 = vector.load %arg4[%c6_119, %c0_120, %c0_121] : memref<45x16x64xf32, #tpu.memory_space<vmem>>, vector<1x16x64xf32>
    %276 = vector.shape_cast %275 : vector<1x16x64xf32> to vector<16x64xf32>
    %277 = arith.mulf %274, %276 : vector<16x64xf32>
    %278 = arith.addf %273, %277 : vector<16x64xf32>
    %279 = vector.extract_strided_slice %243 {offsets = [0, 7], sizes = [16, 64], strides = [1, 1]} : vector<16x78xf32> to vector<16x64xf32>
    %c7_122 = arith.constant 7 : index
    %c0_123 = arith.constant 0 : index
    %c0_124 = arith.constant 0 : index
    %280 = vector.load %arg4[%c7_122, %c0_123, %c0_124] : memref<45x16x64xf32, #tpu.memory_space<vmem>>, vector<1x16x64xf32>
    %281 = vector.shape_cast %280 : vector<1x16x64xf32> to vector<16x64xf32>
    %282 = arith.mulf %279, %281 : vector<16x64xf32>
    %283 = arith.addf %278, %282 : vector<16x64xf32>
    %284 = vector.extract_strided_slice %243 {offsets = [0, 8], sizes = [16, 64], strides = [1, 1]} : vector<16x78xf32> to vector<16x64xf32>
    %c8_125 = arith.constant 8 : index
    %c0_126 = arith.constant 0 : index
    %c0_127 = arith.constant 0 : index
    %285 = vector.load %arg4[%c8_125, %c0_126, %c0_127] : memref<45x16x64xf32, #tpu.memory_space<vmem>>, vector<1x16x64xf32>
    %286 = vector.shape_cast %285 : vector<1x16x64xf32> to vector<16x64xf32>
    %287 = arith.mulf %284, %286 : vector<16x64xf32>
    %288 = arith.addf %283, %287 : vector<16x64xf32>
    %289 = vector.extract_strided_slice %243 {offsets = [0, 9], sizes = [16, 64], strides = [1, 1]} : vector<16x78xf32> to vector<16x64xf32>
    %c9_128 = arith.constant 9 : index
    %c0_129 = arith.constant 0 : index
    %c0_130 = arith.constant 0 : index
    %290 = vector.load %arg4[%c9_128, %c0_129, %c0_130] : memref<45x16x64xf32, #tpu.memory_space<vmem>>, vector<1x16x64xf32>
    %291 = vector.shape_cast %290 : vector<1x16x64xf32> to vector<16x64xf32>
    %292 = arith.mulf %289, %291 : vector<16x64xf32>
    %293 = arith.addf %288, %292 : vector<16x64xf32>
    %294 = vector.extract_strided_slice %243 {offsets = [0, 10], sizes = [16, 64], strides = [1, 1]} : vector<16x78xf32> to vector<16x64xf32>
    %c10_131 = arith.constant 10 : index
    %c0_132 = arith.constant 0 : index
    %c0_133 = arith.constant 0 : index
    %295 = vector.load %arg4[%c10_131, %c0_132, %c0_133] : memref<45x16x64xf32, #tpu.memory_space<vmem>>, vector<1x16x64xf32>
    %296 = vector.shape_cast %295 : vector<1x16x64xf32> to vector<16x64xf32>
    %297 = arith.mulf %294, %296 : vector<16x64xf32>
    %298 = arith.addf %293, %297 : vector<16x64xf32>
    %299 = vector.extract_strided_slice %243 {offsets = [0, 11], sizes = [16, 64], strides = [1, 1]} : vector<16x78xf32> to vector<16x64xf32>
    %c11_134 = arith.constant 11 : index
    %c0_135 = arith.constant 0 : index
    %c0_136 = arith.constant 0 : index
    %300 = vector.load %arg4[%c11_134, %c0_135, %c0_136] : memref<45x16x64xf32, #tpu.memory_space<vmem>>, vector<1x16x64xf32>
    %301 = vector.shape_cast %300 : vector<1x16x64xf32> to vector<16x64xf32>
    %302 = arith.mulf %299, %301 : vector<16x64xf32>
    %303 = arith.addf %298, %302 : vector<16x64xf32>
    %304 = vector.extract_strided_slice %243 {offsets = [0, 12], sizes = [16, 64], strides = [1, 1]} : vector<16x78xf32> to vector<16x64xf32>
    %c12_137 = arith.constant 12 : index
    %c0_138 = arith.constant 0 : index
    %c0_139 = arith.constant 0 : index
    %305 = vector.load %arg4[%c12_137, %c0_138, %c0_139] : memref<45x16x64xf32, #tpu.memory_space<vmem>>, vector<1x16x64xf32>
    %306 = vector.shape_cast %305 : vector<1x16x64xf32> to vector<16x64xf32>
    %307 = arith.mulf %304, %306 : vector<16x64xf32>
    %308 = arith.addf %303, %307 : vector<16x64xf32>
    %309 = vector.extract_strided_slice %243 {offsets = [0, 13], sizes = [16, 64], strides = [1, 1]} : vector<16x78xf32> to vector<16x64xf32>
    %c13_140 = arith.constant 13 : index
    %c0_141 = arith.constant 0 : index
    %c0_142 = arith.constant 0 : index
    %310 = vector.load %arg4[%c13_140, %c0_141, %c0_142] : memref<45x16x64xf32, #tpu.memory_space<vmem>>, vector<1x16x64xf32>
    %311 = vector.shape_cast %310 : vector<1x16x64xf32> to vector<16x64xf32>
    %312 = arith.mulf %309, %311 : vector<16x64xf32>
    %313 = arith.addf %308, %312 : vector<16x64xf32>
    %314 = vector.extract_strided_slice %243 {offsets = [0, 14], sizes = [16, 64], strides = [1, 1]} : vector<16x78xf32> to vector<16x64xf32>
    %c14_143 = arith.constant 14 : index
    %c0_144 = arith.constant 0 : index
    %c0_145 = arith.constant 0 : index
    %315 = vector.load %arg4[%c14_143, %c0_144, %c0_145] : memref<45x16x64xf32, #tpu.memory_space<vmem>>, vector<1x16x64xf32>
    %316 = vector.shape_cast %315 : vector<1x16x64xf32> to vector<16x64xf32>
    %317 = arith.mulf %314, %316 : vector<16x64xf32>
    %318 = arith.addf %313, %317 : vector<16x64xf32>
    %319 = vector.extract_strided_slice %242 {offsets = [1, 0], sizes = [16, 78], strides = [1, 1]} : vector<18x78xf32> to vector<16x78xf32>
    %320 = vector.extract_strided_slice %319 {offsets = [0, 0], sizes = [16, 64], strides = [1, 1]} : vector<16x78xf32> to vector<16x64xf32>
    %c15_146 = arith.constant 15 : index
    %c0_147 = arith.constant 0 : index
    %c0_148 = arith.constant 0 : index
    %321 = vector.load %arg4[%c15_146, %c0_147, %c0_148] : memref<45x16x64xf32, #tpu.memory_space<vmem>>, vector<1x16x64xf32>
    %322 = vector.shape_cast %321 : vector<1x16x64xf32> to vector<16x64xf32>
    %323 = arith.mulf %320, %322 : vector<16x64xf32>
    %324 = arith.addf %318, %323 : vector<16x64xf32>
    %325 = vector.extract_strided_slice %319 {offsets = [0, 1], sizes = [16, 64], strides = [1, 1]} : vector<16x78xf32> to vector<16x64xf32>
    %c16_149 = arith.constant 16 : index
    %c0_150 = arith.constant 0 : index
    %c0_151 = arith.constant 0 : index
    %326 = vector.load %arg4[%c16_149, %c0_150, %c0_151] : memref<45x16x64xf32, #tpu.memory_space<vmem>>, vector<1x16x64xf32>
    %327 = vector.shape_cast %326 : vector<1x16x64xf32> to vector<16x64xf32>
    %328 = arith.mulf %325, %327 : vector<16x64xf32>
    %329 = arith.addf %324, %328 : vector<16x64xf32>
    %330 = vector.extract_strided_slice %319 {offsets = [0, 2], sizes = [16, 64], strides = [1, 1]} : vector<16x78xf32> to vector<16x64xf32>
    %c17_152 = arith.constant 17 : index
    %c0_153 = arith.constant 0 : index
    %c0_154 = arith.constant 0 : index
    %331 = vector.load %arg4[%c17_152, %c0_153, %c0_154] : memref<45x16x64xf32, #tpu.memory_space<vmem>>, vector<1x16x64xf32>
    %332 = vector.shape_cast %331 : vector<1x16x64xf32> to vector<16x64xf32>
    %333 = arith.mulf %330, %332 : vector<16x64xf32>
    %334 = arith.addf %329, %333 : vector<16x64xf32>
    %335 = vector.extract_strided_slice %319 {offsets = [0, 3], sizes = [16, 64], strides = [1, 1]} : vector<16x78xf32> to vector<16x64xf32>
    %c18_155 = arith.constant 18 : index
    %c0_156 = arith.constant 0 : index
    %c0_157 = arith.constant 0 : index
    %336 = vector.load %arg4[%c18_155, %c0_156, %c0_157] : memref<45x16x64xf32, #tpu.memory_space<vmem>>, vector<1x16x64xf32>
    %337 = vector.shape_cast %336 : vector<1x16x64xf32> to vector<16x64xf32>
    %338 = arith.mulf %335, %337 : vector<16x64xf32>
    %339 = arith.addf %334, %338 : vector<16x64xf32>
    %340 = vector.extract_strided_slice %319 {offsets = [0, 4], sizes = [16, 64], strides = [1, 1]} : vector<16x78xf32> to vector<16x64xf32>
    %c19_158 = arith.constant 19 : index
    %c0_159 = arith.constant 0 : index
    %c0_160 = arith.constant 0 : index
    %341 = vector.load %arg4[%c19_158, %c0_159, %c0_160] : memref<45x16x64xf32, #tpu.memory_space<vmem>>, vector<1x16x64xf32>
    %342 = vector.shape_cast %341 : vector<1x16x64xf32> to vector<16x64xf32>
    %343 = arith.mulf %340, %342 : vector<16x64xf32>
    %344 = arith.addf %339, %343 : vector<16x64xf32>
    %345 = vector.extract_strided_slice %319 {offsets = [0, 5], sizes = [16, 64], strides = [1, 1]} : vector<16x78xf32> to vector<16x64xf32>
    %c20_161 = arith.constant 20 : index
    %c0_162 = arith.constant 0 : index
    %c0_163 = arith.constant 0 : index
    %346 = vector.load %arg4[%c20_161, %c0_162, %c0_163] : memref<45x16x64xf32, #tpu.memory_space<vmem>>, vector<1x16x64xf32>
    %347 = vector.shape_cast %346 : vector<1x16x64xf32> to vector<16x64xf32>
    %348 = arith.mulf %345, %347 : vector<16x64xf32>
    %349 = arith.addf %344, %348 : vector<16x64xf32>
    %350 = vector.extract_strided_slice %319 {offsets = [0, 6], sizes = [16, 64], strides = [1, 1]} : vector<16x78xf32> to vector<16x64xf32>
    %c21_164 = arith.constant 21 : index
    %c0_165 = arith.constant 0 : index
    %c0_166 = arith.constant 0 : index
    %351 = vector.load %arg4[%c21_164, %c0_165, %c0_166] : memref<45x16x64xf32, #tpu.memory_space<vmem>>, vector<1x16x64xf32>
    %352 = vector.shape_cast %351 : vector<1x16x64xf32> to vector<16x64xf32>
    %353 = arith.mulf %350, %352 : vector<16x64xf32>
    %354 = arith.addf %349, %353 : vector<16x64xf32>
    %355 = vector.extract_strided_slice %319 {offsets = [0, 7], sizes = [16, 64], strides = [1, 1]} : vector<16x78xf32> to vector<16x64xf32>
    %c22_167 = arith.constant 22 : index
    %c0_168 = arith.constant 0 : index
    %c0_169 = arith.constant 0 : index
    %356 = vector.load %arg4[%c22_167, %c0_168, %c0_169] : memref<45x16x64xf32, #tpu.memory_space<vmem>>, vector<1x16x64xf32>
    %357 = vector.shape_cast %356 : vector<1x16x64xf32> to vector<16x64xf32>
    %358 = arith.mulf %355, %357 : vector<16x64xf32>
    %359 = arith.addf %354, %358 : vector<16x64xf32>
    %360 = vector.extract_strided_slice %319 {offsets = [0, 8], sizes = [16, 64], strides = [1, 1]} : vector<16x78xf32> to vector<16x64xf32>
    %c23_170 = arith.constant 23 : index
    %c0_171 = arith.constant 0 : index
    %c0_172 = arith.constant 0 : index
    %361 = vector.load %arg4[%c23_170, %c0_171, %c0_172] : memref<45x16x64xf32, #tpu.memory_space<vmem>>, vector<1x16x64xf32>
    %362 = vector.shape_cast %361 : vector<1x16x64xf32> to vector<16x64xf32>
    %363 = arith.mulf %360, %362 : vector<16x64xf32>
    %364 = arith.addf %359, %363 : vector<16x64xf32>
    %365 = vector.extract_strided_slice %319 {offsets = [0, 9], sizes = [16, 64], strides = [1, 1]} : vector<16x78xf32> to vector<16x64xf32>
    %c24_173 = arith.constant 24 : index
    %c0_174 = arith.constant 0 : index
    %c0_175 = arith.constant 0 : index
    %366 = vector.load %arg4[%c24_173, %c0_174, %c0_175] : memref<45x16x64xf32, #tpu.memory_space<vmem>>, vector<1x16x64xf32>
    %367 = vector.shape_cast %366 : vector<1x16x64xf32> to vector<16x64xf32>
    %368 = arith.mulf %365, %367 : vector<16x64xf32>
    %369 = arith.addf %364, %368 : vector<16x64xf32>
    %370 = vector.extract_strided_slice %319 {offsets = [0, 10], sizes = [16, 64], strides = [1, 1]} : vector<16x78xf32> to vector<16x64xf32>
    %c25_176 = arith.constant 25 : index
    %c0_177 = arith.constant 0 : index
    %c0_178 = arith.constant 0 : index
    %371 = vector.load %arg4[%c25_176, %c0_177, %c0_178] : memref<45x16x64xf32, #tpu.memory_space<vmem>>, vector<1x16x64xf32>
    %372 = vector.shape_cast %371 : vector<1x16x64xf32> to vector<16x64xf32>
    %373 = arith.mulf %370, %372 : vector<16x64xf32>
    %374 = arith.addf %369, %373 : vector<16x64xf32>
    %375 = vector.extract_strided_slice %319 {offsets = [0, 11], sizes = [16, 64], strides = [1, 1]} : vector<16x78xf32> to vector<16x64xf32>
    %c26_179 = arith.constant 26 : index
    %c0_180 = arith.constant 0 : index
    %c0_181 = arith.constant 0 : index
    %376 = vector.load %arg4[%c26_179, %c0_180, %c0_181] : memref<45x16x64xf32, #tpu.memory_space<vmem>>, vector<1x16x64xf32>
    %377 = vector.shape_cast %376 : vector<1x16x64xf32> to vector<16x64xf32>
    %378 = arith.mulf %375, %377 : vector<16x64xf32>
    %379 = arith.addf %374, %378 : vector<16x64xf32>
    %380 = vector.extract_strided_slice %319 {offsets = [0, 12], sizes = [16, 64], strides = [1, 1]} : vector<16x78xf32> to vector<16x64xf32>
    %c27_182 = arith.constant 27 : index
    %c0_183 = arith.constant 0 : index
    %c0_184 = arith.constant 0 : index
    %381 = vector.load %arg4[%c27_182, %c0_183, %c0_184] : memref<45x16x64xf32, #tpu.memory_space<vmem>>, vector<1x16x64xf32>
    %382 = vector.shape_cast %381 : vector<1x16x64xf32> to vector<16x64xf32>
    %383 = arith.mulf %380, %382 : vector<16x64xf32>
    %384 = arith.addf %379, %383 : vector<16x64xf32>
    %385 = vector.extract_strided_slice %319 {offsets = [0, 13], sizes = [16, 64], strides = [1, 1]} : vector<16x78xf32> to vector<16x64xf32>
    %c28_185 = arith.constant 28 : index
    %c0_186 = arith.constant 0 : index
    %c0_187 = arith.constant 0 : index
    %386 = vector.load %arg4[%c28_185, %c0_186, %c0_187] : memref<45x16x64xf32, #tpu.memory_space<vmem>>, vector<1x16x64xf32>
    %387 = vector.shape_cast %386 : vector<1x16x64xf32> to vector<16x64xf32>
    %388 = arith.mulf %385, %387 : vector<16x64xf32>
    %389 = arith.addf %384, %388 : vector<16x64xf32>
    %390 = vector.extract_strided_slice %319 {offsets = [0, 14], sizes = [16, 64], strides = [1, 1]} : vector<16x78xf32> to vector<16x64xf32>
    %c29_188 = arith.constant 29 : index
    %c0_189 = arith.constant 0 : index
    %c0_190 = arith.constant 0 : index
    %391 = vector.load %arg4[%c29_188, %c0_189, %c0_190] : memref<45x16x64xf32, #tpu.memory_space<vmem>>, vector<1x16x64xf32>
    %392 = vector.shape_cast %391 : vector<1x16x64xf32> to vector<16x64xf32>
    %393 = arith.mulf %390, %392 : vector<16x64xf32>
    %394 = arith.addf %389, %393 : vector<16x64xf32>
    %395 = vector.extract_strided_slice %242 {offsets = [2, 0], sizes = [16, 78], strides = [1, 1]} : vector<18x78xf32> to vector<16x78xf32>
    %396 = vector.extract_strided_slice %395 {offsets = [0, 0], sizes = [16, 64], strides = [1, 1]} : vector<16x78xf32> to vector<16x64xf32>
    %c30_191 = arith.constant 30 : index
    %c0_192 = arith.constant 0 : index
    %c0_193 = arith.constant 0 : index
    %397 = vector.load %arg4[%c30_191, %c0_192, %c0_193] : memref<45x16x64xf32, #tpu.memory_space<vmem>>, vector<1x16x64xf32>
    %398 = vector.shape_cast %397 : vector<1x16x64xf32> to vector<16x64xf32>
    %399 = arith.mulf %396, %398 : vector<16x64xf32>
    %400 = arith.addf %394, %399 : vector<16x64xf32>
    %401 = vector.extract_strided_slice %395 {offsets = [0, 1], sizes = [16, 64], strides = [1, 1]} : vector<16x78xf32> to vector<16x64xf32>
    %c31_194 = arith.constant 31 : index
    %c0_195 = arith.constant 0 : index
    %c0_196 = arith.constant 0 : index
    %402 = vector.load %arg4[%c31_194, %c0_195, %c0_196] : memref<45x16x64xf32, #tpu.memory_space<vmem>>, vector<1x16x64xf32>
    %403 = vector.shape_cast %402 : vector<1x16x64xf32> to vector<16x64xf32>
    %404 = arith.mulf %401, %403 : vector<16x64xf32>
    %405 = arith.addf %400, %404 : vector<16x64xf32>
    %406 = vector.extract_strided_slice %395 {offsets = [0, 2], sizes = [16, 64], strides = [1, 1]} : vector<16x78xf32> to vector<16x64xf32>
    %c32_197 = arith.constant 32 : index
    %c0_198 = arith.constant 0 : index
    %c0_199 = arith.constant 0 : index
    %407 = vector.load %arg4[%c32_197, %c0_198, %c0_199] : memref<45x16x64xf32, #tpu.memory_space<vmem>>, vector<1x16x64xf32>
    %408 = vector.shape_cast %407 : vector<1x16x64xf32> to vector<16x64xf32>
    %409 = arith.mulf %406, %408 : vector<16x64xf32>
    %410 = arith.addf %405, %409 : vector<16x64xf32>
    %411 = vector.extract_strided_slice %395 {offsets = [0, 3], sizes = [16, 64], strides = [1, 1]} : vector<16x78xf32> to vector<16x64xf32>
    %c33_200 = arith.constant 33 : index
    %c0_201 = arith.constant 0 : index
    %c0_202 = arith.constant 0 : index
    %412 = vector.load %arg4[%c33_200, %c0_201, %c0_202] : memref<45x16x64xf32, #tpu.memory_space<vmem>>, vector<1x16x64xf32>
    %413 = vector.shape_cast %412 : vector<1x16x64xf32> to vector<16x64xf32>
    %414 = arith.mulf %411, %413 : vector<16x64xf32>
    %415 = arith.addf %410, %414 : vector<16x64xf32>
    %416 = vector.extract_strided_slice %395 {offsets = [0, 4], sizes = [16, 64], strides = [1, 1]} : vector<16x78xf32> to vector<16x64xf32>
    %c34_203 = arith.constant 34 : index
    %c0_204 = arith.constant 0 : index
    %c0_205 = arith.constant 0 : index
    %417 = vector.load %arg4[%c34_203, %c0_204, %c0_205] : memref<45x16x64xf32, #tpu.memory_space<vmem>>, vector<1x16x64xf32>
    %418 = vector.shape_cast %417 : vector<1x16x64xf32> to vector<16x64xf32>
    %419 = arith.mulf %416, %418 : vector<16x64xf32>
    %420 = arith.addf %415, %419 : vector<16x64xf32>
    %421 = vector.extract_strided_slice %395 {offsets = [0, 5], sizes = [16, 64], strides = [1, 1]} : vector<16x78xf32> to vector<16x64xf32>
    %c35_206 = arith.constant 35 : index
    %c0_207 = arith.constant 0 : index
    %c0_208 = arith.constant 0 : index
    %422 = vector.load %arg4[%c35_206, %c0_207, %c0_208] : memref<45x16x64xf32, #tpu.memory_space<vmem>>, vector<1x16x64xf32>
    %423 = vector.shape_cast %422 : vector<1x16x64xf32> to vector<16x64xf32>
    %424 = arith.mulf %421, %423 : vector<16x64xf32>
    %425 = arith.addf %420, %424 : vector<16x64xf32>
    %426 = vector.extract_strided_slice %395 {offsets = [0, 6], sizes = [16, 64], strides = [1, 1]} : vector<16x78xf32> to vector<16x64xf32>
    %c36_209 = arith.constant 36 : index
    %c0_210 = arith.constant 0 : index
    %c0_211 = arith.constant 0 : index
    %427 = vector.load %arg4[%c36_209, %c0_210, %c0_211] : memref<45x16x64xf32, #tpu.memory_space<vmem>>, vector<1x16x64xf32>
    %428 = vector.shape_cast %427 : vector<1x16x64xf32> to vector<16x64xf32>
    %429 = arith.mulf %426, %428 : vector<16x64xf32>
    %430 = arith.addf %425, %429 : vector<16x64xf32>
    %431 = vector.extract_strided_slice %395 {offsets = [0, 7], sizes = [16, 64], strides = [1, 1]} : vector<16x78xf32> to vector<16x64xf32>
    %c37_212 = arith.constant 37 : index
    %c0_213 = arith.constant 0 : index
    %c0_214 = arith.constant 0 : index
    %432 = vector.load %arg4[%c37_212, %c0_213, %c0_214] : memref<45x16x64xf32, #tpu.memory_space<vmem>>, vector<1x16x64xf32>
    %433 = vector.shape_cast %432 : vector<1x16x64xf32> to vector<16x64xf32>
    %434 = arith.mulf %431, %433 : vector<16x64xf32>
    %435 = arith.addf %430, %434 : vector<16x64xf32>
    %436 = vector.extract_strided_slice %395 {offsets = [0, 8], sizes = [16, 64], strides = [1, 1]} : vector<16x78xf32> to vector<16x64xf32>
    %c38_215 = arith.constant 38 : index
    %c0_216 = arith.constant 0 : index
    %c0_217 = arith.constant 0 : index
    %437 = vector.load %arg4[%c38_215, %c0_216, %c0_217] : memref<45x16x64xf32, #tpu.memory_space<vmem>>, vector<1x16x64xf32>
    %438 = vector.shape_cast %437 : vector<1x16x64xf32> to vector<16x64xf32>
    %439 = arith.mulf %436, %438 : vector<16x64xf32>
    %440 = arith.addf %435, %439 : vector<16x64xf32>
    %441 = vector.extract_strided_slice %395 {offsets = [0, 9], sizes = [16, 64], strides = [1, 1]} : vector<16x78xf32> to vector<16x64xf32>
    %c39_218 = arith.constant 39 : index
    %c0_219 = arith.constant 0 : index
    %c0_220 = arith.constant 0 : index
    %442 = vector.load %arg4[%c39_218, %c0_219, %c0_220] : memref<45x16x64xf32, #tpu.memory_space<vmem>>, vector<1x16x64xf32>
    %443 = vector.shape_cast %442 : vector<1x16x64xf32> to vector<16x64xf32>
    %444 = arith.mulf %441, %443 : vector<16x64xf32>
    %445 = arith.addf %440, %444 : vector<16x64xf32>
    %446 = vector.extract_strided_slice %395 {offsets = [0, 10], sizes = [16, 64], strides = [1, 1]} : vector<16x78xf32> to vector<16x64xf32>
    %c40_221 = arith.constant 40 : index
    %c0_222 = arith.constant 0 : index
    %c0_223 = arith.constant 0 : index
    %447 = vector.load %arg4[%c40_221, %c0_222, %c0_223] : memref<45x16x64xf32, #tpu.memory_space<vmem>>, vector<1x16x64xf32>
    %448 = vector.shape_cast %447 : vector<1x16x64xf32> to vector<16x64xf32>
    %449 = arith.mulf %446, %448 : vector<16x64xf32>
    %450 = arith.addf %445, %449 : vector<16x64xf32>
    %451 = vector.extract_strided_slice %395 {offsets = [0, 11], sizes = [16, 64], strides = [1, 1]} : vector<16x78xf32> to vector<16x64xf32>
    %c41_224 = arith.constant 41 : index
    %c0_225 = arith.constant 0 : index
    %c0_226 = arith.constant 0 : index
    %452 = vector.load %arg4[%c41_224, %c0_225, %c0_226] : memref<45x16x64xf32, #tpu.memory_space<vmem>>, vector<1x16x64xf32>
    %453 = vector.shape_cast %452 : vector<1x16x64xf32> to vector<16x64xf32>
    %454 = arith.mulf %451, %453 : vector<16x64xf32>
    %455 = arith.addf %450, %454 : vector<16x64xf32>
    %456 = vector.extract_strided_slice %395 {offsets = [0, 12], sizes = [16, 64], strides = [1, 1]} : vector<16x78xf32> to vector<16x64xf32>
    %c42_227 = arith.constant 42 : index
    %c0_228 = arith.constant 0 : index
    %c0_229 = arith.constant 0 : index
    %457 = vector.load %arg4[%c42_227, %c0_228, %c0_229] : memref<45x16x64xf32, #tpu.memory_space<vmem>>, vector<1x16x64xf32>
    %458 = vector.shape_cast %457 : vector<1x16x64xf32> to vector<16x64xf32>
    %459 = arith.mulf %456, %458 : vector<16x64xf32>
    %460 = arith.addf %455, %459 : vector<16x64xf32>
    %461 = vector.extract_strided_slice %395 {offsets = [0, 13], sizes = [16, 64], strides = [1, 1]} : vector<16x78xf32> to vector<16x64xf32>
    %c43_230 = arith.constant 43 : index
    %c0_231 = arith.constant 0 : index
    %c0_232 = arith.constant 0 : index
    %462 = vector.load %arg4[%c43_230, %c0_231, %c0_232] : memref<45x16x64xf32, #tpu.memory_space<vmem>>, vector<1x16x64xf32>
    %463 = vector.shape_cast %462 : vector<1x16x64xf32> to vector<16x64xf32>
    %464 = arith.mulf %461, %463 : vector<16x64xf32>
    %465 = arith.addf %460, %464 : vector<16x64xf32>
    %466 = vector.extract_strided_slice %395 {offsets = [0, 14], sizes = [16, 64], strides = [1, 1]} : vector<16x78xf32> to vector<16x64xf32>
    %c44_233 = arith.constant 44 : index
    %c0_234 = arith.constant 0 : index
    %c0_235 = arith.constant 0 : index
    %467 = vector.load %arg4[%c44_233, %c0_234, %c0_235] : memref<45x16x64xf32, #tpu.memory_space<vmem>>, vector<1x16x64xf32>
    %468 = vector.shape_cast %467 : vector<1x16x64xf32> to vector<16x64xf32>
    %469 = arith.mulf %466, %468 : vector<16x64xf32>
    %470 = arith.addf %465, %469 : vector<16x64xf32>
    %cst_236 = arith.constant 0.000000e+00 : f32
    %471 = vector.broadcast %cst_236 : f32 to vector<16x64xf32>
    %472 = arith.maximumf %470, %471 : vector<16x64xf32>
    %c0_237 = arith.constant 0 : index
    %c0_238 = arith.constant 0 : index
    %c0_239 = arith.constant 0 : index
    %473 = vector.load %arg6[%c0_237, %c0_238, %c0_239] : memref<1x16x64xf32, #tpu.memory_space<vmem>>, vector<1x16x64xf32>
    %474 = vector.shape_cast %473 : vector<1x16x64xf32> to vector<16x64xf32>
    %475 = vector.shape_cast %472 : vector<16x64xf32> to vector<1x16x64xf32>
    tpu.vector_store %arg6[%c0_237, %c0_238, %c0_239], %475 {strides = array<i32>} : memref<1x16x64xf32, #tpu.memory_space<vmem>>, vector<1x16x64xf32>,
    return
  }
  func.func @transform_0(%arg0: i32) -> (i32, i32, i32) {
    %c0_i32 = arith.constant 0 : i32
    %c0_i32_0 = arith.constant 0 : i32
    %c0_i32_1 = arith.constant 0 : i32
    return %arg0, %c0_i32, %c0_i32_0 : i32, i32, i32
  }
  func.func @transform_1(%arg0: i32) -> (i32, i32, i32) {
    %c0_i32 = arith.constant 0 : i32
    %c0_i32_0 = arith.constant 0 : i32
    %c0_i32_1 = arith.constant 0 : i32
    %c0_i32_2 = arith.constant 0 : i32
    return %c0_i32, %c0_i32_0, %c0_i32_1 : i32, i32, i32
  }
  func.func @transform_2(%arg0: i32) -> (i32, i32) {
    %c0_i32 = arith.constant 0 : i32
    %c0_i32_0 = arith.constant 0 : i32
    %c0_i32_1 = arith.constant 0 : i32
    return %c0_i32, %c0_i32_0 : i32, i32
  }
  func.func @transform_3(%arg0: i32) -> (i32, i32, i32) {
    %c0_i32 = arith.constant 0 : i32
    %c0_i32_0 = arith.constant 0 : i32
    %c0_i32_1 = arith.constant 0 : i32
    %c0_i32_2 = arith.constant 0 : i32
    return %c0_i32, %c0_i32_0, %c0_i32_1 : i32, i32, i32
  }
  func.func @transform_4(%arg0: i32) -> (i32, i32) {
    %c0_i32 = arith.constant 0 : i32
    %c0_i32_0 = arith.constant 0 : i32
    %c0_i32_1 = arith.constant 0 : i32
    return %c0_i32, %c0_i32_0 : i32, i32
  }
  func.func @transform_5(%arg0: i32) -> (i32, i32, i32) {
    %c0_i32 = arith.constant 0 : i32
    %c0_i32_0 = arith.constant 0 : i32
    %c0_i32_1 = arith.constant 0 : i32
    return %arg0, %c0_i32, %c0_i32_0 : i32, i32, i32
  }
}

</mosaic_0001>

<llo_original>
// kernel: tile.33
$region0: #{tile.33}
  #allocation0 [shape = 's32[1]{0}', space=sflag, size = 0x4, scoped, tag = 'scoped memory for tile.33']
  %s0 = inlined_call_operand.vmem [shape: f32[4], index: 0, kind: input, shape index: {}]
  %s1 = inlined_call_operand.vmem [shape: f32[16,4], index: 1, kind: output, shape index: {}]
  // Predicated region
  $region2: #{tile.33} parent=0 // pred_check
    _
  $region3: #{tile.33} parent=0 // pred_check_branch
    %3 = sbr.rel (0) target = $region5
  $region4: #{tile.33} parent=0 // pred_region
    _
  $region5: #{tile.33} parent=0 // pred_fallthru
    _
  %v4 = vld [vmem:[%s0] ss:$0 sm:$0xff]
  %5 = vst [vmem:[%s1] sm:$0xff] %v4
  %s6 = scalar_lea.vmem %s1, 8
  %7 = vst [vmem:[%s6] sm:$0xff] %v4

// kernel: residual_block.1
$region0: #{residual_block.1}
  #allocation0 [shape = 'u32[]', space=smem, size = 0x4, offset = 0x4, fixed_abs, tag = 'smem constant byte address 0x4 - core index']
  #allocation1 [shape = 'u32[72,128]{1,0:T(1,128)}', space=vmem, size = 0x9000, scoped, tag = 'internal scratch']
  %s0 = inlined_call_operand.vmem [shape: f32[2,16,64], index: 0, kind: input, shape index: {}]
  %s1 = inlined_call_operand.vmem [shape: f32[45,16,64], index: 1, kind: input, shape index: {}]
  %s2 = inlined_call_operand.vmem [shape: f32[16,64], index: 2, kind: input, shape index: {}]
  %s3 = inlined_call_operand.vmem [shape: f32[45,16,64], index: 3, kind: input, shape index: {}]
  %s4 = inlined_call_operand.vmem [shape: f32[16,64], index: 4, kind: input, shape index: {}]
  %s5 = inlined_call_operand.vmem [shape: f32[2,16,64], index: 5, kind: output, shape index: {}]
  %s6 = sld [smem:[#allocation0]]
  $region53: #{residual_block.1} parent=0
    _
  %s8 = ssub.s32 1, %s6
  %s9 = scalar_select 0, %s8, %s6
  loop: start=0, step=1, limit=4
  $region2: #{residual_block.1} parent=0 // loop_pre_header
    _
  $region3: #{residual_block.1} parent=0 // loop_header
    %s11 = sphi 0, %s15
    %p12 = scmp.ge.s32.totalorder %s11, 4
    %s21 = sphi 0, %s23
    %s24 = sphi 0, %s21
    %s25 = sphi 0, %s24
    %s41 = sphi 0, %s25
    %s45 = sphi 0, %s45
    %s47 = sphi 0, %s45
    %s48 = sphi 0, %s47
    %s62 = sphi 0, %s48
    %s66 = sphi 0, %s66
    %s68 = sphi 0, %s66
    %s69 = sphi 0, %s68
    %s83 = sphi 0, %s69
    %s87 = sphi 0, %s87
    %s89 = sphi 0, %s87
    %s90 = sphi 0, %s89
    %s104 = sphi 0, %s90
    %s108 = sphi 0, %s108
    %s110 = sphi 0, %s108
    %s111 = sphi 0, %s110
    %s125 = sphi 0, %s111
    %s131 = sphi 0, %s133
    %s134 = sphi 0, %s131
    %s135 = sphi 0, %s134
    %s151 = sphi 0, %s135
  $region4: #{residual_block.1} parent=0 // loop_header_branch
    %14 = sbr.rel (%p12) target = $region8
  $region5: #{residual_block.1} parent=0 // loop_body
    %s16 = ssub.s32 %s11, 1
    %s17 = ssub.s32 %s11, 2
    %s18 = sadd.s32 %s11, 1
    %s19 = ssub.s32 %s11, %s18
    %p20 = scmp.eq.s32.totalorder %s19, 0
    %s22 = sadd.s32 %s21, 1
    %s23 = scalar_select %p20, %s21, %s22
    %p26 = pneg %p20
    %p27 = scmp.eq.s32.totalorder %s11, 1
    %p28 = por %p26, %p27
    %p29 = scmp.ne.s32.totalorder %s21, %s24
    %p30 = scmp.eq.s32.totalorder %s11, 0
    %p31 = por %p29, %p30
    %p32 = scmp.ne.s32.totalorder %s21, %s24
    %p33 = scmp.eq.s32.totalorder %s16, 1
    %p34 = por %p32, %p33
    %p35 = scmp.ne.s32.totalorder %s24, %s25
    %p36 = scmp.eq.s32.totalorder %s16, 0
    %p37 = por %p35, %p36
    %p38 = scmp.ne.s32.totalorder %s24, %s25
    %p39 = scmp.eq.s32.totalorder %s17, 1
    %p40 = por %p38, %p39
    %p42 = scmp.ne.s32.totalorder %s25, %s41
    %p43 = scmp.eq.s32.totalorder %s17, 0
    %p44 = por %p42, %p43
    %s46 = sadd.s32 %s45, 1
    %p49 = scmp.eq.s32.totalorder %s11, 1
    %p50 = scmp.ne.s32.totalorder %s45, %s47
    %p51 = scmp.eq.s32.totalorder %s11, 0
    %p52 = por %p50, %p51
    %p53 = scmp.ne.s32.totalorder %s45, %s47
    %p54 = scmp.eq.s32.totalorder %s16, 1
    %p55 = por %p53, %p54
    %p56 = scmp.ne.s32.totalorder %s47, %s48
    %p57 = scmp.eq.s32.totalorder %s16, 0
    %p58 = por %p56, %p57
    %p59 = scmp.ne.s32.totalorder %s47, %s48
    %p60 = scmp.eq.s32.totalorder %s17, 1
    %p61 = por %p59, %p60
    %p63 = scmp.ne.s32.totalorder %s48, %s62
    %p64 = scmp.eq.s32.totalorder %s17, 0
    %p65 = por %p63, %p64
    %s67 = sadd.s32 %s66, 1
    %p70 = scmp.eq.s32.totalorder %s11, 1
    %p71 = scmp.ne.s32.totalorder %s66, %s68
    %p72 = scmp.eq.s32.totalorder %s11, 0
    %p73 = por %p71, %p72
    %p74 = scmp.ne.s32.totalorder %s66, %s68
    %p75 = scmp.eq.s32.totalorder %s16, 1
    %p76 = por %p74, %p75
    %p77 = scmp.ne.s32.totalorder %s68, %s69
    %p78 = scmp.eq.s32.totalorder %s16, 0
    %p79 = por %p77, %p78
    %p80 = scmp.ne.s32.totalorder %s68, %s69
    %p81 = scmp.eq.s32.totalorder %s17, 1
    %p82 = por %p80, %p81
    %p84 = scmp.ne.s32.totalorder %s69, %s83
    %p85 = scmp.eq.s32.totalorder %s17, 0
    %p86 = por %p84, %p85
    %s88 = sadd.s32 %s87, 1
    %p91 = scmp.eq.s32.totalorder %s11, 1
    %p92 = scmp.ne.s32.totalorder %s87, %s89
    %p93 = scmp.eq.s32.totalorder %s11, 0
    %p94 = por %p92, %p93
    %p95 = scmp.ne.s32.totalorder %s87, %s89
    %p96 = scmp.eq.s32.totalorder %s16, 1
    %p97 = por %p95, %p96
    %p98 = scmp.ne.s32.totalorder %s89, %s90
    %p99 = scmp.eq.s32.totalorder %s16, 0
    %p100 = por %p98, %p99
    %p101 = scmp.ne.s32.totalorder %s89, %s90
    %p102 = scmp.eq.s32.totalorder %s17, 1
    %p103 = por %p101, %p102
    %p105 = scmp.ne.s32.totalorder %s90, %s104
    %p106 = scmp.eq.s32.totalorder %s17, 0
    %p107 = por %p105, %p106
    %s109 = sadd.s32 %s108, 1
    %p112 = scmp.eq.s32.totalorder %s11, 1
    %p113 = scmp.ne.s32.totalorder %s108, %s110
    %p114 = scmp.eq.s32.totalorder %s11, 0
    %p115 = por %p113, %p114
    %p116 = scmp.ne.s32.totalorder %s108, %s110
    %p117 = scmp.eq.s32.totalorder %s16, 1
    %p118 = por %p116, %p117
    %p119 = scmp.ne.s32.totalorder %s110, %s111
    %p120 = scmp.eq.s32.totalorder %s16, 0
    %p121 = por %p119, %p120
    %p122 = scmp.ne.s32.totalorder %s110, %s111
    %p123 = scmp.eq.s32.totalorder %s17, 1
    %p124 = por %p122, %p123
    %p126 = scmp.ne.s32.totalorder %s111, %s125
    %p127 = scmp.eq.s32.totalorder %s17, 0
    %p128 = por %p126, %p127
    %s129 = ssub.s32 %s11, %s18
    %p130 = scmp.eq.s32.totalorder %s129, 0
    %s132 = sadd.s32 %s131, 1
    %s133 = scalar_select %p130, %s131, %s132
    %p136 = pneg %p130
    %p137 = scmp.eq.s32.totalorder %s11, 1
    %p138 = por %p136, %p137
    %p139 = scmp.ne.s32.totalorder %s131, %s134
    %p140 = scmp.eq.s32.totalorder %s11, 0
    %p141 = por %p139, %p140
    %p142 = scmp.ne.s32.totalorder %s131, %s134
    %p143 = scmp.eq.s32.totalorder %s16, 1
    %p144 = por %p142, %p143
    %p145 = scmp.ne.s32.totalorder %s134, %s135
    %p146 = scmp.eq.s32.totalorder %s16, 0
    %p147 = por %p145, %p146
    %p148 = scmp.ne.s32.totalorder %s134, %s135
    %p149 = scmp.eq.s32.totalorder %s17, 1
    %p150 = por %p148, %p149
    %p152 = scmp.ne.s32.totalorder %s135, %s151
    %p153 = scmp.eq.s32.totalorder %s17, 0
    %p154 = por %p152, %p153
    %p155 = scmp.le.s32.totalorder 1, %s11
    %p156 = scmp.lt.s32.totalorder %s11, 3
    %p157 = pnand %p155, %p156
    %p158 = pneg %p157
    // Predicated region
    $region9: #{residual_block.1} parent=5 // pred_check
      _
    $region10: #{residual_block.1} parent=5 // pred_check_branch
      %160 = sbr.rel (%p157) target = $region12
    $region11: #{residual_block.1} parent=5 // pred_region
      %s161 = ssub.s32 %s11, 1
      // Predicated region
      $region13: #{residual_block.1} parent=11 // pred_check
        %p162 = pneg %p58
      $region14: #{residual_block.1} parent=11 // pred_check_branch
        %164 = sbr.rel (%p162) target = $region16
      $region15: #{residual_block.1} parent=11 // pred_region
        _
      $region16: #{residual_block.1} parent=11 // pred_fallthru
        _
      // Predicated region
      $region17: #{residual_block.1} parent=11 // pred_check
        %p165 = pneg %p79
      $region18: #{residual_block.1} parent=11 // pred_check_branch
        %167 = sbr.rel (%p165) target = $region20
      $region19: #{residual_block.1} parent=11 // pred_region
        _
      $region20: #{residual_block.1} parent=11 // pred_fallthru
        _
      // Predicated region
      $region21: #{residual_block.1} parent=11 // pred_check
        %p168 = pneg %p100
      $region22: #{residual_block.1} parent=11 // pred_check_branch
        %170 = sbr.rel (%p168) target = $region24
      $region23: #{residual_block.1} parent=11 // pred_region
        _
      $region24: #{residual_block.1} parent=11 // pred_fallthru
        _
      // Predicated region
      $region25: #{residual_block.1} parent=11 // pred_check
        %p171 = pneg %p121
      $region26: #{residual_block.1} parent=11 // pred_check_branch
        %173 = sbr.rel (%p171) target = $region28
      $region27: #{residual_block.1} parent=11 // pred_region
        _
      $region28: #{residual_block.1} parent=11 // pred_fallthru
        _
    $region12: #{residual_block.1} parent=5 // pred_fallthru
      _
    %p174 = scmp.lt.s32.totalorder %s11, 2
    // Predicated region
    $region29: #{residual_block.1} parent=5 // pred_check
      %p175 = pneg %p174
    $region30: #{residual_block.1} parent=5 // pred_check_branch
      %177 = sbr.rel (%p175) target = $region32
    $region31: #{residual_block.1} parent=5 // pred_region
      // Predicated region
      $region33: #{residual_block.1} parent=31 // pred_check
        %p178 = pneg %p31
      $region34: #{residual_block.1} parent=31 // pred_check_branch
        %180 = sbr.rel (%p178) target = $region36
      $region35: #{residual_block.1} parent=31 // pred_region
        %p181 = scmp.lt.s32.totalorder %s11, 1
        %s182 = scalar_select %p181, %s11, 1
        %s183 = smul.addr %s182, 2
        %s184 = smul.addr %s183, 8
        %s185 = scalar_lea.vmem %s0, %s184
      $region36: #{residual_block.1} parent=31 // pred_fallthru
        _
    $region32: #{residual_block.1} parent=5 // pred_fallthru
      _
    %p186 = scmp.le.s32.totalorder 1, %s11
    %p187 = scmp.lt.s32.totalorder %s11, 3
    %p188 = pnand %p186, %p187
    %p189 = pneg %p188
    // Predicated region
    $region37: #{residual_block.1} parent=5 // pred_check
      _
    $region38: #{residual_block.1} parent=5 // pred_check_branch
      %191 = sbr.rel (%p188) target = $region40
    $region39: #{residual_block.1} parent=5 // pred_region
      %s192 = ssub.s32 %s11, 1
      %p193 = scmp.lt.s32.totalorder %s16, 1
      %s194 = scalar_select %p193, %s16, 1
      %s195 = smul.addr %s194, 2
      %s196 = smul.addr %s195, 8
      %s197 = scalar_lea.vmem %s0, %s196
      %p198 = pneg %p37
      %p199 = pneg %p34
      %p200 = pneg %p58
      %p201 = pneg %p55
      %p202 = pneg %p79
      %p203 = pneg %p76
      %p204 = pneg %p100
      %p205 = pneg %p97
      %p206 = pneg %p121
      %p207 = pneg %p118
      %p208 = pneg %p147
      %p209 = pneg %p144
      %p210 = scmp.lt.s32.totalorder %s16, 1
      %s211 = scalar_select %p210, %s16, 1
      %s212 = smul.addr %s211, 2
      %s213 = smul.addr %s212, 8
      %s214 = scalar_lea.vmem %s5, %s213
      %p215 = scmp.lt.s32.totalorder %s16, 1
      %s216 = scalar_select %p215, %s16, 1
      %s217 = smul.addr %s216, 2
      %s218 = smul.addr %s217, 8
      %s219 = scalar_lea.vmem %s0, %s218
      %p220 = scmp.lt.s32.totalorder %s16, 1
      %s221 = scalar_select %p220, %s16, 1
      %s222 = smul.addr %s221, 2
      %s223 = smul.addr %s222, 8
      %s224 = scalar_lea.vmem %s5, %s223
      %v225 = vld [vmem:[%s219] sm:$0xff]
      %v226 = vld [vmem:[%s219 + $0x8] sm:$0xff]
      %v227 = vld [vmem:[%s2] sm:$0xff]
      %v228 = vld [vmem:[%s2 + $0x8] sm:$0xff]
      %231 = vrot.lane.b32.xlu0 %v225, 7
      %v232 = vpop.permute.xlu0 %231
      %233 = vrot.lane.b32.xlu0 %v226, 7
      %v234 = vpop.permute.xlu0 %233
      %vm237 = vcmask 56320
      %v238 = vsel %vm237, 0.0, %v232
      %v239 = vsel %vm237, 0.0, %v234
      %vm240 = vcmask 580608
      %v241 = vsel %vm240, %v238, 0.0
      %v242 = vsel %vm240, %v239, 0.0
      %vm245 = vcmask 1040384
      %v246 = vrot.slane %v241, 7
      %v247 = vrot.slane %v242, 7
      %v248 = vsel %vm245, %v246, %v247
      %v252 = vsel %vm245, 0.0, %v246
      %v253 = vsel %vm245, %v247, 0.0
      %v254 = vld [vmem:[%s1] sm:$0xff]
      %v255 = vld [vmem:[%s1 + $0x8] sm:$0xff]
      %v256 = vmul.f32 %v252, %v254
      %v257 = vmul.f32 %v248, %v255
      %v258 = vadd.f32 %v227, %v256
      %v259 = vadd.f32 %v228, %v257
      %s260 = scalar_lea.vmem %s1, 16
      %v261 = vld [vmem:[%s260] sm:$0xff]
      %v262 = vld [vmem:[%s260 + $0x8] sm:$0xff]
      %265 = vrot.lane.b32.xlu0 %v261, 1
      %v266 = vpop.permute.xlu0 %265
      %267 = vrot.lane.b32.xlu0 %v262, 1
      %v268 = vpop.permute.xlu0 %267
      %v271 = vmul.f32 %v252, %v266
      %v272 = vmul.f32 %v248, %v268
      %275 = vrot.lane.b32.xlu0 %v271, 127
      %v276 = vpop.permute.xlu0 %275
      %277 = vrot.lane.b32.xlu0 %v272, 127
      %v278 = vpop.permute.xlu0 %277
      %v281 = vadd.f32 %v258, %v276
      %v282 = vadd.f32 %v259, %v278
      %s283 = scalar_lea.vmem %s1, 32
      %v284 = vld [vmem:[%s283] sm:$0xff]
      %v285 = vld [vmem:[%s283 + $0x8] sm:$0xff]
      %288 = vrot.lane.b32.xlu0 %v284, 2
      %v289 = vpop.permute.xlu0 %288
      %290 = vrot.lane.b32.xlu0 %v285, 2
      %v291 = vpop.permute.xlu0 %290
      %v294 = vmul.f32 %v252, %v289
      %v295 = vmul.f32 %v248, %v291
      %298 = vrot.lane.b32.xlu0 %v294, 126
      %v299 = vpop.permute.xlu0 %298
      %300 = vrot.lane.b32.xlu0 %v295, 126
      %v301 = vpop.permute.xlu0 %300
      %v304 = vadd.f32 %v281, %v299
      %v305 = vadd.f32 %v282, %v301
      %s306 = scalar_lea.vmem %s1, 48
      %v307 = vld [vmem:[%s306] sm:$0xff]
      %v308 = vld [vmem:[%s306 + $0x8] sm:$0xff]
      %311 = vrot.lane.b32.xlu0 %v307, 3
      %v312 = vpop.permute.xlu0 %311
      %313 = vrot.lane.b32.xlu0 %v308, 3
      %v314 = vpop.permute.xlu0 %313
      %v317 = vmul.f32 %v252, %v312
      %v318 = vmul.f32 %v248, %v314
      %321 = vrot.lane.b32.xlu0 %v317, 125
      %v322 = vpop.permute.xlu0 %321
      %323 = vrot.lane.b32.xlu0 %v318, 125
      %v324 = vpop.permute.xlu0 %323
      %v327 = vadd.f32 %v304, %v322
      %v328 = vadd.f32 %v305, %v324
      %s329 = scalar_lea.vmem %s1, 64
      %v330 = vld [vmem:[%s329] sm:$0xff]
      %v331 = vld [vmem:[%s329 + $0x8] sm:$0xff]
      %334 = vrot.lane.b32.xlu0 %v330, 4
      %v335 = vpop.permute.xlu0 %334
      %336 = vrot.lane.b32.xlu0 %v331, 4
      %v337 = vpop.permute.xlu0 %336
      %v340 = vmul.f32 %v252, %v335
      %v341 = vmul.f32 %v248, %v337
      %344 = vrot.lane.b32.xlu0 %v340, 124
      %v345 = vpop.permute.xlu0 %344
      %346 = vrot.lane.b32.xlu0 %v341, 124
      %v347 = vpop.permute.xlu0 %346
      %v350 = vadd.f32 %v327, %v345
      %v351 = vadd.f32 %v328, %v347
      %s352 = scalar_lea.vmem %s1, 80
      %v353 = vld [vmem:[%s352] sm:$0xff]
      %v354 = vld [vmem:[%s352 + $0x8] sm:$0xff]
      %357 = vrot.lane.b32.xlu0 %v353, 5
      %v358 = vpop.permute.xlu0 %357
      %359 = vrot.lane.b32.xlu0 %v354, 5
      %v360 = vpop.permute.xlu0 %359
      %v363 = vmul.f32 %v252, %v358
      %v364 = vmul.f32 %v248, %v360
      %367 = vrot.lane.b32.xlu0 %v363, 123
      %v368 = vpop.permute.xlu0 %367
      %369 = vrot.lane.b32.xlu0 %v364, 123
      %v370 = vpop.permute.xlu0 %369
      %v373 = vadd.f32 %v350, %v368
      %v374 = vadd.f32 %v351, %v370
      %s375 = scalar_lea.vmem %s1, 96
      %v376 = vld [vmem:[%s375] sm:$0xff]
      %v377 = vld [vmem:[%s375 + $0x8] sm:$0xff]
      %380 = vrot.lane.b32.xlu0 %v376, 6
      %v381 = vpop.permute.xlu0 %380
      %382 = vrot.lane.b32.xlu0 %v377, 6
      %v383 = vpop.permute.xlu0 %382
      %v386 = vmul.f32 %v252, %v381
      %v387 = vmul.f32 %v248, %v383
      %390 = vrot.lane.b32.xlu0 %v386, 122
      %v391 = vpop.permute.xlu0 %390
      %392 = vrot.lane.b32.xlu0 %v387, 122
      %v393 = vpop.permute.xlu0 %392
      %v396 = vadd.f32 %v373, %v391
      %v397 = vadd.f32 %v374, %v393
      %s398 = scalar_lea.vmem %s1, 112
      %v399 = vld [vmem:[%s398] sm:$0xff]
      %v400 = vld [vmem:[%s398 + $0x8] sm:$0xff]
      %403 = vrot.lane.b32.xlu0 %v399, 7
      %v404 = vpop.permute.xlu0 %403
      %405 = vrot.lane.b32.xlu0 %v400, 7
      %v406 = vpop.permute.xlu0 %405
      %v409 = vmul.f32 %v252, %v404
      %v410 = vmul.f32 %v248, %v406
      %413 = vrot.lane.b32.xlu0 %v409, 121
      %v414 = vpop.permute.xlu0 %413
      %415 = vrot.lane.b32.xlu0 %v410, 121
      %v416 = vpop.permute.xlu0 %415
      %v419 = vadd.f32 %v396, %v414
      %v420 = vadd.f32 %v397, %v416
      %s421 = scalar_lea.vmem %s1, 128
      %v422 = vld [vmem:[%s421] sm:$0xff]
      %v423 = vld [vmem:[%s421 + $0x8] sm:$0xff]
      %426 = vrot.lane.b32.xlu0 %v422, 8
      %v427 = vpop.permute.xlu0 %426
      %428 = vrot.lane.b32.xlu0 %v423, 8
      %v429 = vpop.permute.xlu0 %428
      %v432 = vmul.f32 %v252, %v427
      %v433 = vmul.f32 %v248, %v429
      %436 = vrot.lane.b32.xlu0 %v432, 120
      %v437 = vpop.permute.xlu0 %436
      %438 = vrot.lane.b32.xlu0 %v433, 120
      %v439 = vpop.permute.xlu0 %438
      %v442 = vadd.f32 %v419, %v437
      %v443 = vadd.f32 %v420, %v439
      %s444 = scalar_lea.vmem %s1, 144
      %v445 = vld [vmem:[%s444] sm:$0xff]
      %v446 = vld [vmem:[%s444 + $0x8] sm:$0xff]
      %449 = vrot.lane.b32.xlu0 %v445, 9
      %v450 = vpop.permute.xlu0 %449
      %451 = vrot.lane.b32.xlu0 %v446, 9
      %v452 = vpop.permute.xlu0 %451
      %v455 = vmul.f32 %v252, %v450
      %v456 = vmul.f32 %v248, %v452
      %459 = vrot.lane.b32.xlu0 %v455, 119
      %v460 = vpop.permute.xlu0 %459
      %461 = vrot.lane.b32.xlu0 %v456, 119
      %v462 = vpop.permute.xlu0 %461
      %v465 = vadd.f32 %v442, %v460
      %v466 = vadd.f32 %v443, %v462
      %s467 = scalar_lea.vmem %s1, 160
      %v468 = vld [vmem:[%s467] sm:$0xff]
      %v469 = vld [vmem:[%s467 + $0x8] sm:$0xff]
      %472 = vrot.lane.b32.xlu0 %v468, 10
      %v473 = vpop.permute.xlu0 %472
      %474 = vrot.lane.b32.xlu0 %v469, 10
      %v475 = vpop.permute.xlu0 %474
      %v478 = vmul.f32 %v252, %v473
      %v479 = vmul.f32 %v248, %v475
      %482 = vrot.lane.b32.xlu0 %v478, 118
      %v483 = vpop.permute.xlu0 %482
      %484 = vrot.lane.b32.xlu0 %v479, 118
      %v485 = vpop.permute.xlu0 %484
      %v488 = vadd.f32 %v465, %v483
      %v489 = vadd.f32 %v466, %v485
      %s490 = scalar_lea.vmem %s1, 176
      %v491 = vld [vmem:[%s490] sm:$0xff]
      %v492 = vld [vmem:[%s490 + $0x8] sm:$0xff]
      %495 = vrot.lane.b32.xlu0 %v491, 11
      %v496 = vpop.permute.xlu0 %495
      %497 = vrot.lane.b32.xlu0 %v492, 11
      %v498 = vpop.permute.xlu0 %497
      %v501 = vmul.f32 %v252, %v496
      %v502 = vmul.f32 %v248, %v498
      %505 = vrot.lane.b32.xlu0 %v501, 117
      %v506 = vpop.permute.xlu0 %505
      %507 = vrot.lane.b32.xlu0 %v502, 117
      %v508 = vpop.permute.xlu0 %507
      %v511 = vadd.f32 %v488, %v506
      %v512 = vadd.f32 %v489, %v508
      %s513 = scalar_lea.vmem %s1, 192
      %v514 = vld [vmem:[%s513] sm:$0xff]
      %v515 = vld [vmem:[%s513 + $0x8] sm:$0xff]
      %518 = vrot.lane.b32.xlu0 %v514, 12
      %v519 = vpop.permute.xlu0 %518
      %520 = vrot.lane.b32.xlu0 %v515, 12
      %v521 = vpop.permute.xlu0 %520
      %v524 = vmul.f32 %v252, %v519
      %v525 = vmul.f32 %v248, %v521
      %528 = vrot.lane.b32.xlu0 %v524, 116
      %v529 = vpop.permute.xlu0 %528
      %530 = vrot.lane.b32.xlu0 %v525, 116
      %v531 = vpop.permute.xlu0 %530
      %v534 = vadd.f32 %v511, %v529
      %v535 = vadd.f32 %v512, %v531
      %s536 = scalar_lea.vmem %s1, 208
      %v537 = vld [vmem:[%s536] sm:$0xff]
      %v538 = vld [vmem:[%s536 + $0x8] sm:$0xff]
      %541 = vrot.lane.b32.xlu0 %v537, 13
      %v542 = vpop.permute.xlu0 %541
      %543 = vrot.lane.b32.xlu0 %v538, 13
      %v544 = vpop.permute.xlu0 %543
      %v547 = vmul.f32 %v252, %v542
      %v548 = vmul.f32 %v248, %v544
      %551 = vrot.lane.b32.xlu0 %v547, 115
      %v552 = vpop.permute.xlu0 %551
      %553 = vrot.lane.b32.xlu0 %v548, 115
      %v554 = vpop.permute.xlu0 %553
      %v557 = vadd.f32 %v534, %v552
      %v558 = vadd.f32 %v535, %v554
      %s559 = scalar_lea.vmem %s1, 224
      %v560 = vld [vmem:[%s559] sm:$0xff]
      %v561 = vld [vmem:[%s559 + $0x8] sm:$0xff]
      %564 = vrot.lane.b32.xlu0 %v560, 14
      %v565 = vpop.permute.xlu0 %564
      %566 = vrot.lane.b32.xlu0 %v561, 14
      %v567 = vpop.permute.xlu0 %566
      %v570 = vmul.f32 %v252, %v565
      %v571 = vmul.f32 %v248, %v567
      %574 = vrot.lane.b32.xlu0 %v570, 114
      %v575 = vpop.permute.xlu0 %574
      %576 = vrot.lane.b32.xlu0 %v571, 114
      %v577 = vpop.permute.xlu0 %576
      %v580 = vadd.f32 %v557, %v575
      %v581 = vadd.f32 %v558, %v577
      %s582 = scalar_lea.vmem %s1, 240
      %v583 = vld [vmem:[%s582] sm:$0xff]
      %v584 = vld [vmem:[%s582 + $0x8] sm:$0xff]
      %v587 = vrot.slane %v583, 7
      %v588 = vrot.slane %v584, 7
      %v589 = vsel %vm245, %v587, %v588
      %v593 = vmul.f32 %v252, %v587
      %v594 = vmul.f32 %v248, %v589
      %v595 = vmul.f32 %v253, %v588
      %vm599 = vcmask 1046528
      %v600 = vrot.slane %v593, 1
      %v601 = vrot.slane %v594, 1
      %v602 = vsel %vm599, %v600, %v601
      %v603 = vrot.slane %v595, 1
      %v604 = vsel %vm599, %v601, %v603
      %v607 = vadd.f32 %v580, %v602
      %v608 = vadd.f32 %v581, %v604
      %s609 = scalar_lea.vmem %s1, 256
      %v610 = vld [vmem:[%s609] sm:$0xff]
      %v611 = vld [vmem:[%s609 + $0x8] sm:$0xff]
      %v614 = vrot.slane %v610, 7
      %v615 = vrot.slane %v611, 7
      %v616 = vsel %vm245, %v614, %v615
      %617 = vrot.lane.b32.xlu0 %v614, 1
      %v618 = vpop.permute.xlu0 %617
      %619 = vrot.lane.b32.xlu0 %v616, 1
      %v620 = vpop.permute.xlu0 %619
      %621 = vrot.lane.b32.xlu0 %v615, 1
      %v622 = vpop.permute.xlu0 %621
      %v626 = vmul.f32 %v252, %v618
      %v627 = vmul.f32 %v248, %v620
      %v628 = vmul.f32 %v253, %v622
      %v632 = vrot.slane %v626, 1
      %v633 = vrot.slane %v627, 1
      %v634 = vsel %vm599, %v632, %v633
      %v635 = vrot.slane %v628, 1
      %v636 = vsel %vm599, %v633, %v635
      %637 = vrot.lane.b32.xlu0 %v634, 127
      %v638 = vpop.permute.xlu0 %637
      %639 = vrot.lane.b32.xlu0 %v636, 127
      %v640 = vpop.permute.xlu0 %639
      %v643 = vadd.f32 %v607, %v638
      %v644 = vadd.f32 %v608, %v640
      %s645 = scalar_lea.vmem %s1, 272
      %v646 = vld [vmem:[%s645] sm:$0xff]
      %v647 = vld [vmem:[%s645 + $0x8] sm:$0xff]
      %v650 = vrot.slane %v646, 7
      %v651 = vrot.slane %v647, 7
      %v652 = vsel %vm245, %v650, %v651
      %653 = vrot.lane.b32.xlu0 %v650, 2
      %v654 = vpop.permute.xlu0 %653
      %655 = vrot.lane.b32.xlu0 %v652, 2
      %v656 = vpop.permute.xlu0 %655
      %657 = vrot.lane.b32.xlu0 %v651, 2
      %v658 = vpop.permute.xlu0 %657
      %v662 = vmul.f32 %v252, %v654
      %v663 = vmul.f32 %v248, %v656
      %v664 = vmul.f32 %v253, %v658
      %v668 = vrot.slane %v662, 1
      %v669 = vrot.slane %v663, 1
      %v670 = vsel %vm599, %v668, %v669
      %v671 = vrot.slane %v664, 1
      %v672 = vsel %vm599, %v669, %v671
      %673 = vrot.lane.b32.xlu0 %v670, 126
      %v674 = vpop.permute.xlu0 %673
      %675 = vrot.lane.b32.xlu0 %v672, 126
      %v676 = vpop.permute.xlu0 %675
      %v679 = vadd.f32 %v643, %v674
      %v680 = vadd.f32 %v644, %v676
      %s681 = scalar_lea.vmem %s1, 288
      %v682 = vld [vmem:[%s681] sm:$0xff]
      %v683 = vld [vmem:[%s681 + $0x8] sm:$0xff]
      %v686 = vrot.slane %v682, 7
      %v687 = vrot.slane %v683, 7
      %v688 = vsel %vm245, %v686, %v687
      %689 = vrot.lane.b32.xlu0 %v686, 3
      %v690 = vpop.permute.xlu0 %689
      %691 = vrot.lane.b32.xlu0 %v688, 3
      %v692 = vpop.permute.xlu0 %691
      %693 = vrot.lane.b32.xlu0 %v687, 3
      %v694 = vpop.permute.xlu0 %693
      %v698 = vmul.f32 %v252, %v690
      %v699 = vmul.f32 %v248, %v692
      %v700 = vmul.f32 %v253, %v694
      %v704 = vrot.slane %v698, 1
      %v705 = vrot.slane %v699, 1
      %v706 = vsel %vm599, %v704, %v705
      %v707 = vrot.slane %v700, 1
      %v708 = vsel %vm599, %v705, %v707
      %709 = vrot.lane.b32.xlu0 %v706, 125
      %v710 = vpop.permute.xlu0 %709
      %711 = vrot.lane.b32.xlu0 %v708, 125
      %v712 = vpop.permute.xlu0 %711
      %v715 = vadd.f32 %v679, %v710
      %v716 = vadd.f32 %v680, %v712
      %s717 = scalar_lea.vmem %s1, 304
      %v718 = vld [vmem:[%s717] sm:$0xff]
      %v719 = vld [vmem:[%s717 + $0x8] sm:$0xff]
      %v722 = vrot.slane %v718, 7
      %v723 = vrot.slane %v719, 7
      %v724 = vsel %vm245, %v722, %v723
      %725 = vrot.lane.b32.xlu0 %v722, 4
      %v726 = vpop.permute.xlu0 %725
      %727 = vrot.lane.b32.xlu0 %v724, 4
      %v728 = vpop.permute.xlu0 %727
      %729 = vrot.lane.b32.xlu0 %v723, 4
      %v730 = vpop.permute.xlu0 %729
      %v734 = vmul.f32 %v252, %v726
      %v735 = vmul.f32 %v248, %v728
      %v736 = vmul.f32 %v253, %v730
      %v740 = vrot.slane %v734, 1
      %v741 = vrot.slane %v735, 1
      %v742 = vsel %vm599, %v740, %v741
      %v743 = vrot.slane %v736, 1
      %v744 = vsel %vm599, %v741, %v743
      %745 = vrot.lane.b32.xlu0 %v742, 124
      %v746 = vpop.permute.xlu0 %745
      %747 = vrot.lane.b32.xlu0 %v744, 124
      %v748 = vpop.permute.xlu0 %747
      %v751 = vadd.f32 %v715, %v746
      %v752 = vadd.f32 %v716, %v748
      %s753 = scalar_lea.vmem %s1, 320
      %v754 = vld [vmem:[%s753] sm:$0xff]
      %v755 = vld [vmem:[%s753 + $0x8] sm:$0xff]
      %v758 = vrot.slane %v754, 7
      %v759 = vrot.slane %v755, 7
      %v760 = vsel %vm245, %v758, %v759
      %761 = vrot.lane.b32.xlu0 %v758, 5
      %v762 = vpop.permute.xlu0 %761
      %763 = vrot.lane.b32.xlu0 %v760, 5
      %v764 = vpop.permute.xlu0 %763
      %765 = vrot.lane.b32.xlu0 %v759, 5
      %v766 = vpop.permute.xlu0 %765
      %v770 = vmul.f32 %v252, %v762
      %v771 = vmul.f32 %v248, %v764
      %v772 = vmul.f32 %v253, %v766
      %v776 = vrot.slane %v770, 1
      %v777 = vrot.slane %v771, 1
      %v778 = vsel %vm599, %v776, %v777
      %v779 = vrot.slane %v772, 1
      %v780 = vsel %vm599, %v777, %v779
      %781 = vrot.lane.b32.xlu0 %v778, 123
      %v782 = vpop.permute.xlu0 %781
      %783 = vrot.lane.b32.xlu0 %v780, 123
      %v784 = vpop.permute.xlu0 %783
      %v787 = vadd.f32 %v751, %v782
      %v788 = vadd.f32 %v752, %v784
      %s789 = scalar_lea.vmem %s1, 336
      %v790 = vld [vmem:[%s789] sm:$0xff]
      %v791 = vld [vmem:[%s789 + $0x8] sm:$0xff]
      %v794 = vrot.slane %v790, 7
      %v795 = vrot.slane %v791, 7
      %v796 = vsel %vm245, %v794, %v795
      %797 = vrot.lane.b32.xlu0 %v794, 6
      %v798 = vpop.permute.xlu0 %797
      %799 = vrot.lane.b32.xlu0 %v796, 6
      %v800 = vpop.permute.xlu0 %799
      %801 = vrot.lane.b32.xlu0 %v795, 6
      %v802 = vpop.permute.xlu0 %801
      %v806 = vmul.f32 %v252, %v798
      %v807 = vmul.f32 %v248, %v800
      %v808 = vmul.f32 %v253, %v802
      %v812 = vrot.slane %v806, 1
      %v813 = vrot.slane %v807, 1
      %v814 = vsel %vm599, %v812, %v813
      %v815 = vrot.slane %v808, 1
      %v816 = vsel %vm599, %v813, %v815
      %817 = vrot.lane.b32.xlu0 %v814, 122
      %v818 = vpop.permute.xlu0 %817
      %819 = vrot.lane.b32.xlu0 %v816, 122
      %v820 = vpop.permute.xlu0 %819
      %v823 = vadd.f32 %v787, %v818
      %v824 = vadd.f32 %v788, %v820
      %s825 = scalar_lea.vmem %s1, 352
      %v826 = vld [vmem:[%s825] sm:$0xff]
      %v827 = vld [vmem:[%s825 + $0x8] sm:$0xff]
      %v830 = vrot.slane %v826, 7
      %v831 = vrot.slane %v827, 7
      %v832 = vsel %vm245, %v830, %v831
      %833 = vrot.lane.b32.xlu0 %v830, 7
      %v834 = vpop.permute.xlu0 %833
      %835 = vrot.lane.b32.xlu0 %v832, 7
      %v836 = vpop.permute.xlu0 %835
      %837 = vrot.lane.b32.xlu0 %v831, 7
      %v838 = vpop.permute.xlu0 %837
      %v842 = vmul.f32 %v252, %v834
      %v843 = vmul.f32 %v248, %v836
      %v844 = vmul.f32 %v253, %v838
      %v848 = vrot.slane %v842, 1
      %v849 = vrot.slane %v843, 1
      %v850 = vsel %vm599, %v848, %v849
      %v851 = vrot.slane %v844, 1
      %v852 = vsel %vm599, %v849, %v851
      %853 = vrot.lane.b32.xlu0 %v850, 121
      %v854 = vpop.permute.xlu0 %853
      %855 = vrot.lane.b32.xlu0 %v852, 121
      %v856 = vpop.permute.xlu0 %855
      %v859 = vadd.f32 %v823, %v854
      %v860 = vadd.f32 %v824, %v856
      %s861 = scalar_lea.vmem %s1, 368
      %v862 = vld [vmem:[%s861] sm:$0xff]
      %v863 = vld [vmem:[%s861 + $0x8] sm:$0xff]
      %v866 = vrot.slane %v862, 7
      %v867 = vrot.slane %v863, 7
      %v868 = vsel %vm245, %v866, %v867
      %869 = vrot.lane.b32.xlu0 %v866, 8
      %v870 = vpop.permute.xlu0 %869
      %871 = vrot.lane.b32.xlu0 %v868, 8
      %v872 = vpop.permute.xlu0 %871
      %873 = vrot.lane.b32.xlu0 %v867, 8
      %v874 = vpop.permute.xlu0 %873
      %v878 = vmul.f32 %v252, %v870
      %v879 = vmul.f32 %v248, %v872
      %v880 = vmul.f32 %v253, %v874
      %v884 = vrot.slane %v878, 1
      %v885 = vrot.slane %v879, 1
      %v886 = vsel %vm599, %v884, %v885
      %v887 = vrot.slane %v880, 1
      %v888 = vsel %vm599, %v885, %v887
      %889 = vrot.lane.b32.xlu0 %v886, 120
      %v890 = vpop.permute.xlu0 %889
      %891 = vrot.lane.b32.xlu0 %v888, 120
      %v892 = vpop.permute.xlu0 %891
      %v895 = vadd.f32 %v859, %v890
      %v896 = vadd.f32 %v860, %v892
      %s897 = scalar_lea.vmem %s1, 384
      %v898 = vld [vmem:[%s897] sm:$0xff]
      %v899 = vld [vmem:[%s897 + $0x8] sm:$0xff]
      %v902 = vrot.slane %v898, 7
      %v903 = vrot.slane %v899, 7
      %v904 = vsel %vm245, %v902, %v903
      %905 = vrot.lane.b32.xlu0 %v902, 9
      %v906 = vpop.permute.xlu0 %905
      %907 = vrot.lane.b32.xlu0 %v904, 9
      %v908 = vpop.permute.xlu0 %907
      %909 = vrot.lane.b32.xlu0 %v903, 9
      %v910 = vpop.permute.xlu0 %909
      %v914 = vmul.f32 %v252, %v906
      %v915 = vmul.f32 %v248, %v908
      %v916 = vmul.f32 %v253, %v910
      %v920 = vrot.slane %v914, 1
      %v921 = vrot.slane %v915, 1
      %v922 = vsel %vm599, %v920, %v921
      %v923 = vrot.slane %v916, 1
      %v924 = vsel %vm599, %v921, %v923
      %925 = vrot.lane.b32.xlu0 %v922, 119
      %v926 = vpop.permute.xlu0 %925
      %927 = vrot.lane.b32.xlu0 %v924, 119
      %v928 = vpop.permute.xlu0 %927
      %v931 = vadd.f32 %v895, %v926
      %v932 = vadd.f32 %v896, %v928
      %s933 = scalar_lea.vmem %s1, 400
      %v934 = vld [vmem:[%s933] sm:$0xff]
      %v935 = vld [vmem:[%s933 + $0x8] sm:$0xff]
      %v938 = vrot.slane %v934, 7
      %v939 = vrot.slane %v935, 7
      %v940 = vsel %vm245, %v938, %v939
      %941 = vrot.lane.b32.xlu0 %v938, 10
      %v942 = vpop.permute.xlu0 %941
      %943 = vrot.lane.b32.xlu0 %v940, 10
      %v944 = vpop.permute.xlu0 %943
      %945 = vrot.lane.b32.xlu0 %v939, 10
      %v946 = vpop.permute.xlu0 %945
      %v950 = vmul.f32 %v252, %v942
      %v951 = vmul.f32 %v248, %v944
      %v952 = vmul.f32 %v253, %v946
      %v956 = vrot.slane %v950, 1
      %v957 = vrot.slane %v951, 1
      %v958 = vsel %vm599, %v956, %v957
      %v959 = vrot.slane %v952, 1
      %v960 = vsel %vm599, %v957, %v959
      %961 = vrot.lane.b32.xlu0 %v958, 118
      %v962 = vpop.permute.xlu0 %961
      %963 = vrot.lane.b32.xlu0 %v960, 118
      %v964 = vpop.permute.xlu0 %963
      %v967 = vadd.f32 %v931, %v962
      %v968 = vadd.f32 %v932, %v964
      %s969 = scalar_lea.vmem %s1, 416
      %v970 = vld [vmem:[%s969] sm:$0xff]
      %v971 = vld [vmem:[%s969 + $0x8] sm:$0xff]
      %v974 = vrot.slane %v970, 7
      %v975 = vrot.slane %v971, 7
      %v976 = vsel %vm245, %v974, %v975
      %977 = vrot.lane.b32.xlu0 %v974, 11
      %v978 = vpop.permute.xlu0 %977
      %979 = vrot.lane.b32.xlu0 %v976, 11
      %v980 = vpop.permute.xlu0 %979
      %981 = vrot.lane.b32.xlu0 %v975, 11
      %v982 = vpop.permute.xlu0 %981
      %v986 = vmul.f32 %v252, %v978
      %v987 = vmul.f32 %v248, %v980
      %v988 = vmul.f32 %v253, %v982
      %v992 = vrot.slane %v986, 1
      %v993 = vrot.slane %v987, 1
      %v994 = vsel %vm599, %v992, %v993
      %v995 = vrot.slane %v988, 1
      %v996 = vsel %vm599, %v993, %v995
      %997 = vrot.lane.b32.xlu0 %v994, 117
      %v998 = vpop.permute.xlu0 %997
      %999 = vrot.lane.b32.xlu0 %v996, 117
      %v1000 = vpop.permute.xlu0 %999
      %v1003 = vadd.f32 %v967, %v998
      %v1004 = vadd.f32 %v968, %v1000
      %s1005 = scalar_lea.vmem %s1, 432
      %v1006 = vld [vmem:[%s1005] sm:$0xff]
      %v1007 = vld [vmem:[%s1005 + $0x8] sm:$0xff]
      %v1010 = vrot.slane %v1006, 7
      %v1011 = vrot.slane %v1007, 7
      %v1012 = vsel %vm245, %v1010, %v1011
      %1013 = vrot.lane.b32.xlu0 %v1010, 12
      %v1014 = vpop.permute.xlu0 %1013
      %1015 = vrot.lane.b32.xlu0 %v1012, 12
      %v1016 = vpop.permute.xlu0 %1015
      %1017 = vrot.lane.b32.xlu0 %v1011, 12
      %v1018 = vpop.permute.xlu0 %1017
      %v1022 = vmul.f32 %v252, %v1014
      %v1023 = vmul.f32 %v248, %v1016
      %v1024 = vmul.f32 %v253, %v1018
      %v1028 = vrot.slane %v1022, 1
      %v1029 = vrot.slane %v1023, 1
      %v1030 = vsel %vm599, %v1028, %v1029
      %v1031 = vrot.slane %v1024, 1
      %v1032 = vsel %vm599, %v1029, %v1031
      %1033 = vrot.lane.b32.xlu0 %v1030, 116
      %v1034 = vpop.permute.xlu0 %1033
      %1035 = vrot.lane.b32.xlu0 %v1032, 116
      %v1036 = vpop.permute.xlu0 %1035
      %v1039 = vadd.f32 %v1003, %v1034
      %v1040 = vadd.f32 %v1004, %v1036
      %s1041 = scalar_lea.vmem %s1, 448
      %v1042 = vld [vmem:[%s1041] sm:$0xff]
      %v1043 = vld [vmem:[%s1041 + $0x8] sm:$0xff]
      %v1046 = vrot.slane %v1042, 7
      %v1047 = vrot.slane %v1043, 7
      %v1048 = vsel %vm245, %v1046, %v1047
      %1049 = vrot.lane.b32.xlu0 %v1046, 13
      %v1050 = vpop.permute.xlu0 %1049
      %1051 = vrot.lane.b32.xlu0 %v1048, 13
      %v1052 = vpop.permute.xlu0 %1051
      %1053 = vrot.lane.b32.xlu0 %v1047, 13
      %v1054 = vpop.permute.xlu0 %1053
      %v1058 = vmul.f32 %v252, %v1050
      %v1059 = vmul.f32 %v248, %v1052
      %v1060 = vmul.f32 %v253, %v1054
      %v1064 = vrot.slane %v1058, 1
      %v1065 = vrot.slane %v1059, 1
      %v1066 = vsel %vm599, %v1064, %v1065
      %v1067 = vrot.slane %v1060, 1
      %v1068 = vsel %vm599, %v1065, %v1067
      %1069 = vrot.lane.b32.xlu0 %v1066, 115
      %v1070 = vpop.permute.xlu0 %1069
      %1071 = vrot.lane.b32.xlu0 %v1068, 115
      %v1072 = vpop.permute.xlu0 %1071
      %v1075 = vadd.f32 %v1039, %v1070
      %v1076 = vadd.f32 %v1040, %v1072
      %s1077 = scalar_lea.vmem %s1, 464
      %v1078 = vld [vmem:[%s1077] sm:$0xff]
      %v1079 = vld [vmem:[%s1077 + $0x8] sm:$0xff]
      %v1082 = vrot.slane %v1078, 7
      %v1083 = vrot.slane %v1079, 7
      %v1084 = vsel %vm245, %v1082, %v1083
      %1085 = vrot.lane.b32.xlu0 %v1082, 14
      %v1086 = vpop.permute.xlu0 %1085
      %1087 = vrot.lane.b32.xlu0 %v1084, 14
      %v1088 = vpop.permute.xlu0 %1087
      %1089 = vrot.lane.b32.xlu0 %v1083, 14
      %v1090 = vpop.permute.xlu0 %1089
      %v1094 = vmul.f32 %v252, %v1086
      %v1095 = vmul.f32 %v248, %v1088
      %v1096 = vmul.f32 %v253, %v1090
      %v1100 = vrot.slane %v1094, 1
      %v1101 = vrot.slane %v1095, 1
      %v1102 = vsel %vm599, %v1100, %v1101
      %v1103 = vrot.slane %v1096, 1
      %v1104 = vsel %vm599, %v1101, %v1103
      %1105 = vrot.lane.b32.xlu0 %v1102, 114
      %v1106 = vpop.permute.xlu0 %1105
      %1107 = vrot.lane.b32.xlu0 %v1104, 114
      %v1108 = vpop.permute.xlu0 %1107
      %v1111 = vadd.f32 %v1075, %v1106
      %v1112 = vadd.f32 %v1076, %v1108
      %s1113 = scalar_lea.vmem %s1, 480
      %v1114 = vld [vmem:[%s1113] sm:$0xff]
      %v1115 = vld [vmem:[%s1113 + $0x8] sm:$0xff]
      %vm1118 = vcmask 1041408
      %v1119 = vrot.slane %v1114, 6
      %v1120 = vrot.slane %v1115, 6
      %v1121 = vsel %vm1118, %v1119, %v1120
      %v1125 = vmul.f32 %v252, %v1119
      %v1126 = vmul.f32 %v248, %v1121
      %v1127 = vmul.f32 %v253, %v1120
      %vm1131 = vcmask 1045504
      %v1132 = vrot.slane %v1125, 2
      %v1133 = vrot.slane %v1126, 2
      %v1134 = vsel %vm1131, %v1132, %v1133
      %v1135 = vrot.slane %v1127, 2
      %v1136 = vsel %vm1131, %v1133, %v1135
      %v1139 = vadd.f32 %v1111, %v1134
      %v1140 = vadd.f32 %v1112, %v1136
      %s1141 = scalar_lea.vmem %s1, 496
      %v1142 = vld [vmem:[%s1141] sm:$0xff]
      %v1143 = vld [vmem:[%s1141 + $0x8] sm:$0xff]
      %v1146 = vrot.slane %v1142, 6
      %v1147 = vrot.slane %v1143, 6
      %v1148 = vsel %vm1118, %v1146, %v1147
      %1149 = vrot.lane.b32.xlu0 %v1146, 1
      %v1150 = vpop.permute.xlu0 %1149
      %1151 = vrot.lane.b32.xlu0 %v1148, 1
      %v1152 = vpop.permute.xlu0 %1151
      %1153 = vrot.lane.b32.xlu0 %v1147, 1
      %v1154 = vpop.permute.xlu0 %1153
      %v1158 = vmul.f32 %v252, %v1150
      %v1159 = vmul.f32 %v248, %v1152
      %v1160 = vmul.f32 %v253, %v1154
      %v1164 = vrot.slane %v1158, 2
      %v1165 = vrot.slane %v1159, 2
      %v1166 = vsel %vm1131, %v1164, %v1165
      %v1167 = vrot.slane %v1160, 2
      %v1168 = vsel %vm1131, %v1165, %v1167
      %1169 = vrot.lane.b32.xlu0 %v1166, 127
      %v1170 = vpop.permute.xlu0 %1169
      %1171 = vrot.lane.b32.xlu0 %v1168, 127
      %v1172 = vpop.permute.xlu0 %1171
      %v1175 = vadd.f32 %v1139, %v1170
      %v1176 = vadd.f32 %v1140, %v1172
      %s1177 = scalar_lea.vmem %s1, 512
      %v1178 = vld [vmem:[%s1177] sm:$0xff]
      %v1179 = vld [vmem:[%s1177 + $0x8] sm:$0xff]
      %v1182 = vrot.slane %v1178, 6
      %v1183 = vrot.slane %v1179, 6
      %v1184 = vsel %vm1118, %v1182, %v1183
      %1185 = vrot.lane.b32.xlu0 %v1182, 2
      %v1186 = vpop.permute.xlu0 %1185
      %1187 = vrot.lane.b32.xlu0 %v1184, 2
      %v1188 = vpop.permute.xlu0 %1187
      %1189 = vrot.lane.b32.xlu0 %v1183, 2
      %v1190 = vpop.permute.xlu0 %1189
      %v1194 = vmul.f32 %v252, %v1186
      %v1195 = vmul.f32 %v248, %v1188
      %v1196 = vmul.f32 %v253, %v1190
      %v1200 = vrot.slane %v1194, 2
      %v1201 = vrot.slane %v1195, 2
      %v1202 = vsel %vm1131, %v1200, %v1201
      %v1203 = vrot.slane %v1196, 2
      %v1204 = vsel %vm1131, %v1201, %v1203
      %1205 = vrot.lane.b32.xlu0 %v1202, 126
      %v1206 = vpop.permute.xlu0 %1205
      %1207 = vrot.lane.b32.xlu0 %v1204, 126
      %v1208 = vpop.permute.xlu0 %1207
      %v1211 = vadd.f32 %v1175, %v1206
      %v1212 = vadd.f32 %v1176, %v1208
      %s1213 = scalar_lea.vmem %s1, 528
      %v1214 = vld [vmem:[%s1213] sm:$0xff]
      %v1215 = vld [vmem:[%s1213 + $0x8] sm:$0xff]
      %v1218 = vrot.slane %v1214, 6
      %v1219 = vrot.slane %v1215, 6
      %v1220 = vsel %vm1118, %v1218, %v1219
      %1221 = vrot.lane.b32.xlu0 %v1218, 3
      %v1222 = vpop.permute.xlu0 %1221
      %1223 = vrot.lane.b32.xlu0 %v1220, 3
      %v1224 = vpop.permute.xlu0 %1223
      %1225 = vrot.lane.b32.xlu0 %v1219, 3
      %v1226 = vpop.permute.xlu0 %1225
      %v1230 = vmul.f32 %v252, %v1222
      %v1231 = vmul.f32 %v248, %v1224
      %v1232 = vmul.f32 %v253, %v1226
      %v1236 = vrot.slane %v1230, 2
      %v1237 = vrot.slane %v1231, 2
      %v1238 = vsel %vm1131, %v1236, %v1237
      %v1239 = vrot.slane %v1232, 2
      %v1240 = vsel %vm1131, %v1237, %v1239
      %1241 = vrot.lane.b32.xlu0 %v1238, 125
      %v1242 = vpop.permute.xlu0 %1241
      %1243 = vrot.lane.b32.xlu0 %v1240, 125
      %v1244 = vpop.permute.xlu0 %1243
      %v1247 = vadd.f32 %v1211, %v1242
      %v1248 = vadd.f32 %v1212, %v1244
      %s1249 = scalar_lea.vmem %s1, 544
      %v1250 = vld [vmem:[%s1249] sm:$0xff]
      %v1251 = vld [vmem:[%s1249 + $0x8] sm:$0xff]
      %v1254 = vrot.slane %v1250, 6
      %v1255 = vrot.slane %v1251, 6
      %v1256 = vsel %vm1118, %v1254, %v1255
      %1257 = vrot.lane.b32.xlu0 %v1254, 4
      %v1258 = vpop.permute.xlu0 %1257
      %1259 = vrot.lane.b32.xlu0 %v1256, 4
      %v1260 = vpop.permute.xlu0 %1259
      %1261 = vrot.lane.b32.xlu0 %v1255, 4
      %v1262 = vpop.permute.xlu0 %1261
      %v1266 = vmul.f32 %v252, %v1258
      %v1267 = vmul.f32 %v248, %v1260
      %v1268 = vmul.f32 %v253, %v1262
      %v1272 = vrot.slane %v1266, 2
      %v1273 = vrot.slane %v1267, 2
      %v1274 = vsel %vm1131, %v1272, %v1273
      %v1275 = vrot.slane %v1268, 2
      %v1276 = vsel %vm1131, %v1273, %v1275
      %1277 = vrot.lane.b32.xlu0 %v1274, 124
      %v1278 = vpop.permute.xlu0 %1277
      %1279 = vrot.lane.b32.xlu0 %v1276, 124
      %v1280 = vpop.permute.xlu0 %1279
      %v1283 = vadd.f32 %v1247, %v1278
      %v1284 = vadd.f32 %v1248, %v1280
      %s1285 = scalar_lea.vmem %s1, 560
      %v1286 = vld [vmem:[%s1285] sm:$0xff]
      %v1287 = vld [vmem:[%s1285 + $0x8] sm:$0xff]
      %v1290 = vrot.slane %v1286, 6
      %v1291 = vrot.slane %v1287, 6
      %v1292 = vsel %vm1118, %v1290, %v1291
      %1293 = vrot.lane.b32.xlu0 %v1290, 5
      %v1294 = vpop.permute.xlu0 %1293
      %1295 = vrot.lane.b32.xlu0 %v1292, 5
      %v1296 = vpop.permute.xlu0 %1295
      %1297 = vrot.lane.b32.xlu0 %v1291, 5
      %v1298 = vpop.permute.xlu0 %1297
      %v1302 = vmul.f32 %v252, %v1294
      %v1303 = vmul.f32 %v248, %v1296
      %v1304 = vmul.f32 %v253, %v1298
      %v1308 = vrot.slane %v1302, 2
      %v1309 = vrot.slane %v1303, 2
      %v1310 = vsel %vm1131, %v1308, %v1309
      %v1311 = vrot.slane %v1304, 2
      %v1312 = vsel %vm1131, %v1309, %v1311
      %1313 = vrot.lane.b32.xlu0 %v1310, 123
      %v1314 = vpop.permute.xlu0 %1313
      %1315 = vrot.lane.b32.xlu0 %v1312, 123
      %v1316 = vpop.permute.xlu0 %1315
      %v1319 = vadd.f32 %v1283, %v1314
      %v1320 = vadd.f32 %v1284, %v1316
      %s1321 = scalar_lea.vmem %s1, 576
      %v1322 = vld [vmem:[%s1321] sm:$0xff]
      %v1323 = vld [vmem:[%s1321 + $0x8] sm:$0xff]
      %v1326 = vrot.slane %v1322, 6
      %v1327 = vrot.slane %v1323, 6
      %v1328 = vsel %vm1118, %v1326, %v1327
      %1329 = vrot.lane.b32.xlu0 %v1326, 6
      %v1330 = vpop.permute.xlu0 %1329
      %1331 = vrot.lane.b32.xlu0 %v1328, 6
      %v1332 = vpop.permute.xlu0 %1331
      %1333 = vrot.lane.b32.xlu0 %v1327, 6
      %v1334 = vpop.permute.xlu0 %1333
      %v1338 = vmul.f32 %v252, %v1330
      %v1339 = vmul.f32 %v248, %v1332
      %v1340 = vmul.f32 %v253, %v1334
      %v1344 = vrot.slane %v1338, 2
      %v1345 = vrot.slane %v1339, 2
      %v1346 = vsel %vm1131, %v1344, %v1345
      %v1347 = vrot.slane %v1340, 2
      %v1348 = vsel %vm1131, %v1345, %v1347
      %1349 = vrot.lane.b32.xlu0 %v1346, 122
      %v1350 = vpop.permute.xlu0 %1349
      %1351 = vrot.lane.b32.xlu0 %v1348, 122
      %v1352 = vpop.permute.xlu0 %1351
      %v1355 = vadd.f32 %v1319, %v1350
      %v1356 = vadd.f32 %v1320, %v1352
      %s1357 = scalar_lea.vmem %s1, 592
      %v1358 = vld [vmem:[%s1357] sm:$0xff]
      %v1359 = vld [vmem:[%s1357 + $0x8] sm:$0xff]
      %v1362 = vrot.slane %v1358, 6
      %v1363 = vrot.slane %v1359, 6
      %v1364 = vsel %vm1118, %v1362, %v1363
      %1365 = vrot.lane.b32.xlu0 %v1362, 7
      %v1366 = vpop.permute.xlu0 %1365
      %1367 = vrot.lane.b32.xlu0 %v1364, 7
      %v1368 = vpop.permute.xlu0 %1367
      %1369 = vrot.lane.b32.xlu0 %v1363, 7
      %v1370 = vpop.permute.xlu0 %1369
      %v1374 = vmul.f32 %v252, %v1366
      %v1375 = vmul.f32 %v248, %v1368
      %v1376 = vmul.f32 %v253, %v1370
      %v1380 = vrot.slane %v1374, 2
      %v1381 = vrot.slane %v1375, 2
      %v1382 = vsel %vm1131, %v1380, %v1381
      %v1383 = vrot.slane %v1376, 2
      %v1384 = vsel %vm1131, %v1381, %v1383
      %1385 = vrot.lane.b32.xlu0 %v1382, 121
      %v1386 = vpop.permute.xlu0 %1385
      %1387 = vrot.lane.b32.xlu0 %v1384, 121
      %v1388 = vpop.permute.xlu0 %1387
      %v1391 = vadd.f32 %v1355, %v1386
      %v1392 = vadd.f32 %v1356, %v1388
      %s1393 = scalar_lea.vmem %s1, 608
      %v1394 = vld [vmem:[%s1393] sm:$0xff]
      %v1395 = vld [vmem:[%s1393 + $0x8] sm:$0xff]
      %v1398 = vrot.slane %v1394, 6
      %v1399 = vrot.slane %v1395, 6
      %v1400 = vsel %vm1118, %v1398, %v1399
      %1401 = vrot.lane.b32.xlu0 %v1398, 8
      %v1402 = vpop.permute.xlu0 %1401
      %1403 = vrot.lane.b32.xlu0 %v1400, 8
      %v1404 = vpop.permute.xlu0 %1403
      %1405 = vrot.lane.b32.xlu0 %v1399, 8
      %v1406 = vpop.permute.xlu0 %1405
      %v1410 = vmul.f32 %v252, %v1402
      %v1411 = vmul.f32 %v248, %v1404
      %v1412 = vmul.f32 %v253, %v1406
      %v1416 = vrot.slane %v1410, 2
      %v1417 = vrot.slane %v1411, 2
      %v1418 = vsel %vm1131, %v1416, %v1417
      %v1419 = vrot.slane %v1412, 2
      %v1420 = vsel %vm1131, %v1417, %v1419
      %1421 = vrot.lane.b32.xlu0 %v1418, 120
      %v1422 = vpop.permute.xlu0 %1421
      %1423 = vrot.lane.b32.xlu0 %v1420, 120
      %v1424 = vpop.permute.xlu0 %1423
      %v1427 = vadd.f32 %v1391, %v1422
      %v1428 = vadd.f32 %v1392, %v1424
      %s1429 = scalar_lea.vmem %s1, 624
      %v1430 = vld [vmem:[%s1429] sm:$0xff]
      %v1431 = vld [vmem:[%s1429 + $0x8] sm:$0xff]
      %v1434 = vrot.slane %v1430, 6
      %v1435 = vrot.slane %v1431, 6
      %v1436 = vsel %vm1118, %v1434, %v1435
      %1437 = vrot.lane.b32.xlu0 %v1434, 9
      %v1438 = vpop.permute.xlu0 %1437
      %1439 = vrot.lane.b32.xlu0 %v1436, 9
      %v1440 = vpop.permute.xlu0 %1439
      %1441 = vrot.lane.b32.xlu0 %v1435, 9
      %v1442 = vpop.permute.xlu0 %1441
      %v1446 = vmul.f32 %v252, %v1438
      %v1447 = vmul.f32 %v248, %v1440
      %v1448 = vmul.f32 %v253, %v1442
      %v1452 = vrot.slane %v1446, 2
      %v1453 = vrot.slane %v1447, 2
      %v1454 = vsel %vm1131, %v1452, %v1453
      %v1455 = vrot.slane %v1448, 2
      %v1456 = vsel %vm1131, %v1453, %v1455
      %1457 = vrot.lane.b32.xlu0 %v1454, 119
      %v1458 = vpop.permute.xlu0 %1457
      %1459 = vrot.lane.b32.xlu0 %v1456, 119
      %v1460 = vpop.permute.xlu0 %1459
      %v1463 = vadd.f32 %v1427, %v1458
      %v1464 = vadd.f32 %v1428, %v1460
      %s1465 = scalar_lea.vmem %s1, 640
      %v1466 = vld [vmem:[%s1465] sm:$0xff]
      %v1467 = vld [vmem:[%s1465 + $0x8] sm:$0xff]
      %v1470 = vrot.slane %v1466, 6
      %v1471 = vrot.slane %v1467, 6
      %v1472 = vsel %vm1118, %v1470, %v1471
      %1473 = vrot.lane.b32.xlu0 %v1470, 10
      %v1474 = vpop.permute.xlu0 %1473
      %1475 = vrot.lane.b32.xlu0 %v1472, 10
      %v1476 = vpop.permute.xlu0 %1475
      %1477 = vrot.lane.b32.xlu0 %v1471, 10
      %v1478 = vpop.permute.xlu0 %1477
      %v1482 = vmul.f32 %v252, %v1474
      %v1483 = vmul.f32 %v248, %v1476
      %v1484 = vmul.f32 %v253, %v1478
      %v1488 = vrot.slane %v1482, 2
      %v1489 = vrot.slane %v1483, 2
      %v1490 = vsel %vm1131, %v1488, %v1489
      %v1491 = vrot.slane %v1484, 2
      %v1492 = vsel %vm1131, %v1489, %v1491
      %1493 = vrot.lane.b32.xlu0 %v1490, 118
      %v1494 = vpop.permute.xlu0 %1493
      %1495 = vrot.lane.b32.xlu0 %v1492, 118
      %v1496 = vpop.permute.xlu0 %1495
      %v1499 = vadd.f32 %v1463, %v1494
      %v1500 = vadd.f32 %v1464, %v1496
      %s1501 = scalar_lea.vmem %s1, 656
      %v1502 = vld [vmem:[%s1501] sm:$0xff]
      %v1503 = vld [vmem:[%s1501 + $0x8] sm:$0xff]
      %v1506 = vrot.slane %v1502, 6
      %v1507 = vrot.slane %v1503, 6
      %v1508 = vsel %vm1118, %v1506, %v1507
      %1509 = vrot.lane.b32.xlu0 %v1506, 11
      %v1510 = vpop.permute.xlu0 %1509
      %1511 = vrot.lane.b32.xlu0 %v1508, 11
      %v1512 = vpop.permute.xlu0 %1511
      %1513 = vrot.lane.b32.xlu0 %v1507, 11
      %v1514 = vpop.permute.xlu0 %1513
      %v1518 = vmul.f32 %v252, %v1510
      %v1519 = vmul.f32 %v248, %v1512
      %v1520 = vmul.f32 %v253, %v1514
      %v1524 = vrot.slane %v1518, 2
      %v1525 = vrot.slane %v1519, 2
      %v1526 = vsel %vm1131, %v1524, %v1525
      %v1527 = vrot.slane %v1520, 2
      %v1528 = vsel %vm1131, %v1525, %v1527
      %1529 = vrot.lane.b32.xlu0 %v1526, 117
      %v1530 = vpop.permute.xlu0 %1529
      %1531 = vrot.lane.b32.xlu0 %v1528, 117
      %v1532 = vpop.permute.xlu0 %1531
      %v1535 = vadd.f32 %v1499, %v1530
      %v1536 = vadd.f32 %v1500, %v1532
      %s1537 = scalar_lea.vmem %s1, 672
      %v1538 = vld [vmem:[%s1537] sm:$0xff]
      %v1539 = vld [vmem:[%s1537 + $0x8] sm:$0xff]
      %v1542 = vrot.slane %v1538, 6
      %v1543 = vrot.slane %v1539, 6
      %v1544 = vsel %vm1118, %v1542, %v1543
      %1545 = vrot.lane.b32.xlu0 %v1542, 12
      %v1546 = vpop.permute.xlu0 %1545
      %1547 = vrot.lane.b32.xlu0 %v1544, 12
      %v1548 = vpop.permute.xlu0 %1547
      %1549 = vrot.lane.b32.xlu0 %v1543, 12
      %v1550 = vpop.permute.xlu0 %1549
      %v1554 = vmul.f32 %v252, %v1546
      %v1555 = vmul.f32 %v248, %v1548
      %v1556 = vmul.f32 %v253, %v1550
      %v1560 = vrot.slane %v1554, 2
      %v1561 = vrot.slane %v1555, 2
      %v1562 = vsel %vm1131, %v1560, %v1561
      %v1563 = vrot.slane %v1556, 2
      %v1564 = vsel %vm1131, %v1561, %v1563
      %1565 = vrot.lane.b32.xlu0 %v1562, 116
      %v1566 = vpop.permute.xlu0 %1565
      %1567 = vrot.lane.b32.xlu0 %v1564, 116
      %v1568 = vpop.permute.xlu0 %1567
      %v1571 = vadd.f32 %v1535, %v1566
      %v1572 = vadd.f32 %v1536, %v1568
      %s1573 = scalar_lea.vmem %s1, 688
      %v1574 = vld [vmem:[%s1573] sm:$0xff]
      %v1575 = vld [vmem:[%s1573 + $0x8] sm:$0xff]
      %v1578 = vrot.slane %v1574, 6
      %v1579 = vrot.slane %v1575, 6
      %v1580 = vsel %vm1118, %v1578, %v1579
      %1581 = vrot.lane.b32.xlu0 %v1578, 13
      %v1582 = vpop.permute.xlu0 %1581
      %1583 = vrot.lane.b32.xlu0 %v1580, 13
      %v1584 = vpop.permute.xlu0 %1583
      %1585 = vrot.lane.b32.xlu0 %v1579, 13
      %v1586 = vpop.permute.xlu0 %1585
      %v1590 = vmul.f32 %v252, %v1582
      %v1591 = vmul.f32 %v248, %v1584
      %v1592 = vmul.f32 %v253, %v1586
      %v1596 = vrot.slane %v1590, 2
      %v1597 = vrot.slane %v1591, 2
      %v1598 = vsel %vm1131, %v1596, %v1597
      %v1599 = vrot.slane %v1592, 2
      %v1600 = vsel %vm1131, %v1597, %v1599
      %1601 = vrot.lane.b32.xlu0 %v1598, 115
      %v1602 = vpop.permute.xlu0 %1601
      %1603 = vrot.lane.b32.xlu0 %v1600, 115
      %v1604 = vpop.permute.xlu0 %1603
      %v1607 = vadd.f32 %v1571, %v1602
      %v1608 = vadd.f32 %v1572, %v1604
      %s1609 = scalar_lea.vmem %s1, 704
      %v1610 = vld [vmem:[%s1609] sm:$0xff]
      %v1611 = vld [vmem:[%s1609 + $0x8] sm:$0xff]
      %v1614 = vrot.slane %v1610, 6
      %v1615 = vrot.slane %v1611, 6
      %v1616 = vsel %vm1118, %v1614, %v1615
      %1617 = vrot.lane.b32.xlu0 %v1614, 14
      %v1618 = vpop.permute.xlu0 %1617
      %1619 = vrot.lane.b32.xlu0 %v1616, 14
      %v1620 = vpop.permute.xlu0 %1619
      %1621 = vrot.lane.b32.xlu0 %v1615, 14
      %v1622 = vpop.permute.xlu0 %1621
      %v1626 = vmul.f32 %v252, %v1618
      %v1627 = vmul.f32 %v248, %v1620
      %v1628 = vmul.f32 %v253, %v1622
      %v1632 = vrot.slane %v1626, 2
      %v1633 = vrot.slane %v1627, 2
      %v1634 = vsel %vm1131, %v1632, %v1633
      %v1635 = vrot.slane %v1628, 2
      %v1636 = vsel %vm1131, %v1633, %v1635
      %1637 = vrot.lane.b32.xlu0 %v1634, 114
      %v1638 = vpop.permute.xlu0 %1637
      %1639 = vrot.lane.b32.xlu0 %v1636, 114
      %v1640 = vpop.permute.xlu0 %1639
      %v1643 = vadd.f32 %v1607, %v1638
      %v1644 = vadd.f32 %v1608, %v1640
      %v1645 = vmax.f32 %v1643, 0.0
      %v1646 = vmax.f32 %v1644, 0.0
      %v1647 = vld [vmem:[%s4] sm:$0xff]
      %v1648 = vld [vmem:[%s4 + $0x8] sm:$0xff]
      %v1649 = vadd.f32 %v225, %v1647
      %v1650 = vadd.f32 %v226, %v1648
      %1653 = vrot.lane.b32.xlu0 %v1645, 7
      %v1654 = vpop.permute.xlu0 %1653
      %1655 = vrot.lane.b32.xlu0 %v1646, 7
      %v1656 = vpop.permute.xlu0 %1655
      %v1659 = vsel %vm237, 0.0, %v1654
      %v1660 = vsel %vm237, 0.0, %v1656
      %v1661 = vsel %vm240, %v1659, 0.0
      %v1662 = vsel %vm240, %v1660, 0.0
      %v1665 = vrot.slane %v1661, 7
      %v1666 = vrot.slane %v1662, 7
      %v1667 = vsel %vm245, %v1665, %v1666
      %v1671 = vsel %vm245, 0.0, %v1665
      %v1672 = vsel %vm245, %v1666, 0.0
      %v1673 = vld [vmem:[%s3] sm:$0xff]
      %v1674 = vld [vmem:[%s3 + $0x8] sm:$0xff]
      %v1675 = vmul.f32 %v1671, %v1673
      %v1676 = vmul.f32 %v1667, %v1674
      %v1677 = vadd.f32 %v1649, %v1675
      %v1678 = vadd.f32 %v1650, %v1676
      %s1679 = scalar_lea.vmem %s3, 16
      %v1680 = vld [vmem:[%s1679] sm:$0xff]
      %v1681 = vld [vmem:[%s1679 + $0x8] sm:$0xff]
      %1684 = vrot.lane.b32.xlu0 %v1680, 1
      %v1685 = vpop.permute.xlu0 %1684
      %1686 = vrot.lane.b32.xlu0 %v1681, 1
      %v1687 = vpop.permute.xlu0 %1686
      %v1690 = vmul.f32 %v1671, %v1685
      %v1691 = vmul.f32 %v1667, %v1687
      %1694 = vrot.lane.b32.xlu0 %v1690, 127
      %v1695 = vpop.permute.xlu0 %1694
      %1696 = vrot.lane.b32.xlu0 %v1691, 127
      %v1697 = vpop.permute.xlu0 %1696
      %v1700 = vadd.f32 %v1677, %v1695
      %v1701 = vadd.f32 %v1678, %v1697
      %s1702 = scalar_lea.vmem %s3, 32
      %v1703 = vld [vmem:[%s1702] sm:$0xff]
      %v1704 = vld [vmem:[%s1702 + $0x8] sm:$0xff]
      %1707 = vrot.lane.b32.xlu0 %v1703, 2
      %v1708 = vpop.permute.xlu0 %1707
      %1709 = vrot.lane.b32.xlu0 %v1704, 2
      %v1710 = vpop.permute.xlu0 %1709
      %v1713 = vmul.f32 %v1671, %v1708
      %v1714 = vmul.f32 %v1667, %v1710
      %1717 = vrot.lane.b32.xlu0 %v1713, 126
      %v1718 = vpop.permute.xlu0 %1717
      %1719 = vrot.lane.b32.xlu0 %v1714, 126
      %v1720 = vpop.permute.xlu0 %1719
      %v1723 = vadd.f32 %v1700, %v1718
      %v1724 = vadd.f32 %v1701, %v1720
      %s1725 = scalar_lea.vmem %s3, 48
      %v1726 = vld [vmem:[%s1725] sm:$0xff]
      %v1727 = vld [vmem:[%s1725 + $0x8] sm:$0xff]
      %1730 = vrot.lane.b32.xlu0 %v1726, 3
      %v1731 = vpop.permute.xlu0 %1730
      %1732 = vrot.lane.b32.xlu0 %v1727, 3
      %v1733 = vpop.permute.xlu0 %1732
      %v1736 = vmul.f32 %v1671, %v1731
      %v1737 = vmul.f32 %v1667, %v1733
      %1740 = vrot.lane.b32.xlu0 %v1736, 125
      %v1741 = vpop.permute.xlu0 %1740
      %1742 = vrot.lane.b32.xlu0 %v1737, 125
      %v1743 = vpop.permute.xlu0 %1742
      %v1746 = vadd.f32 %v1723, %v1741
      %v1747 = vadd.f32 %v1724, %v1743
      %s1748 = scalar_lea.vmem %s3, 64
      %v1749 = vld [vmem:[%s1748] sm:$0xff]
      %v1750 = vld [vmem:[%s1748 + $0x8] sm:$0xff]
      %1753 = vrot.lane.b32.xlu0 %v1749, 4
      %v1754 = vpop.permute.xlu0 %1753
      %1755 = vrot.lane.b32.xlu0 %v1750, 4
      %v1756 = vpop.permute.xlu0 %1755
      %v1759 = vmul.f32 %v1671, %v1754
      %v1760 = vmul.f32 %v1667, %v1756
      %1763 = vrot.lane.b32.xlu0 %v1759, 124
      %v1764 = vpop.permute.xlu0 %1763
      %1765 = vrot.lane.b32.xlu0 %v1760, 124
      %v1766 = vpop.permute.xlu0 %1765
      %v1769 = vadd.f32 %v1746, %v1764
      %v1770 = vadd.f32 %v1747, %v1766
      %s1771 = scalar_lea.vmem %s3, 80
      %v1772 = vld [vmem:[%s1771] sm:$0xff]
      %v1773 = vld [vmem:[%s1771 + $0x8] sm:$0xff]
      %1776 = vrot.lane.b32.xlu0 %v1772, 5
      %v1777 = vpop.permute.xlu0 %1776
      %1778 = vrot.lane.b32.xlu0 %v1773, 5
      %v1779 = vpop.permute.xlu0 %1778
      %v1782 = vmul.f32 %v1671, %v1777
      %v1783 = vmul.f32 %v1667, %v1779
      %1786 = vrot.lane.b32.xlu0 %v1782, 123
      %v1787 = vpop.permute.xlu0 %1786
      %1788 = vrot.lane.b32.xlu0 %v1783, 123
      %v1789 = vpop.permute.xlu0 %1788
      %v1792 = vadd.f32 %v1769, %v1787
      %v1793 = vadd.f32 %v1770, %v1789
      %s1794 = scalar_lea.vmem %s3, 96
      %v1795 = vld [vmem:[%s1794] sm:$0xff]
      %v1796 = vld [vmem:[%s1794 + $0x8] sm:$0xff]
      %1799 = vrot.lane.b32.xlu0 %v1795, 6
      %v1800 = vpop.permute.xlu0 %1799
      %1801 = vrot.lane.b32.xlu0 %v1796, 6
      %v1802 = vpop.permute.xlu0 %1801
      %v1805 = vmul.f32 %v1671, %v1800
      %v1806 = vmul.f32 %v1667, %v1802
      %1809 = vrot.lane.b32.xlu0 %v1805, 122
      %v1810 = vpop.permute.xlu0 %1809
      %1811 = vrot.lane.b32.xlu0 %v1806, 122
      %v1812 = vpop.permute.xlu0 %1811
      %v1815 = vadd.f32 %v1792, %v1810
      %v1816 = vadd.f32 %v1793, %v1812
      %s1817 = scalar_lea.vmem %s3, 112
      %v1818 = vld [vmem:[%s1817] sm:$0xff]
      %v1819 = vld [vmem:[%s1817 + $0x8] sm:$0xff]
      %1822 = vrot.lane.b32.xlu0 %v1818, 7
      %v1823 = vpop.permute.xlu0 %1822
      %1824 = vrot.lane.b32.xlu0 %v1819, 7
      %v1825 = vpop.permute.xlu0 %1824
      %v1828 = vmul.f32 %v1671, %v1823
      %v1829 = vmul.f32 %v1667, %v1825
      %1832 = vrot.lane.b32.xlu0 %v1828, 121
      %v1833 = vpop.permute.xlu0 %1832
      %1834 = vrot.lane.b32.xlu0 %v1829, 121
      %v1835 = vpop.permute.xlu0 %1834
      %v1838 = vadd.f32 %v1815, %v1833
      %v1839 = vadd.f32 %v1816, %v1835
      %s1840 = scalar_lea.vmem %s3, 128
      %v1841 = vld [vmem:[%s1840] sm:$0xff]
      %v1842 = vld [vmem:[%s1840 + $0x8] sm:$0xff]
      %1845 = vrot.lane.b32.xlu0 %v1841, 8
      %v1846 = vpop.permute.xlu0 %1845
      %1847 = vrot.lane.b32.xlu0 %v1842, 8
      %v1848 = vpop.permute.xlu0 %1847
      %v1851 = vmul.f32 %v1671, %v1846
      %v1852 = vmul.f32 %v1667, %v1848
      %1855 = vrot.lane.b32.xlu0 %v1851, 120
      %v1856 = vpop.permute.xlu0 %1855
      %1857 = vrot.lane.b32.xlu0 %v1852, 120
      %v1858 = vpop.permute.xlu0 %1857
      %v1861 = vadd.f32 %v1838, %v1856
      %v1862 = vadd.f32 %v1839, %v1858
      %s1863 = scalar_lea.vmem %s3, 144
      %v1864 = vld [vmem:[%s1863] sm:$0xff]
      %v1865 = vld [vmem:[%s1863 + $0x8] sm:$0xff]
      %1868 = vrot.lane.b32.xlu0 %v1864, 9
      %v1869 = vpop.permute.xlu0 %1868
      %1870 = vrot.lane.b32.xlu0 %v1865, 9
      %v1871 = vpop.permute.xlu0 %1870
      %v1874 = vmul.f32 %v1671, %v1869
      %v1875 = vmul.f32 %v1667, %v1871
      %1878 = vrot.lane.b32.xlu0 %v1874, 119
      %v1879 = vpop.permute.xlu0 %1878
      %1880 = vrot.lane.b32.xlu0 %v1875, 119
      %v1881 = vpop.permute.xlu0 %1880
      %v1884 = vadd.f32 %v1861, %v1879
      %v1885 = vadd.f32 %v1862, %v1881
      %s1886 = scalar_lea.vmem %s3, 160
      %v1887 = vld [vmem:[%s1886] sm:$0xff]
      %v1888 = vld [vmem:[%s1886 + $0x8] sm:$0xff]
      %1891 = vrot.lane.b32.xlu0 %v1887, 10
      %v1892 = vpop.permute.xlu0 %1891
      %1893 = vrot.lane.b32.xlu0 %v1888, 10
      %v1894 = vpop.permute.xlu0 %1893
      %v1897 = vmul.f32 %v1671, %v1892
      %v1898 = vmul.f32 %v1667, %v1894
      %1901 = vrot.lane.b32.xlu0 %v1897, 118
      %v1902 = vpop.permute.xlu0 %1901
      %1903 = vrot.lane.b32.xlu0 %v1898, 118
      %v1904 = vpop.permute.xlu0 %1903
      %v1907 = vadd.f32 %v1884, %v1902
      %v1908 = vadd.f32 %v1885, %v1904
      %s1909 = scalar_lea.vmem %s3, 176
      %v1910 = vld [vmem:[%s1909] sm:$0xff]
      %v1911 = vld [vmem:[%s1909 + $0x8] sm:$0xff]
      %1914 = vrot.lane.b32.xlu0 %v1910, 11
      %v1915 = vpop.permute.xlu0 %1914
      %1916 = vrot.lane.b32.xlu0 %v1911, 11
      %v1917 = vpop.permute.xlu0 %1916
      %v1920 = vmul.f32 %v1671, %v1915
      %v1921 = vmul.f32 %v1667, %v1917
      %1924 = vrot.lane.b32.xlu0 %v1920, 117
      %v1925 = vpop.permute.xlu0 %1924
      %1926 = vrot.lane.b32.xlu0 %v1921, 117
      %v1927 = vpop.permute.xlu0 %1926
      %v1930 = vadd.f32 %v1907, %v1925
      %v1931 = vadd.f32 %v1908, %v1927
      %s1932 = scalar_lea.vmem %s3, 192
      %v1933 = vld [vmem:[%s1932] sm:$0xff]
      %v1934 = vld [vmem:[%s1932 + $0x8] sm:$0xff]
      %1937 = vrot.lane.b32.xlu0 %v1933, 12
      %v1938 = vpop.permute.xlu0 %1937
      %1939 = vrot.lane.b32.xlu0 %v1934, 12
      %v1940 = vpop.permute.xlu0 %1939
      %v1943 = vmul.f32 %v1671, %v1938
      %v1944 = vmul.f32 %v1667, %v1940
      %1947 = vrot.lane.b32.xlu0 %v1943, 116
      %v1948 = vpop.permute.xlu0 %1947
      %1949 = vrot.lane.b32.xlu0 %v1944, 116
      %v1950 = vpop.permute.xlu0 %1949
      %v1953 = vadd.f32 %v1930, %v1948
      %v1954 = vadd.f32 %v1931, %v1950
      %s1955 = scalar_lea.vmem %s3, 208
      %v1956 = vld [vmem:[%s1955] sm:$0xff]
      %v1957 = vld [vmem:[%s1955 + $0x8] sm:$0xff]
      %1960 = vrot.lane.b32.xlu0 %v1956, 13
      %v1961 = vpop.permute.xlu0 %1960
      %1962 = vrot.lane.b32.xlu0 %v1957, 13
      %v1963 = vpop.permute.xlu0 %1962
      %v1966 = vmul.f32 %v1671, %v1961
      %v1967 = vmul.f32 %v1667, %v1963
      %1970 = vrot.lane.b32.xlu0 %v1966, 115
      %v1971 = vpop.permute.xlu0 %1970
      %1972 = vrot.lane.b32.xlu0 %v1967, 115
      %v1973 = vpop.permute.xlu0 %1972
      %v1976 = vadd.f32 %v1953, %v1971
      %v1977 = vadd.f32 %v1954, %v1973
      %s1978 = scalar_lea.vmem %s3, 224
      %v1979 = vld [vmem:[%s1978] sm:$0xff]
      %v1980 = vld [vmem:[%s1978 + $0x8] sm:$0xff]
      %1983 = vrot.lane.b32.xlu0 %v1979, 14
      %v1984 = vpop.permute.xlu0 %1983
      %1985 = vrot.lane.b32.xlu0 %v1980, 14
      %v1986 = vpop.permute.xlu0 %1985
      %v1989 = vmul.f32 %v1671, %v1984
      %v1990 = vmul.f32 %v1667, %v1986
      %1993 = vrot.lane.b32.xlu0 %v1989, 114
      %v1994 = vpop.permute.xlu0 %1993
      %1995 = vrot.lane.b32.xlu0 %v1990, 114
      %v1996 = vpop.permute.xlu0 %1995
      %v1999 = vadd.f32 %v1976, %v1994
      %v2000 = vadd.f32 %v1977, %v1996
      %s2001 = scalar_lea.vmem %s3, 240
      %v2002 = vld [vmem:[%s2001] sm:$0xff]
      %v2003 = vld [vmem:[%s2001 + $0x8] sm:$0xff]
      %v2006 = vrot.slane %v2002, 7
      %v2007 = vrot.slane %v2003, 7
      %v2008 = vsel %vm245, %v2006, %v2007
      %v2012 = vmul.f32 %v1671, %v2006
      %v2013 = vmul.f32 %v1667, %v2008
      %v2014 = vmul.f32 %v1672, %v2007
      %v2018 = vrot.slane %v2012, 1
      %v2019 = vrot.slane %v2013, 1
      %v2020 = vsel %vm599, %v2018, %v2019
      %v2021 = vrot.slane %v2014, 1
      %v2022 = vsel %vm599, %v2019, %v2021
      %v2025 = vadd.f32 %v1999, %v2020
      %v2026 = vadd.f32 %v2000, %v2022
      %s2027 = scalar_lea.vmem %s3, 256
      %v2028 = vld [vmem:[%s2027] sm:$0xff]
      %v2029 = vld [vmem:[%s2027 + $0x8] sm:$0xff]
      %v2032 = vrot.slane %v2028, 7
      %v2033 = vrot.slane %v2029, 7
      %v2034 = vsel %vm245, %v2032, %v2033
      %2035 = vrot.lane.b32.xlu0 %v2032, 1
      %v2036 = vpop.permute.xlu0 %2035
      %2037 = vrot.lane.b32.xlu0 %v2034, 1
      %v2038 = vpop.permute.xlu0 %2037
      %2039 = vrot.lane.b32.xlu0 %v2033, 1
      %v2040 = vpop.permute.xlu0 %2039
      %v2044 = vmul.f32 %v1671, %v2036
      %v2045 = vmul.f32 %v1667, %v2038
      %v2046 = vmul.f32 %v1672, %v2040
      %v2050 = vrot.slane %v2044, 1
      %v2051 = vrot.slane %v2045, 1
      %v2052 = vsel %vm599, %v2050, %v2051
      %v2053 = vrot.slane %v2046, 1
      %v2054 = vsel %vm599, %v2051, %v2053
      %2055 = vrot.lane.b32.xlu0 %v2052, 127
      %v2056 = vpop.permute.xlu0 %2055
      %2057 = vrot.lane.b32.xlu0 %v2054, 127
      %v2058 = vpop.permute.xlu0 %2057
      %v2061 = vadd.f32 %v2025, %v2056
      %v2062 = vadd.f32 %v2026, %v2058
      %s2063 = scalar_lea.vmem %s3, 272
      %v2064 = vld [vmem:[%s2063] sm:$0xff]
      %v2065 = vld [vmem:[%s2063 + $0x8] sm:$0xff]
      %v2068 = vrot.slane %v2064, 7
      %v2069 = vrot.slane %v2065, 7
      %v2070 = vsel %vm245, %v2068, %v2069
      %2071 = vrot.lane.b32.xlu0 %v2068, 2
      %v2072 = vpop.permute.xlu0 %2071
      %2073 = vrot.lane.b32.xlu0 %v2070, 2
      %v2074 = vpop.permute.xlu0 %2073
      %2075 = vrot.lane.b32.xlu0 %v2069, 2
      %v2076 = vpop.permute.xlu0 %2075
      %v2080 = vmul.f32 %v1671, %v2072
      %v2081 = vmul.f32 %v1667, %v2074
      %v2082 = vmul.f32 %v1672, %v2076
      %v2086 = vrot.slane %v2080, 1
      %v2087 = vrot.slane %v2081, 1
      %v2088 = vsel %vm599, %v2086, %v2087
      %v2089 = vrot.slane %v2082, 1
      %v2090 = vsel %vm599, %v2087, %v2089
      %2091 = vrot.lane.b32.xlu0 %v2088, 126
      %v2092 = vpop.permute.xlu0 %2091
      %2093 = vrot.lane.b32.xlu0 %v2090, 126
      %v2094 = vpop.permute.xlu0 %2093
      %v2097 = vadd.f32 %v2061, %v2092
      %v2098 = vadd.f32 %v2062, %v2094
      %s2099 = scalar_lea.vmem %s3, 288
      %v2100 = vld [vmem:[%s2099] sm:$0xff]
      %v2101 = vld [vmem:[%s2099 + $0x8] sm:$0xff]
      %v2104 = vrot.slane %v2100, 7
      %v2105 = vrot.slane %v2101, 7
      %v2106 = vsel %vm245, %v2104, %v2105
      %2107 = vrot.lane.b32.xlu0 %v2104, 3
      %v2108 = vpop.permute.xlu0 %2107
      %2109 = vrot.lane.b32.xlu0 %v2106, 3
      %v2110 = vpop.permute.xlu0 %2109
      %2111 = vrot.lane.b32.xlu0 %v2105, 3
      %v2112 = vpop.permute.xlu0 %2111
      %v2116 = vmul.f32 %v1671, %v2108
      %v2117 = vmul.f32 %v1667, %v2110
      %v2118 = vmul.f32 %v1672, %v2112
      %v2122 = vrot.slane %v2116, 1
      %v2123 = vrot.slane %v2117, 1
      %v2124 = vsel %vm599, %v2122, %v2123
      %v2125 = vrot.slane %v2118, 1
      %v2126 = vsel %vm599, %v2123, %v2125
      %2127 = vrot.lane.b32.xlu0 %v2124, 125
      %v2128 = vpop.permute.xlu0 %2127
      %2129 = vrot.lane.b32.xlu0 %v2126, 125
      %v2130 = vpop.permute.xlu0 %2129
      %v2133 = vadd.f32 %v2097, %v2128
      %v2134 = vadd.f32 %v2098, %v2130
      %s2135 = scalar_lea.vmem %s3, 304
      %v2136 = vld [vmem:[%s2135] sm:$0xff]
      %v2137 = vld [vmem:[%s2135 + $0x8] sm:$0xff]
      %v2140 = vrot.slane %v2136, 7
      %v2141 = vrot.slane %v2137, 7
      %v2142 = vsel %vm245, %v2140, %v2141
      %2143 = vrot.lane.b32.xlu0 %v2140, 4
      %v2144 = vpop.permute.xlu0 %2143
      %2145 = vrot.lane.b32.xlu0 %v2142, 4
      %v2146 = vpop.permute.xlu0 %2145
      %2147 = vrot.lane.b32.xlu0 %v2141, 4
      %v2148 = vpop.permute.xlu0 %2147
      %v2152 = vmul.f32 %v1671, %v2144
      %v2153 = vmul.f32 %v1667, %v2146
      %v2154 = vmul.f32 %v1672, %v2148
      %v2158 = vrot.slane %v2152, 1
      %v2159 = vrot.slane %v2153, 1
      %v2160 = vsel %vm599, %v2158, %v2159
      %v2161 = vrot.slane %v2154, 1
      %v2162 = vsel %vm599, %v2159, %v2161
      %2163 = vrot.lane.b32.xlu0 %v2160, 124
      %v2164 = vpop.permute.xlu0 %2163
      %2165 = vrot.lane.b32.xlu0 %v2162, 124
      %v2166 = vpop.permute.xlu0 %2165
      %v2169 = vadd.f32 %v2133, %v2164
      %v2170 = vadd.f32 %v2134, %v2166
      %s2171 = scalar_lea.vmem %s3, 320
      %v2172 = vld [vmem:[%s2171] sm:$0xff]
      %v2173 = vld [vmem:[%s2171 + $0x8] sm:$0xff]
      %v2176 = vrot.slane %v2172, 7
      %v2177 = vrot.slane %v2173, 7
      %v2178 = vsel %vm245, %v2176, %v2177
      %2179 = vrot.lane.b32.xlu0 %v2176, 5
      %v2180 = vpop.permute.xlu0 %2179
      %2181 = vrot.lane.b32.xlu0 %v2178, 5
      %v2182 = vpop.permute.xlu0 %2181
      %2183 = vrot.lane.b32.xlu0 %v2177, 5
      %v2184 = vpop.permute.xlu0 %2183
      %v2188 = vmul.f32 %v1671, %v2180
      %v2189 = vmul.f32 %v1667, %v2182
      %v2190 = vmul.f32 %v1672, %v2184
      %v2194 = vrot.slane %v2188, 1
      %v2195 = vrot.slane %v2189, 1
      %v2196 = vsel %vm599, %v2194, %v2195
      %v2197 = vrot.slane %v2190, 1
      %v2198 = vsel %vm599, %v2195, %v2197
      %2199 = vrot.lane.b32.xlu0 %v2196, 123
      %v2200 = vpop.permute.xlu0 %2199
      %2201 = vrot.lane.b32.xlu0 %v2198, 123
      %v2202 = vpop.permute.xlu0 %2201
      %v2205 = vadd.f32 %v2169, %v2200
      %v2206 = vadd.f32 %v2170, %v2202
      %s2207 = scalar_lea.vmem %s3, 336
      %v2208 = vld [vmem:[%s2207] sm:$0xff]
      %v2209 = vld [vmem:[%s2207 + $0x8] sm:$0xff]
      %v2212 = vrot.slane %v2208, 7
      %v2213 = vrot.slane %v2209, 7
      %v2214 = vsel %vm245, %v2212, %v2213
      %2215 = vrot.lane.b32.xlu0 %v2212, 6
      %v2216 = vpop.permute.xlu0 %2215
      %2217 = vrot.lane.b32.xlu0 %v2214, 6
      %v2218 = vpop.permute.xlu0 %2217
      %2219 = vrot.lane.b32.xlu0 %v2213, 6
      %v2220 = vpop.permute.xlu0 %2219
      %v2224 = vmul.f32 %v1671, %v2216
      %v2225 = vmul.f32 %v1667, %v2218
      %v2226 = vmul.f32 %v1672, %v2220
      %v2230 = vrot.slane %v2224, 1
      %v2231 = vrot.slane %v2225, 1
      %v2232 = vsel %vm599, %v2230, %v2231
      %v2233 = vrot.slane %v2226, 1
      %v2234 = vsel %vm599, %v2231, %v2233
      %2235 = vrot.lane.b32.xlu0 %v2232, 122
      %v2236 = vpop.permute.xlu0 %2235
      %2237 = vrot.lane.b32.xlu0 %v2234, 122
      %v2238 = vpop.permute.xlu0 %2237
      %v2241 = vadd.f32 %v2205, %v2236
      %v2242 = vadd.f32 %v2206, %v2238
      %s2243 = scalar_lea.vmem %s3, 352
      %v2244 = vld [vmem:[%s2243] sm:$0xff]
      %v2245 = vld [vmem:[%s2243 + $0x8] sm:$0xff]
      %v2248 = vrot.slane %v2244, 7
      %v2249 = vrot.slane %v2245, 7
      %v2250 = vsel %vm245, %v2248, %v2249
      %2251 = vrot.lane.b32.xlu0 %v2248, 7
      %v2252 = vpop.permute.xlu0 %2251
      %2253 = vrot.lane.b32.xlu0 %v2250, 7
      %v2254 = vpop.permute.xlu0 %2253
      %2255 = vrot.lane.b32.xlu0 %v2249, 7
      %v2256 = vpop.permute.xlu0 %2255
      %v2260 = vmul.f32 %v1671, %v2252
      %v2261 = vmul.f32 %v1667, %v2254
      %v2262 = vmul.f32 %v1672, %v2256
      %v2266 = vrot.slane %v2260, 1
      %v2267 = vrot.slane %v2261, 1
      %v2268 = vsel %vm599, %v2266, %v2267
      %v2269 = vrot.slane %v2262, 1
      %v2270 = vsel %vm599, %v2267, %v2269
      %2271 = vrot.lane.b32.xlu0 %v2268, 121
      %v2272 = vpop.permute.xlu0 %2271
      %2273 = vrot.lane.b32.xlu0 %v2270, 121
      %v2274 = vpop.permute.xlu0 %2273
      %v2277 = vadd.f32 %v2241, %v2272
      %v2278 = vadd.f32 %v2242, %v2274
      %s2279 = scalar_lea.vmem %s3, 368
      %v2280 = vld [vmem:[%s2279] sm:$0xff]
      %v2281 = vld [vmem:[%s2279 + $0x8] sm:$0xff]
      %v2284 = vrot.slane %v2280, 7
      %v2285 = vrot.slane %v2281, 7
      %v2286 = vsel %vm245, %v2284, %v2285
      %2287 = vrot.lane.b32.xlu0 %v2284, 8
      %v2288 = vpop.permute.xlu0 %2287
      %2289 = vrot.lane.b32.xlu0 %v2286, 8
      %v2290 = vpop.permute.xlu0 %2289
      %2291 = vrot.lane.b32.xlu0 %v2285, 8
      %v2292 = vpop.permute.xlu0 %2291
      %v2296 = vmul.f32 %v1671, %v2288
      %v2297 = vmul.f32 %v1667, %v2290
      %v2298 = vmul.f32 %v1672, %v2292
      %v2302 = vrot.slane %v2296, 1
      %v2303 = vrot.slane %v2297, 1
      %v2304 = vsel %vm599, %v2302, %v2303
      %v2305 = vrot.slane %v2298, 1
      %v2306 = vsel %vm599, %v2303, %v2305
      %2307 = vrot.lane.b32.xlu0 %v2304, 120
      %v2308 = vpop.permute.xlu0 %2307
      %2309 = vrot.lane.b32.xlu0 %v2306, 120
      %v2310 = vpop.permute.xlu0 %2309
      %v2313 = vadd.f32 %v2277, %v2308
      %v2314 = vadd.f32 %v2278, %v2310
      %s2315 = scalar_lea.vmem %s3, 384
      %v2316 = vld [vmem:[%s2315] sm:$0xff]
      %v2317 = vld [vmem:[%s2315 + $0x8] sm:$0xff]
      %v2320 = vrot.slane %v2316, 7
      %v2321 = vrot.slane %v2317, 7
      %v2322 = vsel %vm245, %v2320, %v2321
      %2323 = vrot.lane.b32.xlu0 %v2320, 9
      %v2324 = vpop.permute.xlu0 %2323
      %2325 = vrot.lane.b32.xlu0 %v2322, 9
      %v2326 = vpop.permute.xlu0 %2325
      %2327 = vrot.lane.b32.xlu0 %v2321, 9
      %v2328 = vpop.permute.xlu0 %2327
      %v2332 = vmul.f32 %v1671, %v2324
      %v2333 = vmul.f32 %v1667, %v2326
      %v2334 = vmul.f32 %v1672, %v2328
      %v2338 = vrot.slane %v2332, 1
      %v2339 = vrot.slane %v2333, 1
      %v2340 = vsel %vm599, %v2338, %v2339
      %v2341 = vrot.slane %v2334, 1
      %v2342 = vsel %vm599, %v2339, %v2341
      %2343 = vrot.lane.b32.xlu0 %v2340, 119
      %v2344 = vpop.permute.xlu0 %2343
      %2345 = vrot.lane.b32.xlu0 %v2342, 119
      %v2346 = vpop.permute.xlu0 %2345
      %v2349 = vadd.f32 %v2313, %v2344
      %v2350 = vadd.f32 %v2314, %v2346
      %s2351 = scalar_lea.vmem %s3, 400
      %v2352 = vld [vmem:[%s2351] sm:$0xff]
      %v2353 = vld [vmem:[%s2351 + $0x8] sm:$0xff]
      %v2356 = vrot.slane %v2352, 7
      %v2357 = vrot.slane %v2353, 7
      %v2358 = vsel %vm245, %v2356, %v2357
      %2359 = vrot.lane.b32.xlu0 %v2356, 10
      %v2360 = vpop.permute.xlu0 %2359
      %2361 = vrot.lane.b32.xlu0 %v2358, 10
      %v2362 = vpop.permute.xlu0 %2361
      %2363 = vrot.lane.b32.xlu0 %v2357, 10
      %v2364 = vpop.permute.xlu0 %2363
      %v2368 = vmul.f32 %v1671, %v2360
      %v2369 = vmul.f32 %v1667, %v2362
      %v2370 = vmul.f32 %v1672, %v2364
      %v2374 = vrot.slane %v2368, 1
      %v2375 = vrot.slane %v2369, 1
      %v2376 = vsel %vm599, %v2374, %v2375
      %v2377 = vrot.slane %v2370, 1
      %v2378 = vsel %vm599, %v2375, %v2377
      %2379 = vrot.lane.b32.xlu0 %v2376, 118
      %v2380 = vpop.permute.xlu0 %2379
      %2381 = vrot.lane.b32.xlu0 %v2378, 118
      %v2382 = vpop.permute.xlu0 %2381
      %v2385 = vadd.f32 %v2349, %v2380
      %v2386 = vadd.f32 %v2350, %v2382
      %s2387 = scalar_lea.vmem %s3, 416
      %v2388 = vld [vmem:[%s2387] sm:$0xff]
      %v2389 = vld [vmem:[%s2387 + $0x8] sm:$0xff]
      %v2392 = vrot.slane %v2388, 7
      %v2393 = vrot.slane %v2389, 7
      %v2394 = vsel %vm245, %v2392, %v2393
      %2395 = vrot.lane.b32.xlu0 %v2392, 11
      %v2396 = vpop.permute.xlu0 %2395
      %2397 = vrot.lane.b32.xlu0 %v2394, 11
      %v2398 = vpop.permute.xlu0 %2397
      %2399 = vrot.lane.b32.xlu0 %v2393, 11
      %v2400 = vpop.permute.xlu0 %2399
      %v2404 = vmul.f32 %v1671, %v2396
      %v2405 = vmul.f32 %v1667, %v2398
      %v2406 = vmul.f32 %v1672, %v2400
      %v2410 = vrot.slane %v2404, 1
      %v2411 = vrot.slane %v2405, 1
      %v2412 = vsel %vm599, %v2410, %v2411
      %v2413 = vrot.slane %v2406, 1
      %v2414 = vsel %vm599, %v2411, %v2413
      %2415 = vrot.lane.b32.xlu0 %v2412, 117
      %v2416 = vpop.permute.xlu0 %2415
      %2417 = vrot.lane.b32.xlu0 %v2414, 117
      %v2418 = vpop.permute.xlu0 %2417
      %v2421 = vadd.f32 %v2385, %v2416
      %v2422 = vadd.f32 %v2386, %v2418
      %s2423 = scalar_lea.vmem %s3, 432
      %v2424 = vld [vmem:[%s2423] sm:$0xff]
      %v2425 = vld [vmem:[%s2423 + $0x8] sm:$0xff]
      %v2428 = vrot.slane %v2424, 7
      %v2429 = vrot.slane %v2425, 7
      %v2430 = vsel %vm245, %v2428, %v2429
      %2431 = vrot.lane.b32.xlu0 %v2428, 12
      %v2432 = vpop.permute.xlu0 %2431
      %2433 = vrot.lane.b32.xlu0 %v2430, 12
      %v2434 = vpop.permute.xlu0 %2433
      %2435 = vrot.lane.b32.xlu0 %v2429, 12
      %v2436 = vpop.permute.xlu0 %2435
      %v2440 = vmul.f32 %v1671, %v2432
      %v2441 = vmul.f32 %v1667, %v2434
      %v2442 = vmul.f32 %v1672, %v2436
      %v2446 = vrot.slane %v2440, 1
      %v2447 = vrot.slane %v2441, 1
      %v2448 = vsel %vm599, %v2446, %v2447
      %v2449 = vrot.slane %v2442, 1
      %v2450 = vsel %vm599, %v2447, %v2449
      %2451 = vrot.lane.b32.xlu0 %v2448, 116
      %v2452 = vpop.permute.xlu0 %2451
      %2453 = vrot.lane.b32.xlu0 %v2450, 116
      %v2454 = vpop.permute.xlu0 %2453
      %v2457 = vadd.f32 %v2421, %v2452
      %v2458 = vadd.f32 %v2422, %v2454
      %s2459 = scalar_lea.vmem %s3, 448
      %v2460 = vld [vmem:[%s2459] sm:$0xff]
      %v2461 = vld [vmem:[%s2459 + $0x8] sm:$0xff]
      %v2464 = vrot.slane %v2460, 7
      %v2465 = vrot.slane %v2461, 7
      %v2466 = vsel %vm245, %v2464, %v2465
      %2467 = vrot.lane.b32.xlu0 %v2464, 13
      %v2468 = vpop.permute.xlu0 %2467
      %2469 = vrot.lane.b32.xlu0 %v2466, 13
      %v2470 = vpop.permute.xlu0 %2469
      %2471 = vrot.lane.b32.xlu0 %v2465, 13
      %v2472 = vpop.permute.xlu0 %2471
      %v2476 = vmul.f32 %v1671, %v2468
      %v2477 = vmul.f32 %v1667, %v2470
      %v2478 = vmul.f32 %v1672, %v2472
      %v2482 = vrot.slane %v2476, 1
      %v2483 = vrot.slane %v2477, 1
      %v2484 = vsel %vm599, %v2482, %v2483
      %v2485 = vrot.slane %v2478, 1
      %v2486 = vsel %vm599, %v2483, %v2485
      %2487 = vrot.lane.b32.xlu0 %v2484, 115
      %v2488 = vpop.permute.xlu0 %2487
      %2489 = vrot.lane.b32.xlu0 %v2486, 115
      %v2490 = vpop.permute.xlu0 %2489
      %v2493 = vadd.f32 %v2457, %v2488
      %v2494 = vadd.f32 %v2458, %v2490
      %s2495 = scalar_lea.vmem %s3, 464
      %v2496 = vld [vmem:[%s2495] sm:$0xff]
      %v2497 = vld [vmem:[%s2495 + $0x8] sm:$0xff]
      %v2500 = vrot.slane %v2496, 7
      %v2501 = vrot.slane %v2497, 7
      %v2502 = vsel %vm245, %v2500, %v2501
      %2503 = vrot.lane.b32.xlu0 %v2500, 14
      %v2504 = vpop.permute.xlu0 %2503
      %2505 = vrot.lane.b32.xlu0 %v2502, 14
      %v2506 = vpop.permute.xlu0 %2505
      %2507 = vrot.lane.b32.xlu0 %v2501, 14
      %v2508 = vpop.permute.xlu0 %2507
      %v2512 = vmul.f32 %v1671, %v2504
      %v2513 = vmul.f32 %v1667, %v2506
      %v2514 = vmul.f32 %v1672, %v2508
      %v2518 = vrot.slane %v2512, 1
      %v2519 = vrot.slane %v2513, 1
      %v2520 = vsel %vm599, %v2518, %v2519
      %v2521 = vrot.slane %v2514, 1
      %v2522 = vsel %vm599, %v2519, %v2521
      %2523 = vrot.lane.b32.xlu0 %v2520, 114
      %v2524 = vpop.permute.xlu0 %2523
      %2525 = vrot.lane.b32.xlu0 %v2522, 114
      %v2526 = vpop.permute.xlu0 %2525
      %v2529 = vadd.f32 %v2493, %v2524
      %v2530 = vadd.f32 %v2494, %v2526
      %s2531 = scalar_lea.vmem %s3, 480
      %v2532 = vld [vmem:[%s2531] sm:$0xff]
      %v2533 = vld [vmem:[%s2531 + $0x8] sm:$0xff]
      %v2536 = vrot.slane %v2532, 6
      %v2537 = vrot.slane %v2533, 6
      %v2538 = vsel %vm1118, %v2536, %v2537
      %v2542 = vmul.f32 %v1671, %v2536
      %v2543 = vmul.f32 %v1667, %v2538
      %v2544 = vmul.f32 %v1672, %v2537
      %v2548 = vrot.slane %v2542, 2
      %v2549 = vrot.slane %v2543, 2
      %v2550 = vsel %vm1131, %v2548, %v2549
      %v2551 = vrot.slane %v2544, 2
      %v2552 = vsel %vm1131, %v2549, %v2551
      %v2555 = vadd.f32 %v2529, %v2550
      %v2556 = vadd.f32 %v2530, %v2552
      %s2557 = scalar_lea.vmem %s3, 496
      %v2558 = vld [vmem:[%s2557] sm:$0xff]
      %v2559 = vld [vmem:[%s2557 + $0x8] sm:$0xff]
      %v2562 = vrot.slane %v2558, 6
      %v2563 = vrot.slane %v2559, 6
      %v2564 = vsel %vm1118, %v2562, %v2563
      %2565 = vrot.lane.b32.xlu0 %v2562, 1
      %v2566 = vpop.permute.xlu0 %2565
      %2567 = vrot.lane.b32.xlu0 %v2564, 1
      %v2568 = vpop.permute.xlu0 %2567
      %2569 = vrot.lane.b32.xlu0 %v2563, 1
      %v2570 = vpop.permute.xlu0 %2569
      %v2574 = vmul.f32 %v1671, %v2566
      %v2575 = vmul.f32 %v1667, %v2568
      %v2576 = vmul.f32 %v1672, %v2570
      %v2580 = vrot.slane %v2574, 2
      %v2581 = vrot.slane %v2575, 2
      %v2582 = vsel %vm1131, %v2580, %v2581
      %v2583 = vrot.slane %v2576, 2
      %v2584 = vsel %vm1131, %v2581, %v2583
      %2585 = vrot.lane.b32.xlu0 %v2582, 127
      %v2586 = vpop.permute.xlu0 %2585
      %2587 = vrot.lane.b32.xlu0 %v2584, 127
      %v2588 = vpop.permute.xlu0 %2587
      %v2591 = vadd.f32 %v2555, %v2586
      %v2592 = vadd.f32 %v2556, %v2588
      %s2593 = scalar_lea.vmem %s3, 512
      %v2594 = vld [vmem:[%s2593] sm:$0xff]
      %v2595 = vld [vmem:[%s2593 + $0x8] sm:$0xff]
      %v2598 = vrot.slane %v2594, 6
      %v2599 = vrot.slane %v2595, 6
      %v2600 = vsel %vm1118, %v2598, %v2599
      %2601 = vrot.lane.b32.xlu0 %v2598, 2
      %v2602 = vpop.permute.xlu0 %2601
      %2603 = vrot.lane.b32.xlu0 %v2600, 2
      %v2604 = vpop.permute.xlu0 %2603
      %2605 = vrot.lane.b32.xlu0 %v2599, 2
      %v2606 = vpop.permute.xlu0 %2605
      %v2610 = vmul.f32 %v1671, %v2602
      %v2611 = vmul.f32 %v1667, %v2604
      %v2612 = vmul.f32 %v1672, %v2606
      %v2616 = vrot.slane %v2610, 2
      %v2617 = vrot.slane %v2611, 2
      %v2618 = vsel %vm1131, %v2616, %v2617
      %v2619 = vrot.slane %v2612, 2
      %v2620 = vsel %vm1131, %v2617, %v2619
      %2621 = vrot.lane.b32.xlu0 %v2618, 126
      %v2622 = vpop.permute.xlu0 %2621
      %2623 = vrot.lane.b32.xlu0 %v2620, 126
      %v2624 = vpop.permute.xlu0 %2623
      %v2627 = vadd.f32 %v2591, %v2622
      %v2628 = vadd.f32 %v2592, %v2624
      %s2629 = scalar_lea.vmem %s3, 528
      %v2630 = vld [vmem:[%s2629] sm:$0xff]
      %v2631 = vld [vmem:[%s2629 + $0x8] sm:$0xff]
      %v2634 = vrot.slane %v2630, 6
      %v2635 = vrot.slane %v2631, 6
      %v2636 = vsel %vm1118, %v2634, %v2635
      %2637 = vrot.lane.b32.xlu0 %v2634, 3
      %v2638 = vpop.permute.xlu0 %2637
      %2639 = vrot.lane.b32.xlu0 %v2636, 3
      %v2640 = vpop.permute.xlu0 %2639
      %2641 = vrot.lane.b32.xlu0 %v2635, 3
      %v2642 = vpop.permute.xlu0 %2641
      %v2646 = vmul.f32 %v1671, %v2638
      %v2647 = vmul.f32 %v1667, %v2640
      %v2648 = vmul.f32 %v1672, %v2642
      %v2652 = vrot.slane %v2646, 2
      %v2653 = vrot.slane %v2647, 2
      %v2654 = vsel %vm1131, %v2652, %v2653
      %v2655 = vrot.slane %v2648, 2
      %v2656 = vsel %vm1131, %v2653, %v2655
      %2657 = vrot.lane.b32.xlu0 %v2654, 125
      %v2658 = vpop.permute.xlu0 %2657
      %2659 = vrot.lane.b32.xlu0 %v2656, 125
      %v2660 = vpop.permute.xlu0 %2659
      %v2663 = vadd.f32 %v2627, %v2658
      %v2664 = vadd.f32 %v2628, %v2660
      %s2665 = scalar_lea.vmem %s3, 544
      %v2666 = vld [vmem:[%s2665] sm:$0xff]
      %v2667 = vld [vmem:[%s2665 + $0x8] sm:$0xff]
      %v2670 = vrot.slane %v2666, 6
      %v2671 = vrot.slane %v2667, 6
      %v2672 = vsel %vm1118, %v2670, %v2671
      %2673 = vrot.lane.b32.xlu0 %v2670, 4
      %v2674 = vpop.permute.xlu0 %2673
      %2675 = vrot.lane.b32.xlu0 %v2672, 4
      %v2676 = vpop.permute.xlu0 %2675
      %2677 = vrot.lane.b32.xlu0 %v2671, 4
      %v2678 = vpop.permute.xlu0 %2677
      %v2682 = vmul.f32 %v1671, %v2674
      %v2683 = vmul.f32 %v1667, %v2676
      %v2684 = vmul.f32 %v1672, %v2678
      %v2688 = vrot.slane %v2682, 2
      %v2689 = vrot.slane %v2683, 2
      %v2690 = vsel %vm1131, %v2688, %v2689
      %v2691 = vrot.slane %v2684, 2
      %v2692 = vsel %vm1131, %v2689, %v2691
      %2693 = vrot.lane.b32.xlu0 %v2690, 124
      %v2694 = vpop.permute.xlu0 %2693
      %2695 = vrot.lane.b32.xlu0 %v2692, 124
      %v2696 = vpop.permute.xlu0 %2695
      %v2699 = vadd.f32 %v2663, %v2694
      %v2700 = vadd.f32 %v2664, %v2696
      %s2701 = scalar_lea.vmem %s3, 560
      %v2702 = vld [vmem:[%s2701] sm:$0xff]
      %v2703 = vld [vmem:[%s2701 + $0x8] sm:$0xff]
      %v2706 = vrot.slane %v2702, 6
      %v2707 = vrot.slane %v2703, 6
      %v2708 = vsel %vm1118, %v2706, %v2707
      %2709 = vrot.lane.b32.xlu0 %v2706, 5
      %v2710 = vpop.permute.xlu0 %2709
      %2711 = vrot.lane.b32.xlu0 %v2708, 5
      %v2712 = vpop.permute.xlu0 %2711
      %2713 = vrot.lane.b32.xlu0 %v2707, 5
      %v2714 = vpop.permute.xlu0 %2713
      %v2718 = vmul.f32 %v1671, %v2710
      %v2719 = vmul.f32 %v1667, %v2712
      %v2720 = vmul.f32 %v1672, %v2714
      %v2724 = vrot.slane %v2718, 2
      %v2725 = vrot.slane %v2719, 2
      %v2726 = vsel %vm1131, %v2724, %v2725
      %v2727 = vrot.slane %v2720, 2
      %v2728 = vsel %vm1131, %v2725, %v2727
      %2729 = vrot.lane.b32.xlu0 %v2726, 123
      %v2730 = vpop.permute.xlu0 %2729
      %2731 = vrot.lane.b32.xlu0 %v2728, 123
      %v2732 = vpop.permute.xlu0 %2731
      %v2735 = vadd.f32 %v2699, %v2730
      %v2736 = vadd.f32 %v2700, %v2732
      %s2737 = scalar_lea.vmem %s3, 576
      %v2738 = vld [vmem:[%s2737] sm:$0xff]
      %v2739 = vld [vmem:[%s2737 + $0x8] sm:$0xff]
      %v2742 = vrot.slane %v2738, 6
      %v2743 = vrot.slane %v2739, 6
      %v2744 = vsel %vm1118, %v2742, %v2743
      %2745 = vrot.lane.b32.xlu0 %v2742, 6
      %v2746 = vpop.permute.xlu0 %2745
      %2747 = vrot.lane.b32.xlu0 %v2744, 6
      %v2748 = vpop.permute.xlu0 %2747
      %2749 = vrot.lane.b32.xlu0 %v2743, 6
      %v2750 = vpop.permute.xlu0 %2749
      %v2754 = vmul.f32 %v1671, %v2746
      %v2755 = vmul.f32 %v1667, %v2748
      %v2756 = vmul.f32 %v1672, %v2750
      %v2760 = vrot.slane %v2754, 2
      %v2761 = vrot.slane %v2755, 2
      %v2762 = vsel %vm1131, %v2760, %v2761
      %v2763 = vrot.slane %v2756, 2
      %v2764 = vsel %vm1131, %v2761, %v2763
      %2765 = vrot.lane.b32.xlu0 %v2762, 122
      %v2766 = vpop.permute.xlu0 %2765
      %2767 = vrot.lane.b32.xlu0 %v2764, 122
      %v2768 = vpop.permute.xlu0 %2767
      %v2771 = vadd.f32 %v2735, %v2766
      %v2772 = vadd.f32 %v2736, %v2768
      %s2773 = scalar_lea.vmem %s3, 592
      %v2774 = vld [vmem:[%s2773] sm:$0xff]
      %v2775 = vld [vmem:[%s2773 + $0x8] sm:$0xff]
      %v2778 = vrot.slane %v2774, 6
      %v2779 = vrot.slane %v2775, 6
      %v2780 = vsel %vm1118, %v2778, %v2779
      %2781 = vrot.lane.b32.xlu0 %v2778, 7
      %v2782 = vpop.permute.xlu0 %2781
      %2783 = vrot.lane.b32.xlu0 %v2780, 7
      %v2784 = vpop.permute.xlu0 %2783
      %2785 = vrot.lane.b32.xlu0 %v2779, 7
      %v2786 = vpop.permute.xlu0 %2785
      %v2790 = vmul.f32 %v1671, %v2782
      %v2791 = vmul.f32 %v1667, %v2784
      %v2792 = vmul.f32 %v1672, %v2786
      %v2796 = vrot.slane %v2790, 2
      %v2797 = vrot.slane %v2791, 2
      %v2798 = vsel %vm1131, %v2796, %v2797
      %v2799 = vrot.slane %v2792, 2
      %v2800 = vsel %vm1131, %v2797, %v2799
      %2801 = vrot.lane.b32.xlu0 %v2798, 121
      %v2802 = vpop.permute.xlu0 %2801
      %2803 = vrot.lane.b32.xlu0 %v2800, 121
      %v2804 = vpop.permute.xlu0 %2803
      %v2807 = vadd.f32 %v2771, %v2802
      %v2808 = vadd.f32 %v2772, %v2804
      %s2809 = scalar_lea.vmem %s3, 608
      %v2810 = vld [vmem:[%s2809] sm:$0xff]
      %v2811 = vld [vmem:[%s2809 + $0x8] sm:$0xff]
      %v2814 = vrot.slane %v2810, 6
      %v2815 = vrot.slane %v2811, 6
      %v2816 = vsel %vm1118, %v2814, %v2815
      %2817 = vrot.lane.b32.xlu0 %v2814, 8
      %v2818 = vpop.permute.xlu0 %2817
      %2819 = vrot.lane.b32.xlu0 %v2816, 8
      %v2820 = vpop.permute.xlu0 %2819
      %2821 = vrot.lane.b32.xlu0 %v2815, 8
      %v2822 = vpop.permute.xlu0 %2821
      %v2826 = vmul.f32 %v1671, %v2818
      %v2827 = vmul.f32 %v1667, %v2820
      %v2828 = vmul.f32 %v1672, %v2822
      %v2832 = vrot.slane %v2826, 2
      %v2833 = vrot.slane %v2827, 2
      %v2834 = vsel %vm1131, %v2832, %v2833
      %v2835 = vrot.slane %v2828, 2
      %v2836 = vsel %vm1131, %v2833, %v2835
      %2837 = vrot.lane.b32.xlu0 %v2834, 120
      %v2838 = vpop.permute.xlu0 %2837
      %2839 = vrot.lane.b32.xlu0 %v2836, 120
      %v2840 = vpop.permute.xlu0 %2839
      %v2843 = vadd.f32 %v2807, %v2838
      %v2844 = vadd.f32 %v2808, %v2840
      %s2845 = scalar_lea.vmem %s3, 624
      %v2846 = vld [vmem:[%s2845] sm:$0xff]
      %v2847 = vld [vmem:[%s2845 + $0x8] sm:$0xff]
      %v2850 = vrot.slane %v2846, 6
      %v2851 = vrot.slane %v2847, 6
      %v2852 = vsel %vm1118, %v2850, %v2851
      %2853 = vrot.lane.b32.xlu0 %v2850, 9
      %v2854 = vpop.permute.xlu0 %2853
      %2855 = vrot.lane.b32.xlu0 %v2852, 9
      %v2856 = vpop.permute.xlu0 %2855
      %2857 = vrot.lane.b32.xlu0 %v2851, 9
      %v2858 = vpop.permute.xlu0 %2857
      %v2862 = vmul.f32 %v1671, %v2854
      %v2863 = vmul.f32 %v1667, %v2856
      %v2864 = vmul.f32 %v1672, %v2858
      %v2868 = vrot.slane %v2862, 2
      %v2869 = vrot.slane %v2863, 2
      %v2870 = vsel %vm1131, %v2868, %v2869
      %v2871 = vrot.slane %v2864, 2
      %v2872 = vsel %vm1131, %v2869, %v2871
      %2873 = vrot.lane.b32.xlu0 %v2870, 119
      %v2874 = vpop.permute.xlu0 %2873
      %2875 = vrot.lane.b32.xlu0 %v2872, 119
      %v2876 = vpop.permute.xlu0 %2875
      %v2879 = vadd.f32 %v2843, %v2874
      %v2880 = vadd.f32 %v2844, %v2876
      %s2881 = scalar_lea.vmem %s3, 640
      %v2882 = vld [vmem:[%s2881] sm:$0xff]
      %v2883 = vld [vmem:[%s2881 + $0x8] sm:$0xff]
      %v2886 = vrot.slane %v2882, 6
      %v2887 = vrot.slane %v2883, 6
      %v2888 = vsel %vm1118, %v2886, %v2887
      %2889 = vrot.lane.b32.xlu0 %v2886, 10
      %v2890 = vpop.permute.xlu0 %2889
      %2891 = vrot.lane.b32.xlu0 %v2888, 10
      %v2892 = vpop.permute.xlu0 %2891
      %2893 = vrot.lane.b32.xlu0 %v2887, 10
      %v2894 = vpop.permute.xlu0 %2893
      %v2898 = vmul.f32 %v1671, %v2890
      %v2899 = vmul.f32 %v1667, %v2892
      %v2900 = vmul.f32 %v1672, %v2894
      %v2904 = vrot.slane %v2898, 2
      %v2905 = vrot.slane %v2899, 2
      %v2906 = vsel %vm1131, %v2904, %v2905
      %v2907 = vrot.slane %v2900, 2
      %v2908 = vsel %vm1131, %v2905, %v2907
      %2909 = vrot.lane.b32.xlu0 %v2906, 118
      %v2910 = vpop.permute.xlu0 %2909
      %2911 = vrot.lane.b32.xlu0 %v2908, 118
      %v2912 = vpop.permute.xlu0 %2911
      %v2915 = vadd.f32 %v2879, %v2910
      %v2916 = vadd.f32 %v2880, %v2912
      %s2917 = scalar_lea.vmem %s3, 656
      %v2918 = vld [vmem:[%s2917] sm:$0xff]
      %v2919 = vld [vmem:[%s2917 + $0x8] sm:$0xff]
      %v2922 = vrot.slane %v2918, 6
      %v2923 = vrot.slane %v2919, 6
      %v2924 = vsel %vm1118, %v2922, %v2923
      %2925 = vrot.lane.b32.xlu0 %v2922, 11
      %v2926 = vpop.permute.xlu0 %2925
      %2927 = vrot.lane.b32.xlu0 %v2924, 11
      %v2928 = vpop.permute.xlu0 %2927
      %2929 = vrot.lane.b32.xlu0 %v2923, 11
      %v2930 = vpop.permute.xlu0 %2929
      %v2934 = vmul.f32 %v1671, %v2926
      %v2935 = vmul.f32 %v1667, %v2928
      %v2936 = vmul.f32 %v1672, %v2930
      %v2940 = vrot.slane %v2934, 2
      %v2941 = vrot.slane %v2935, 2
      %v2942 = vsel %vm1131, %v2940, %v2941
      %v2943 = vrot.slane %v2936, 2
      %v2944 = vsel %vm1131, %v2941, %v2943
      %2945 = vrot.lane.b32.xlu0 %v2942, 117
      %v2946 = vpop.permute.xlu0 %2945
      %2947 = vrot.lane.b32.xlu0 %v2944, 117
      %v2948 = vpop.permute.xlu0 %2947
      %v2951 = vadd.f32 %v2915, %v2946
      %v2952 = vadd.f32 %v2916, %v2948
      %s2953 = scalar_lea.vmem %s3, 672
      %v2954 = vld [vmem:[%s2953] sm:$0xff]
      %v2955 = vld [vmem:[%s2953 + $0x8] sm:$0xff]
      %v2958 = vrot.slane %v2954, 6
      %v2959 = vrot.slane %v2955, 6
      %v2960 = vsel %vm1118, %v2958, %v2959
      %2961 = vrot.lane.b32.xlu0 %v2958, 12
      %v2962 = vpop.permute.xlu0 %2961
      %2963 = vrot.lane.b32.xlu0 %v2960, 12
      %v2964 = vpop.permute.xlu0 %2963
      %2965 = vrot.lane.b32.xlu0 %v2959, 12
      %v2966 = vpop.permute.xlu0 %2965
      %v2970 = vmul.f32 %v1671, %v2962
      %v2971 = vmul.f32 %v1667, %v2964
      %v2972 = vmul.f32 %v1672, %v2966
      %v2976 = vrot.slane %v2970, 2
      %v2977 = vrot.slane %v2971, 2
      %v2978 = vsel %vm1131, %v2976, %v2977
      %v2979 = vrot.slane %v2972, 2
      %v2980 = vsel %vm1131, %v2977, %v2979
      %2981 = vrot.lane.b32.xlu0 %v2978, 116
      %v2982 = vpop.permute.xlu0 %2981
      %2983 = vrot.lane.b32.xlu0 %v2980, 116
      %v2984 = vpop.permute.xlu0 %2983
      %v2987 = vadd.f32 %v2951, %v2982
      %v2988 = vadd.f32 %v2952, %v2984
      %s2989 = scalar_lea.vmem %s3, 688
      %v2990 = vld [vmem:[%s2989] sm:$0xff]
      %v2991 = vld [vmem:[%s2989 + $0x8] sm:$0xff]
      %v2994 = vrot.slane %v2990, 6
      %v2995 = vrot.slane %v2991, 6
      %v2996 = vsel %vm1118, %v2994, %v2995
      %2997 = vrot.lane.b32.xlu0 %v2994, 13
      %v2998 = vpop.permute.xlu0 %2997
      %2999 = vrot.lane.b32.xlu0 %v2996, 13
      %v3000 = vpop.permute.xlu0 %2999
      %3001 = vrot.lane.b32.xlu0 %v2995, 13
      %v3002 = vpop.permute.xlu0 %3001
      %v3006 = vmul.f32 %v1671, %v2998
      %v3007 = vmul.f32 %v1667, %v3000
      %v3008 = vmul.f32 %v1672, %v3002
      %v3012 = vrot.slane %v3006, 2
      %v3013 = vrot.slane %v3007, 2
      %v3014 = vsel %vm1131, %v3012, %v3013
      %v3015 = vrot.slane %v3008, 2
      %v3016 = vsel %vm1131, %v3013, %v3015
      %3017 = vrot.lane.b32.xlu0 %v3014, 115
      %v3018 = vpop.permute.xlu0 %3017
      %3019 = vrot.lane.b32.xlu0 %v3016, 115
      %v3020 = vpop.permute.xlu0 %3019
      %v3023 = vadd.f32 %v2987, %v3018
      %v3024 = vadd.f32 %v2988, %v3020
      %s3025 = scalar_lea.vmem %s3, 704
      %v3026 = vld [vmem:[%s3025] sm:$0xff]
      %v3027 = vld [vmem:[%s3025 + $0x8] sm:$0xff]
      %v3030 = vrot.slane %v3026, 6
      %v3031 = vrot.slane %v3027, 6
      %v3032 = vsel %vm1118, %v3030, %v3031
      %3033 = vrot.lane.b32.xlu0 %v3030, 14
      %v3034 = vpop.permute.xlu0 %3033
      %3035 = vrot.lane.b32.xlu0 %v3032, 14
      %v3036 = vpop.permute.xlu0 %3035
      %3037 = vrot.lane.b32.xlu0 %v3031, 14
      %v3038 = vpop.permute.xlu0 %3037
      %v3042 = vmul.f32 %v1671, %v3034
      %v3043 = vmul.f32 %v1667, %v3036
      %v3044 = vmul.f32 %v1672, %v3038
      %v3048 = vrot.slane %v3042, 2
      %v3049 = vrot.slane %v3043, 2
      %v3050 = vsel %vm1131, %v3048, %v3049
      %v3051 = vrot.slane %v3044, 2
      %v3052 = vsel %vm1131, %v3049, %v3051
      %3053 = vrot.lane.b32.xlu0 %v3050, 114
      %v3054 = vpop.permute.xlu0 %3053
      %3055 = vrot.lane.b32.xlu0 %v3052, 114
      %v3056 = vpop.permute.xlu0 %3055
      %v3059 = vadd.f32 %v3023, %v3054
      %v3060 = vadd.f32 %v3024, %v3056
      %v3061 = vmax.f32 %v3059, 0.0
      %v3062 = vmax.f32 %v3060, 0.0
      %vm3063 = vcmask 523264
      %3064 = vst.msk [vmem:[%s224] sm:$0xff] %vm3063, %v3061
      %3065 = vst.msk [vmem:[%s224 + $0x8] sm:$0xff] %vm3063, %v3062
      %p3066 = scmp.lt.s32.totalorder %s16, 1
      %s3067 = scalar_select %p3066, %s16, 1
      %s3068 = smul.addr %s3067, 2
      %s3069 = smul.addr %s3068, 8
      %s3070 = scalar_lea.vmem %s5, %s3069
      // Predicated region
      $region41: #{residual_block.1} parent=39 // pred_check
        %p3071 = pneg %p144
      $region42: #{residual_block.1} parent=39 // pred_check_branch
        %3073 = sbr.rel (%p3071) target = $region44
      $region43: #{residual_block.1} parent=39 // pred_region
        _
      $region44: #{residual_block.1} parent=39 // pred_fallthru
        _
    $region40: #{residual_block.1} parent=5 // pred_fallthru
      _
    %p3074 = scmp.le.s32.totalorder 2, %s11
    // Predicated region
    $region45: #{residual_block.1} parent=5 // pred_check
      %p3075 = pneg %p3074
    $region46: #{residual_block.1} parent=5 // pred_check_branch
      %3077 = sbr.rel (%p3075) target = $region48
    $region47: #{residual_block.1} parent=5 // pred_region
      %s3078 = ssub.s32 %s11, 2
      // Predicated region
      $region49: #{residual_block.1} parent=47 // pred_check
        %p3079 = pneg %p150
      $region50: #{residual_block.1} parent=47 // pred_check_branch
        %3081 = sbr.rel (%p3079) target = $region52
      $region51: #{residual_block.1} parent=47 // pred_region
        %p3082 = scmp.lt.s32.totalorder %s17, 1
        %s3083 = scalar_select %p3082, %s17, 1
        %s3084 = smul.addr %s3083, 2
        %s3085 = smul.addr %s3084, 8
        %s3086 = scalar_lea.vmem %s5, %s3085
      $region52: #{residual_block.1} parent=47 // pred_fallthru
        _
    $region48: #{residual_block.1} parent=5 // pred_fallthru
      _
  $region6: #{residual_block.1} parent=0 // loop_footer
    %s15 = sadd.s32 1, %s11
  $region7: #{residual_block.1} parent=0 // loop_footer_branch
    %10 = sbr.rel target = $region3
  $region8: #{residual_block.1} parent=0 // loop_exit
    _

</llo_original>
